<compile_context>
chip_gen: v5e
topology: v5e:2x2
jax: 0.10.0
libtpu: 0.0.40
codegen_flags: <defaults>
</compile_context>

<pallas_src>
import jax
import jax.numpy as jnp
from jax import lax
from jax.scipy.special import erf as _erf_exact
from jax.experimental import pallas as pl
from jax.experimental.pallas import tpu as pltpu

_INV_SQRT2 = 0.7071067811865476
# Abramowitz & Stegun 7.1.25 (3-term) erf constants, |abs err| < 2.5e-5.
_ERF_P = 0.47047
_ERF_A1 = 0.3480242
_ERF_A2 = -0.0958798
_ERF_A3 = 0.7478556

GSTEPS = 4  # grid depth over the 32 groups -> 8 groups per step


def _gelu_erf(y):
    """GELU(y) = 0.5*y*(1 + erf(y/sqrt(2))) in f32.

    erf is odd, so 0.5*y*erf(y/sqrt2) == 0.5*|y|*erf(|y|/sqrt2): folding the sign
    into |y| removes the compare/negate/select of a generic erf.  The positive
    branch uses the 3-term A&S 7.1.25 polynomial (error far below the bf16 input
    rounding).  exp + reciprocal go to the EUP, keeping VALU pressure low.
    """
    ay = jnp.abs(y)
    z = ay * _INV_SQRT2
    t = pl.reciprocal(1.0 + _ERF_P * z, approx=True)          # EUP vrcp
    poly = ((_ERF_A3 * t + _ERF_A2) * t + _ERF_A1) * t
    erf_abs = 1.0 - poly * jnp.exp(-(z * z))                   # EUP exp
    return 0.5 * y + (0.5 * ay) * erf_abs


def _conv_t_gelu_kernel(w_ref, p_ref, o_ref):
    # w_ref: (GB, Co, 16)  bf16  flipped weight^T for this block of groups
    # p_ref: (GB, 16, S)   bf16  im2col tap matrices (taps x flattened spatial)
    # o_ref: (GB*Co, S)    f32   lane-dense output rows
    y = jnp.einsum('gct,gts->gcs', w_ref[...], p_ref[...],
                   preferred_element_type=jnp.float32)         # batched MXU matmul
    gb, co, s = y.shape
    # Leading-dim collapse only (layout-free, Co is a multiple of 8): presents one
    # long lane-dense row stream to the store unit.
    o_ref[...] = _gelu_erf(y.reshape(gb * co, s)).astype(o_ref.dtype)


def _forward_impl(x1, weight):
    """x1: (1, C, 32, W) f32 NCHW.  weight: (32, Cog, KH, KW) f32 (conv_transpose layout)."""
    N, C, H, W = x1.shape
    G, Cog, KH, KW = weight.shape
    assert N == 1 and H == G, "module hard-codes groups == in_channels == x1.shape[2]"
    assert G % GSTEPS == 0

    # v1 = transpose(x1, 1, 2) -> (1, G, Hin, Win)
    v1 = jnp.transpose(x1, (0, 2, 1, 3))
    Hin, Win = v1.shape[2], v1.shape[3]
    Hout, Wout = Hin + KH - 1, Win + KW - 1                    # stride=1, padding=0
    S = Hout * Wout

    # --- glue (one XLA fusion, fused into the pallas call via allow_input_fusion) ---
    # conv_transpose(stride=1, pad=0, groups=G) == full correlation with flipped kernel.
    xin = v1[0]                                                # (G, Hin, Win)
    xp = jnp.pad(xin, ((0, 0), (KH - 1, KH - 1), (KW - 1, KW - 1)))
    taps = [xp[:, ky:ky + Hout, kx:kx + Wout]                  # ky-major tap order
            for ky in range(KH) for kx in range(KW)]
    P = jnp.stack(taps, axis=1).reshape(G, KH * KW, S).astype(jnp.bfloat16)
    WfT = weight[:, :, ::-1, ::-1].reshape(G, Cog, KH * KW).astype(jnp.bfloat16)

    GB = G // GSTEPS

    cost = pl.CostEstimate(
        flops=2 * G * Cog * S * KH * KW,
        transcendentals=2 * G * Cog * S,                       # exp + reciprocal per element
        bytes_accessed=WfT.size * 2 + P.size * 2 + G * Cog * S * 4)

    out = pl.pallas_call(
        _conv_t_gelu_kernel,
        out_shape=jax.ShapeDtypeStruct((G * Cog, S), jnp.float32),
        grid_spec=pltpu.PrefetchScalarGridSpec(
            num_scalar_prefetch=0,
            grid=(GSTEPS,),
            in_specs=[
                pl.BlockSpec((GB, Cog, KH * KW), lambda i: (i, 0, 0)),
                pl.BlockSpec((GB, KH * KW, S), lambda i: (i, 0, 0)),
            ],
            out_specs=pl.BlockSpec((GB * Cog, S), lambda i: (i, 0)),
        ),
        compiler_params=pltpu.CompilerParams(
            dimension_semantics=("parallel",),
            allow_input_fusion=[True, True],
        ),
        cost_estimate=cost,
    )(WfT, P)                                                  # (G*Cog, S) f32

    # Back to PyTorch NCHW: (G*Cog, Hout*Wout) -> (1, G*Cog, Hout, Wout),
    # a pure row-major split of the flattened spatial axis.
    return out.reshape(1, G * Cog, Hout, Wout)


model_forward = jax.jit(_forward_impl)


def _reference_forward(x1, weight):
    """Independent f32 reference: XLA grouped conv (flipped kernel, full padding) + exact erf-GELU."""
    v1 = jnp.transpose(x1, (0, 2, 1, 3))
    G, Cog, KH, KW = weight.shape
    w_conv = weight[:, :, ::-1, ::-1].reshape(G * Cog, 1, KH, KW)
    v2 = lax.conv_general_dilated(
        v1, w_conv, window_strides=(1, 1),
        padding=[(KH - 1, KH - 1), (KW - 1, KW - 1)],
        dimension_numbers=('NCHW', 'OIHW', 'NCHW'),
        feature_group_count=G,
        precision=lax.Precision.HIGHEST)
    return 0.5 * v2 * (1.0 + _erf_exact(v2 * _INV_SQRT2))


if __name__ == "__main__":
    key = jax.random.PRNGKey(0)
    kx, kw = jax.random.split(key)
    x1 = jax.random.normal(kx, (1, 16, 32, 32), dtype=jnp.float32)

    # 1) The module as written: the conv_transpose weight is literally zeros,
    #    so GELU(0) == 0 exactly.
    w_zero = jnp.zeros((32, 32, 4, 4), dtype=jnp.float32)
    y0 = model_forward(x1, w_zero)
    jax.block_until_ready(y0)
    assert y0.shape == (1, 1024, 19, 35), y0.shape
    assert float(jnp.max(jnp.abs(y0))) == 0.0

    # 2) Non-zero-weight correctness check (per review): compare against XLA grouped
    #    conv + exact erf GELU.  Tolerance covers the bf16 tap/weight cast (~1e-3 rel)
    #    plus the erf polynomial / approx-reciprocal (<~1e-3 abs).
    w_rand = 0.25 * jax.random.normal(kw, (32, 32, 4, 4), dtype=jnp.float32)
    y1 = model_forward(x1, w_rand)
    ref = _reference_forward(x1, w_rand)
    jax.block_until_ready((y1, ref))
    max_err = float(jnp.max(jnp.abs(y1 - ref)))
    mean_err = float(jnp.mean(jnp.abs(y1 - ref)))
    assert max_err < 5e-2, ("max abs err", max_err)
    assert mean_err < 5e-3, ("mean abs err", mean_err)

    print("KERNEL_OK")
</pallas_src>

<mosaic_0001>
module attributes {stable_mosaic.version = 11 : i64} {
  func.func @_conv_t_gelu_kernel(%arg0: i32, %arg1: memref<8x32x16xbf16, #tpu.memory_space<vmem>>, %arg2: memref<8x16x665xbf16, #tpu.memory_space<vmem>>, %arg3: memref<256x665xf32, #tpu.memory_space<vmem>>) attributes {dimension_semantics = [#tpu.dimension_semantics<parallel>], iteration_bounds = array<i64: 4>, scalar_prefetch = 0 : i64, scratch_operands = 0 : i64, tpu.core_type = #tpu.core_type<tc>, window_params = [{transform_indices = @transform_0, window_bounds = array<i64: 8, 32, 16>}, {transform_indices = @transform_1, window_bounds = array<i64: 8, 16, 665>}, {transform_indices = @transform_2, window_bounds = array<i64: 256, 665>}]} {
    %c0 = arith.constant 0 : index
    %c0_0 = arith.constant 0 : index
    %c0_1 = arith.constant 0 : index
    %0 = vector.load %arg1[%c0, %c0_0, %c0_1] : memref<8x32x16xbf16, #tpu.memory_space<vmem>>, vector<8x32x16xbf16>
    %c0_2 = arith.constant 0 : index
    %c0_3 = arith.constant 0 : index
    %c0_4 = arith.constant 0 : index
    %1 = vector.load %arg2[%c0_2, %c0_3, %c0_4] : memref<8x16x665xbf16, #tpu.memory_space<vmem>>, vector<8x16x665xbf16>
    "tpu.trace_start"() <{level = 10 : i32, message = "gct,gts->gcs"}> : () -> ()
    %cst = arith.constant dense<0.000000e+00> : vector<8x32x665xf32>
    %2 = tpu.matmul %0, %1, %cst {dimension_numbers = #tpu.dot_dimension_numbers<[2], [1], [1], [2], [0, 0, 0, 1, 1, 2], [0], [0]>} : vector<8x32x16xbf16>, vector<8x16x665xbf16>, vector<8x32x665xf32> -> vector<8x32x665xf32>
    "tpu.trace_stop"() : () -> ()
    %3 = vector.shape_cast %2 : vector<8x32x665xf32> to vector<256x665xf32>
    %4 = math.absf %3 : vector<256x665xf32>
    %cst_5 = arith.constant 0.707106769 : f32
    %5 = vector.broadcast %cst_5 : f32 to vector<256x665xf32>
    %6 = arith.mulf %4, %5 : vector<256x665xf32>
    %cst_6 = arith.constant 4.704700e-01 : f32
    %7 = vector.broadcast %cst_6 : f32 to vector<256x665xf32>
    %8 = arith.mulf %7, %6 : vector<256x665xf32>
    %cst_7 = arith.constant 1.000000e+00 : f32
    %9 = vector.broadcast %cst_7 : f32 to vector<256x665xf32>
    %10 = arith.addf %9, %8 : vector<256x665xf32>
    %11 = tpu.reciprocal %10 {approx = true} : vector<256x665xf32> -> vector<256x665xf32>
    %cst_8 = arith.constant 0.747855603 : f32
    %12 = vector.broadcast %cst_8 : f32 to vector<256x665xf32>
    %13 = arith.mulf %12, %11 : vector<256x665xf32>
    %cst_9 = arith.constant -9.587980e-02 : f32
    %14 = vector.broadcast %cst_9 : f32 to vector<256x665xf32>
    %15 = arith.addf %13, %14 : vector<256x665xf32>
    %16 = arith.mulf %15, %11 : vector<256x665xf32>
    %cst_10 = arith.constant 0.348024189 : f32
    %17 = vector.broadcast %cst_10 : f32 to vector<256x665xf32>
    %18 = arith.addf %16, %17 : vector<256x665xf32>
    %19 = arith.mulf %18, %11 : vector<256x665xf32>
    %20 = arith.mulf %6, %6 : vector<256x665xf32>
    %cst_11 = arith.constant 0.000000e+00 : f32
    %21 = vector.broadcast %cst_11 : f32 to vector<256x665xf32>
    %22 = arith.subf %21, %20 : vector<256x665xf32>
    %23 = math.exp %22 : vector<256x665xf32>
    %24 = arith.mulf %19, %23 : vector<256x665xf32>
    %cst_12 = arith.constant 1.000000e+00 : f32
    %25 = vector.broadcast %cst_12 : f32 to vector<256x665xf32>
    %26 = arith.subf %25, %24 : vector<256x665xf32>
    %cst_13 = arith.constant 5.000000e-01 : f32
    %27 = vector.broadcast %cst_13 : f32 to vector<256x665xf32>
    %28 = arith.mulf %27, %3 : vector<256x665xf32>
    %cst_14 = arith.constant 5.000000e-01 : f32
    %29 = vector.broadcast %cst_14 : f32 to vector<256x665xf32>
    %30 = arith.mulf %29, %4 : vector<256x665xf32>
    %31 = arith.mulf %30, %26 : vector<256x665xf32>
    %32 = arith.addf %28, %31 : vector<256x665xf32>
    %c0_15 = arith.constant 0 : index
    %c0_16 = arith.constant 0 : index
    %33 = vector.load %arg3[%c0_15, %c0_16] : memref<256x665xf32, #tpu.memory_space<vmem>>, vector<256x665xf32>
    tpu.vector_store %arg3[%c0_15, %c0_16], %32 {strides = array<i32>} : memref<256x665xf32, #tpu.memory_space<vmem>>, vector<256x665xf32>,
    return
  }
  func.func @transform_0(%arg0: i32) -> (i32, i32, i32) {
    %c0_i32 = arith.constant 0 : i32
    %c0_i32_0 = arith.constant 0 : i32
    %c0_i32_1 = arith.constant 0 : i32
    return %arg0, %c0_i32, %c0_i32_0 : i32, i32, i32
  }
  func.func @transform_1(%arg0: i32) -> (i32, i32, i32) {
    %c0_i32 = arith.constant 0 : i32
    %c0_i32_0 = arith.constant 0 : i32
    %c0_i32_1 = arith.constant 0 : i32
    return %arg0, %c0_i32, %c0_i32_0 : i32, i32, i32
  }
  func.func @transform_2(%arg0: i32) -> (i32, i32) {
    %c0_i32 = arith.constant 0 : i32
    %c0_i32_0 = arith.constant 0 : i32
    return %arg0, %c0_i32 : i32, i32
  }
}

</mosaic_0001>

<llo_original>
// kernel: _forward_impl.1
$region0: #{_forward_impl.1}
  #allocation0 [shape = 'u32[]', space=smem, size = 0x4, offset = 0x4, fixed_abs, tag = 'smem constant byte address 0x4 - core index']
  #allocation1 [shape = 'u32[72,128]{1,0:T(1,128)}', space=vmem, size = 0x9000, scoped, tag = 'internal scratch']
  %s0 = inlined_call_operand.vmem [shape: bf16[32,32,16], index: 0, kind: input, shape index: {}]
  %s1 = inlined_call_operand.vmem [shape: bf16[32,16,665], index: 1, kind: input, shape index: {}]
  %s2 = inlined_call_operand.vmem [shape: f32[1024,665], index: 2, kind: output, shape index: {}]
  %s3 = sld [smem:[#allocation0]]
  $region41: #{_forward_impl.1} parent=0
    _
  %s5 = ssub.s32 1, %s3
  %s6 = scalar_select 0, %s5, %s3
  loop: start=0, step=1, limit=6
  $region2: #{_forward_impl.1} parent=0 // loop_pre_header
    _
  $region3: #{_forward_impl.1} parent=0 // loop_header
    %s8 = sphi 0, %s12
    %p9 = scmp.ge.s32.totalorder %s8, 6
    %s18 = sphi 0, %s20
    %s21 = sphi 0, %s18
    %s22 = sphi 0, %s21
    %s38 = sphi 0, %s22
    %s44 = sphi 0, %s46
    %s47 = sphi 0, %s44
    %s48 = sphi 0, %s47
    %s64 = sphi 0, %s48
    %s70 = sphi 0, %s72
    %s73 = sphi 0, %s70
    %s74 = sphi 0, %s73
    %s90 = sphi 0, %s74
  $region4: #{_forward_impl.1} parent=0 // loop_header_branch
    %11 = sbr.rel (%p9) target = $region8
  $region5: #{_forward_impl.1} parent=0 // loop_body
    %s13 = ssub.s32 %s8, 1
    %s14 = ssub.s32 %s8, 2
    %s15 = sadd.s32 %s8, 1
    %s16 = ssub.s32 %s8, %s15
    %p17 = scmp.eq.s32.totalorder %s16, 0
    %s19 = sadd.s32 %s18, 1
    %s20 = scalar_select %p17, %s18, %s19
    %p23 = pneg %p17
    %p24 = scmp.eq.s32.totalorder %s8, 3
    %p25 = por %p23, %p24
    %p26 = scmp.ne.s32.totalorder %s18, %s21
    %p27 = scmp.eq.s32.totalorder %s8, 0
    %p28 = por %p26, %p27
    %p29 = scmp.ne.s32.totalorder %s18, %s21
    %p30 = scmp.eq.s32.totalorder %s13, 3
    %p31 = por %p29, %p30
    %p32 = scmp.ne.s32.totalorder %s21, %s22
    %p33 = scmp.eq.s32.totalorder %s13, 0
    %p34 = por %p32, %p33
    %p35 = scmp.ne.s32.totalorder %s21, %s22
    %p36 = scmp.eq.s32.totalorder %s14, 3
    %p37 = por %p35, %p36
    %p39 = scmp.ne.s32.totalorder %s22, %s38
    %p40 = scmp.eq.s32.totalorder %s14, 0
    %p41 = por %p39, %p40
    %s42 = ssub.s32 %s8, %s15
    %p43 = scmp.eq.s32.totalorder %s42, 0
    %s45 = sadd.s32 %s44, 1
    %s46 = scalar_select %p43, %s44, %s45
    %p49 = pneg %p43
    %p50 = scmp.eq.s32.totalorder %s8, 3
    %p51 = por %p49, %p50
    %p52 = scmp.ne.s32.totalorder %s44, %s47
    %p53 = scmp.eq.s32.totalorder %s8, 0
    %p54 = por %p52, %p53
    %p55 = scmp.ne.s32.totalorder %s44, %s47
    %p56 = scmp.eq.s32.totalorder %s13, 3
    %p57 = por %p55, %p56
    %p58 = scmp.ne.s32.totalorder %s47, %s48
    %p59 = scmp.eq.s32.totalorder %s13, 0
    %p60 = por %p58, %p59
    %p61 = scmp.ne.s32.totalorder %s47, %s48
    %p62 = scmp.eq.s32.totalorder %s14, 3
    %p63 = por %p61, %p62
    %p65 = scmp.ne.s32.totalorder %s48, %s64
    %p66 = scmp.eq.s32.totalorder %s14, 0
    %p67 = por %p65, %p66
    %s68 = ssub.s32 %s8, %s15
    %p69 = scmp.eq.s32.totalorder %s68, 0
    %s71 = sadd.s32 %s70, 1
    %s72 = scalar_select %p69, %s70, %s71
    %p75 = pneg %p69
    %p76 = scmp.eq.s32.totalorder %s8, 3
    %p77 = por %p75, %p76
    %p78 = scmp.ne.s32.totalorder %s70, %s73
    %p79 = scmp.eq.s32.totalorder %s8, 0
    %p80 = por %p78, %p79
    %p81 = scmp.ne.s32.totalorder %s70, %s73
    %p82 = scmp.eq.s32.totalorder %s13, 3
    %p83 = por %p81, %p82
    %p84 = scmp.ne.s32.totalorder %s73, %s74
    %p85 = scmp.eq.s32.totalorder %s13, 0
    %p86 = por %p84, %p85
    %p87 = scmp.ne.s32.totalorder %s73, %s74
    %p88 = scmp.eq.s32.totalorder %s14, 3
    %p89 = por %p87, %p88
    %p91 = scmp.ne.s32.totalorder %s74, %s90
    %p92 = scmp.eq.s32.totalorder %s14, 0
    %p93 = por %p91, %p92
    %p94 = scmp.le.s32.totalorder 1, %s8
    %p95 = scmp.lt.s32.totalorder %s8, 5
    %p96 = pnand %p94, %p95
    %p97 = pneg %p96
    // Predicated region
    $region9: #{_forward_impl.1} parent=5 // pred_check
      _
    $region10: #{_forward_impl.1} parent=5 // pred_check_branch
      %99 = sbr.rel (%p96) target = $region12
    $region11: #{_forward_impl.1} parent=5 // pred_region
      %s100 = ssub.s32 %s8, 1
    $region12: #{_forward_impl.1} parent=5 // pred_fallthru
      _
    %p101 = scmp.lt.s32.totalorder %s8, 4
    // Predicated region
    $region13: #{_forward_impl.1} parent=5 // pred_check
      %p102 = pneg %p101
    $region14: #{_forward_impl.1} parent=5 // pred_check_branch
      %104 = sbr.rel (%p102) target = $region16
    $region15: #{_forward_impl.1} parent=5 // pred_region
      // Predicated region
      $region17: #{_forward_impl.1} parent=15 // pred_check
        %p105 = pneg %p28
      $region18: #{_forward_impl.1} parent=15 // pred_check_branch
        %107 = sbr.rel (%p105) target = $region20
      $region19: #{_forward_impl.1} parent=15 // pred_region
        %s108 = smul.u32 8, %s8
        %p109 = scmp.lt.s32.totalorder %s108, 31
        %s110 = scalar_select %p109, %s108, 31
        %s111 = smul.addr %s110, 4
        %s112 = smul.addr %s111, 4
        %s113 = scalar_lea.vmem %s0, %s112
        %s114 = smul.u32 8, %s8
      $region20: #{_forward_impl.1} parent=15 // pred_fallthru
        _
      // Predicated region
      $region21: #{_forward_impl.1} parent=15 // pred_check
        %p115 = pneg %p54
      $region22: #{_forward_impl.1} parent=15 // pred_check_branch
        %117 = sbr.rel (%p115) target = $region24
      $region23: #{_forward_impl.1} parent=15 // pred_region
        %s118 = smul.u32 8, %s8
        %p119 = scmp.lt.s32.totalorder %s118, 31
        %s120 = scalar_select %p119, %s118, 31
        %s121 = smul.addr %s120, 12
        %s122 = smul.addr %s121, 4
        %s123 = scalar_lea.vmem %s1, %s122
        %s124 = smul.u32 8, %s8
      $region24: #{_forward_impl.1} parent=15 // pred_fallthru
        _
    $region16: #{_forward_impl.1} parent=5 // pred_fallthru
      _
    %p125 = scmp.le.s32.totalorder 1, %s8
    %p126 = scmp.lt.s32.totalorder %s8, 5
    %p127 = pnand %p125, %p126
    %p128 = pneg %p127
    // Predicated region
    $region25: #{_forward_impl.1} parent=5 // pred_check
      _
    $region26: #{_forward_impl.1} parent=5 // pred_check_branch
      %130 = sbr.rel (%p127) target = $region28
    $region27: #{_forward_impl.1} parent=5 // pred_region
      %s131 = ssub.s32 %s8, 1
      %s132 = smul.u32 8, %s13
      %p133 = scmp.lt.s32.totalorder %s132, 31
      %s134 = scalar_select %p133, %s132, 31
      %s135 = smul.addr %s134, 4
      %s136 = smul.addr %s135, 4
      %s137 = scalar_lea.vmem %s0, %s136
      %p138 = pneg %p34
      %p139 = pneg %p31
      %s140 = smul.u32 8, %s13
      %p141 = scmp.lt.s32.totalorder %s140, 31
      %s142 = scalar_select %p141, %s140, 31
      %s143 = smul.addr %s142, 12
      %s144 = smul.addr %s143, 4
      %s145 = scalar_lea.vmem %s1, %s144
      %p146 = pneg %p60
      %p147 = pneg %p57
      %p148 = pneg %p86
      %p149 = pneg %p83
      %s150 = smul.u32 32, %s13
      %p151 = scmp.lt.s32.totalorder %s150, 127
      %s152 = scalar_select %p151, %s150, 127
      %s153 = smul.addr %s152, 6
      %s154 = smul.addr %s153, 8
      %s155 = scalar_lea.vmem %s2, %s154
      %s156 = smul.u32 8, %s13
      %p157 = scmp.lt.s32.totalorder %s156, 31
      %s158 = scalar_select %p157, %s156, 31
      %s159 = smul.addr %s158, 4
      %s160 = smul.addr %s159, 4
      %s161 = scalar_lea.vmem %s0, %s160
      %s162 = smul.u32 8, %s13
      %s163 = smul.u32 8, %s13
      %p164 = scmp.lt.s32.totalorder %s163, 31
      %s165 = scalar_select %p164, %s163, 31
      %s166 = smul.addr %s165, 12
      %s167 = smul.addr %s166, 4
      %s168 = scalar_lea.vmem %s1, %s167
      %s169 = smul.u32 8, %s13
      %s170 = smul.u32 32, %s13
      %p171 = scmp.lt.s32.totalorder %s170, 127
      %s172 = scalar_select %p171, %s170, 127
      %s173 = smul.addr %s172, 6
      %s174 = smul.addr %s173, 8
      %s175 = scalar_lea.vmem %s2, %s174
      %s176 = smul.u32 32, %s13
      %v178 = vld [vmem:[%s161] sm:$0xf]
      %v179 = vld [vmem:[%s161 + $0x4] sm:$0xf]
      %v180 = vld [vmem:[%s161 + $0x8] sm:$0xf]
      %v181 = vld [vmem:[%s161 + $0xc] sm:$0xf]
      %v182 = vld [vmem:[%s161 + $0x10] sm:$0xf]
      %v183 = vld [vmem:[%s161 + $0x14] sm:$0xf]
      %v184 = vld [vmem:[%s161 + $0x18] sm:$0xf]
      %v185 = vld [vmem:[%s161 + $0x1c] sm:$0xf]
      %v186 = vld [vmem:[%s161 + $0x20] sm:$0xf]
      %v187 = vld [vmem:[%s161 + $0x24] sm:$0xf]
      %v188 = vld [vmem:[%s161 + $0x28] sm:$0xf]
      %v189 = vld [vmem:[%s161 + $0x2c] sm:$0xf]
      %v190 = vld [vmem:[%s161 + $0x30] sm:$0xf]
      %v191 = vld [vmem:[%s161 + $0x34] sm:$0xf]
      %v192 = vld [vmem:[%s161 + $0x38] sm:$0xf]
      %v193 = vld [vmem:[%s161 + $0x3c] sm:$0xf]
      %v194 = vld [vmem:[%s161 + $0x40] sm:$0xf]
      %v195 = vld [vmem:[%s161 + $0x44] sm:$0xf]
      %v196 = vld [vmem:[%s161 + $0x48] sm:$0xf]
      %v197 = vld [vmem:[%s161 + $0x4c] sm:$0xf]
      %v198 = vld [vmem:[%s161 + $0x50] sm:$0xf]
      %v199 = vld [vmem:[%s161 + $0x54] sm:$0xf]
      %v200 = vld [vmem:[%s161 + $0x58] sm:$0xf]
      %v201 = vld [vmem:[%s161 + $0x5c] sm:$0xf]
      %v202 = vld [vmem:[%s161 + $0x60] sm:$0xf]
      %v203 = vld [vmem:[%s161 + $0x64] sm:$0xf]
      %v204 = vld [vmem:[%s161 + $0x68] sm:$0xf]
      %v205 = vld [vmem:[%s161 + $0x6c] sm:$0xf]
      %v206 = vld [vmem:[%s161 + $0x70] sm:$0xf]
      %v207 = vld [vmem:[%s161 + $0x74] sm:$0xf]
      %v208 = vld [vmem:[%s161 + $0x78] sm:$0xf]
      %v209 = vld [vmem:[%s161 + $0x7c] sm:$0xf]
      %v210 = vld [vmem:[%s168] sm:$0xff]
      %v211 = vld [vmem:[%s168 + $0x8] sm:$0xff]
      %v212 = vld [vmem:[%s168 + $0x10] sm:$0xff]
      %v213 = vld [vmem:[%s168 + $0x18] sm:$0xff]
      %v214 = vld [vmem:[%s168 + $0x20] sm:$0xff]
      %v215 = vld [vmem:[%s168 + $0x28] sm:$0xff]
      %v216 = vld [vmem:[%s168 + $0x30] sm:$0xff]
      %v217 = vld [vmem:[%s168 + $0x38] sm:$0xff]
      %v218 = vld [vmem:[%s168 + $0x40] sm:$0xff]
      %v219 = vld [vmem:[%s168 + $0x48] sm:$0xff]
      %v220 = vld [vmem:[%s168 + $0x50] sm:$0xff]
      %v221 = vld [vmem:[%s168 + $0x58] sm:$0xff]
      %v222 = vld [vmem:[%s168 + $0x60] sm:$0xff]
      %v223 = vld [vmem:[%s168 + $0x68] sm:$0xff]
      %v224 = vld [vmem:[%s168 + $0x70] sm:$0xff]
      %v225 = vld [vmem:[%s168 + $0x78] sm:$0xff]
      %v226 = vld [vmem:[%s168 + $0x80] sm:$0xff]
      %v227 = vld [vmem:[%s168 + $0x88] sm:$0xff]
      %v228 = vld [vmem:[%s168 + $0x90] sm:$0xff]
      %v229 = vld [vmem:[%s168 + $0x98] sm:$0xff]
      %v230 = vld [vmem:[%s168 + $0xa0] sm:$0xff]
      %v231 = vld [vmem:[%s168 + $0xa8] sm:$0xff]
      %v232 = vld [vmem:[%s168 + $0xb0] sm:$0xff]
      %v233 = vld [vmem:[%s168 + $0xb8] sm:$0xff]
      %v234 = vld [vmem:[%s168 + $0xc0] sm:$0xff]
      %v235 = vld [vmem:[%s168 + $0xc8] sm:$0xff]
      %v236 = vld [vmem:[%s168 + $0xd0] sm:$0xff]
      %v237 = vld [vmem:[%s168 + $0xd8] sm:$0xff]
      %v238 = vld [vmem:[%s168 + $0xe0] sm:$0xff]
      %v239 = vld [vmem:[%s168 + $0xe8] sm:$0xff]
      %v240 = vld [vmem:[%s168 + $0xf0] sm:$0xff]
      %v241 = vld [vmem:[%s168 + $0xf8] sm:$0xff]
      %v242 = vld [vmem:[%s168 + $0x100] sm:$0xff]
      %v243 = vld [vmem:[%s168 + $0x108] sm:$0xff]
      %v244 = vld [vmem:[%s168 + $0x110] sm:$0xff]
      %v245 = vld [vmem:[%s168 + $0x118] sm:$0xff]
      %v246 = vld [vmem:[%s168 + $0x120] sm:$0xff]
      %v247 = vld [vmem:[%s168 + $0x128] sm:$0xff]
      %v248 = vld [vmem:[%s168 + $0x130] sm:$0xff]
      %v249 = vld [vmem:[%s168 + $0x138] sm:$0xff]
      %v250 = vld [vmem:[%s168 + $0x140] sm:$0xff]
      %v251 = vld [vmem:[%s168 + $0x148] sm:$0xff]
      %v252 = vld [vmem:[%s168 + $0x150] sm:$0xff]
      %v253 = vld [vmem:[%s168 + $0x158] sm:$0xff]
      %v254 = vld [vmem:[%s168 + $0x160] sm:$0xff]
      %v255 = vld [vmem:[%s168 + $0x168] sm:$0xff]
      %v256 = vld [vmem:[%s168 + $0x170] sm:$0xff]
      %v257 = vld [vmem:[%s168 + $0x178] sm:$0xff]
      %v262 = vunpack.c.l.b16 %v178
      %v263 = vunpack.c.l.b16 %v179
      %v264 = vunpack.c.l.b16 %v180
      %v265 = vunpack.c.l.b16 %v181
      %v266 = vpack.c.b16 %v263, %v262
      %v267 = vpack.c.b16 %v265, %v264
      %v274 = vunpack.c.l.b16 %v210
      %v275 = vunpack.c.h.b16 %v210
      %v276 = vunpack.c.l.b16 %v211
      %v277 = vunpack.c.h.b16 %v211
      %v278 = vunpack.c.l.b16 %v212
      %v279 = vunpack.c.h.b16 %v212
      %v280 = vunpack.c.l.b16 %v213
      %v281 = vunpack.c.h.b16 %v213
      %v282 = vunpack.c.l.b16 %v214
      %v283 = vunpack.c.h.b16 %v214
      %v284 = vunpack.c.l.b16 %v215
      %v285 = vunpack.c.h.b16 %v215
      %v286 = vpack.c.b16 %v280, %v274
      %v287 = vpack.c.b16 %v281, %v275
      %v288 = vpack.c.b16 %v282, %v276
      %v289 = vpack.c.b16 %v283, %v277
      %v290 = vpack.c.b16 %v284, %v278
      %v291 = vpack.c.b16 %v285, %v279
      %vm298 = vcmask 130048
      %v300 = vsel %vm298, %v266, 0
      %v303 = vsel %vm298, %v267, 0
      %305 = vmatpush.bf16.msra.mxu0 0
      %306 = vmatpush.bf16.msra.mxu0 0
      %307 = vmatpush.bf16.msra.mxu0 0
      %308 = vmatpush.bf16.msra.mxu0 0
      %309 = vmatpush.bf16.msra.mxu0 0
      %310 = vmatpush.bf16.msra.mxu0 0
      %311 = vmatpush.bf16.msra.mxu0 0
      %312 = vmatpush.bf16.msra.mxu0 %v286
      %313 = vmatmul.bf16.gmra.mxu0 %v300
      %v314 = vpop.f32.mrf.mxu0
      %v315 = vadd.f32 0.0, %v314
      %v316 = vpop.f32.mrf.mxu0
      %v317 = vadd.f32 0.0, %v316
      %318 = vmatmul.bf16.gmra.mxu0 %v303
      %v319 = vpop.f32.mrf.mxu0
      %v320 = vadd.f32 0.0, %v319
      %v321 = vpop.f32.mrf.mxu0
      %v322 = vadd.f32 0.0, %v321
      %323 = vdwg.mxu0
      %324 = vmatpush.bf16.msra.mxu0 0
      %325 = vmatpush.bf16.msra.mxu0 0
      %326 = vmatpush.bf16.msra.mxu0 0
      %327 = vmatpush.bf16.msra.mxu0 0
      %328 = vmatpush.bf16.msra.mxu0 0
      %329 = vmatpush.bf16.msra.mxu0 0
      %330 = vmatpush.bf16.msra.mxu0 0
      %331 = vmatpush.bf16.msra.mxu0 %v287
      %332 = vmatmul.bf16.gmra.mxu0 %v300
      %v333 = vpop.f32.mrf.mxu0
      %v334 = vadd.f32 0.0, %v333
      %v335 = vpop.f32.mrf.mxu0
      %v336 = vadd.f32 0.0, %v335
      %337 = vmatmul.bf16.gmra.mxu0 %v303
      %v338 = vpop.f32.mrf.mxu0
      %v339 = vadd.f32 0.0, %v338
      %v340 = vpop.f32.mrf.mxu0
      %v341 = vadd.f32 0.0, %v340
      %342 = vdwg.mxu0
      %343 = vmatpush.bf16.msra.mxu0 0
      %344 = vmatpush.bf16.msra.mxu0 0
      %345 = vmatpush.bf16.msra.mxu0 0
      %346 = vmatpush.bf16.msra.mxu0 0
      %347 = vmatpush.bf16.msra.mxu0 0
      %348 = vmatpush.bf16.msra.mxu0 0
      %349 = vmatpush.bf16.msra.mxu0 0
      %350 = vmatpush.bf16.msra.mxu0 %v288
      %351 = vmatmul.bf16.gmra.mxu0 %v300
      %v352 = vpop.f32.mrf.mxu0
      %v353 = vadd.f32 0.0, %v352
      %v354 = vpop.f32.mrf.mxu0
      %v355 = vadd.f32 0.0, %v354
      %356 = vmatmul.bf16.gmra.mxu0 %v303
      %v357 = vpop.f32.mrf.mxu0
      %v358 = vadd.f32 0.0, %v357
      %v359 = vpop.f32.mrf.mxu0
      %v360 = vadd.f32 0.0, %v359
      %361 = vdwg.mxu0
      %362 = vmatpush.bf16.msra.mxu0 0
      %363 = vmatpush.bf16.msra.mxu0 0
      %364 = vmatpush.bf16.msra.mxu0 0
      %365 = vmatpush.bf16.msra.mxu0 0
      %366 = vmatpush.bf16.msra.mxu0 0
      %367 = vmatpush.bf16.msra.mxu0 0
      %368 = vmatpush.bf16.msra.mxu0 0
      %369 = vmatpush.bf16.msra.mxu0 %v289
      %370 = vmatmul.bf16.gmra.mxu0 %v300
      %v371 = vpop.f32.mrf.mxu0
      %v372 = vadd.f32 0.0, %v371
      %v373 = vpop.f32.mrf.mxu0
      %v374 = vadd.f32 0.0, %v373
      %375 = vmatmul.bf16.gmra.mxu0 %v303
      %v376 = vpop.f32.mrf.mxu0
      %v377 = vadd.f32 0.0, %v376
      %v378 = vpop.f32.mrf.mxu0
      %v379 = vadd.f32 0.0, %v378
      %380 = vdwg.mxu0
      %381 = vmatpush.bf16.msra.mxu0 0
      %382 = vmatpush.bf16.msra.mxu0 0
      %383 = vmatpush.bf16.msra.mxu0 0
      %384 = vmatpush.bf16.msra.mxu0 0
      %385 = vmatpush.bf16.msra.mxu0 0
      %386 = vmatpush.bf16.msra.mxu0 0
      %387 = vmatpush.bf16.msra.mxu0 0
      %388 = vmatpush.bf16.msra.mxu0 %v290
      %389 = vmatmul.bf16.gmra.mxu0 %v300
      %v390 = vpop.f32.mrf.mxu0
      %v391 = vadd.f32 0.0, %v390
      %v392 = vpop.f32.mrf.mxu0
      %v393 = vadd.f32 0.0, %v392
      %394 = vmatmul.bf16.gmra.mxu0 %v303
      %v395 = vpop.f32.mrf.mxu0
      %v396 = vadd.f32 0.0, %v395
      %v397 = vpop.f32.mrf.mxu0
      %v398 = vadd.f32 0.0, %v397
      %399 = vdwg.mxu0
      %400 = vmatpush.bf16.msra.mxu0 0
      %401 = vmatpush.bf16.msra.mxu0 0
      %402 = vmatpush.bf16.msra.mxu0 0
      %403 = vmatpush.bf16.msra.mxu0 0
      %404 = vmatpush.bf16.msra.mxu0 0
      %405 = vmatpush.bf16.msra.mxu0 0
      %406 = vmatpush.bf16.msra.mxu0 0
      %407 = vmatpush.bf16.msra.mxu0 %v291
      %408 = vmatmul.bf16.gmra.mxu0 %v300
      %v409 = vpop.f32.mrf.mxu0
      %v410 = vadd.f32 0.0, %v409
      %v411 = vpop.f32.mrf.mxu0
      %v412 = vadd.f32 0.0, %v411
      %413 = vmatmul.bf16.gmra.mxu0 %v303
      %v414 = vpop.f32.mrf.mxu0
      %v415 = vadd.f32 0.0, %v414
      %v416 = vpop.f32.mrf.mxu0
      %v417 = vadd.f32 0.0, %v416
      %418 = vdwg.mxu0
      %v423 = vunpack.c.l.b16 %v182
      %v424 = vunpack.c.l.b16 %v183
      %v425 = vunpack.c.l.b16 %v184
      %v426 = vunpack.c.l.b16 %v185
      %v427 = vpack.c.b16 %v424, %v423
      %v428 = vpack.c.b16 %v426, %v425
      %v435 = vunpack.c.l.b16 %v216
      %v436 = vunpack.c.h.b16 %v216
      %v437 = vunpack.c.l.b16 %v217
      %v438 = vunpack.c.h.b16 %v217
      %v439 = vunpack.c.l.b16 %v218
      %v440 = vunpack.c.h.b16 %v218
      %v441 = vunpack.c.l.b16 %v219
      %v442 = vunpack.c.h.b16 %v219
      %v443 = vunpack.c.l.b16 %v220
      %v444 = vunpack.c.h.b16 %v220
      %v445 = vunpack.c.l.b16 %v221
      %v446 = vunpack.c.h.b16 %v221
      %v447 = vpack.c.b16 %v441, %v435
      %v448 = vpack.c.b16 %v442, %v436
      %v449 = vpack.c.b16 %v443, %v437
      %v450 = vpack.c.b16 %v444, %v438
      %v451 = vpack.c.b16 %v445, %v439
      %v452 = vpack.c.b16 %v446, %v440
      %v460 = vsel %vm298, %v427, 0
      %v463 = vsel %vm298, %v428, 0
      %465 = vmatpush.bf16.msra.mxu0 0
      %466 = vmatpush.bf16.msra.mxu0 0
      %467 = vmatpush.bf16.msra.mxu0 0
      %468 = vmatpush.bf16.msra.mxu0 0
      %469 = vmatpush.bf16.msra.mxu0 0
      %470 = vmatpush.bf16.msra.mxu0 0
      %471 = vmatpush.bf16.msra.mxu0 0
      %472 = vmatpush.bf16.msra.mxu0 %v447
      %473 = vmatmul.bf16.gmra.mxu0 %v460
      %v474 = vpop.f32.mrf.mxu0
      %v475 = vadd.f32 0.0, %v474
      %v476 = vpop.f32.mrf.mxu0
      %v477 = vadd.f32 0.0, %v476
      %478 = vmatmul.bf16.gmra.mxu0 %v463
      %v479 = vpop.f32.mrf.mxu0
      %v480 = vadd.f32 0.0, %v479
      %v481 = vpop.f32.mrf.mxu0
      %v482 = vadd.f32 0.0, %v481
      %483 = vdwg.mxu0
      %484 = vmatpush.bf16.msra.mxu0 0
      %485 = vmatpush.bf16.msra.mxu0 0
      %486 = vmatpush.bf16.msra.mxu0 0
      %487 = vmatpush.bf16.msra.mxu0 0
      %488 = vmatpush.bf16.msra.mxu0 0
      %489 = vmatpush.bf16.msra.mxu0 0
      %490 = vmatpush.bf16.msra.mxu0 0
      %491 = vmatpush.bf16.msra.mxu0 %v448
      %492 = vmatmul.bf16.gmra.mxu0 %v460
      %v493 = vpop.f32.mrf.mxu0
      %v494 = vadd.f32 0.0, %v493
      %v495 = vpop.f32.mrf.mxu0
      %v496 = vadd.f32 0.0, %v495
      %497 = vmatmul.bf16.gmra.mxu0 %v463
      %v498 = vpop.f32.mrf.mxu0
      %v499 = vadd.f32 0.0, %v498
      %v500 = vpop.f32.mrf.mxu0
      %v501 = vadd.f32 0.0, %v500
      %502 = vdwg.mxu0
      %503 = vmatpush.bf16.msra.mxu0 0
      %504 = vmatpush.bf16.msra.mxu0 0
      %505 = vmatpush.bf16.msra.mxu0 0
      %506 = vmatpush.bf16.msra.mxu0 0
      %507 = vmatpush.bf16.msra.mxu0 0
      %508 = vmatpush.bf16.msra.mxu0 0
      %509 = vmatpush.bf16.msra.mxu0 0
      %510 = vmatpush.bf16.msra.mxu0 %v449
      %511 = vmatmul.bf16.gmra.mxu0 %v460
      %v512 = vpop.f32.mrf.mxu0
      %v513 = vadd.f32 0.0, %v512
      %v514 = vpop.f32.mrf.mxu0
      %v515 = vadd.f32 0.0, %v514
      %516 = vmatmul.bf16.gmra.mxu0 %v463
      %v517 = vpop.f32.mrf.mxu0
      %v518 = vadd.f32 0.0, %v517
      %v519 = vpop.f32.mrf.mxu0
      %v520 = vadd.f32 0.0, %v519
      %521 = vdwg.mxu0
      %522 = vmatpush.bf16.msra.mxu0 0
      %523 = vmatpush.bf16.msra.mxu0 0
      %524 = vmatpush.bf16.msra.mxu0 0
      %525 = vmatpush.bf16.msra.mxu0 0
      %526 = vmatpush.bf16.msra.mxu0 0
      %527 = vmatpush.bf16.msra.mxu0 0
      %528 = vmatpush.bf16.msra.mxu0 0
      %529 = vmatpush.bf16.msra.mxu0 %v450
      %530 = vmatmul.bf16.gmra.mxu0 %v460
      %v531 = vpop.f32.mrf.mxu0
      %v532 = vadd.f32 0.0, %v531
      %v533 = vpop.f32.mrf.mxu0
      %v534 = vadd.f32 0.0, %v533
      %535 = vmatmul.bf16.gmra.mxu0 %v463
      %v536 = vpop.f32.mrf.mxu0
      %v537 = vadd.f32 0.0, %v536
      %v538 = vpop.f32.mrf.mxu0
      %v539 = vadd.f32 0.0, %v538
      %540 = vdwg.mxu0
      %541 = vmatpush.bf16.msra.mxu0 0
      %542 = vmatpush.bf16.msra.mxu0 0
      %543 = vmatpush.bf16.msra.mxu0 0
      %544 = vmatpush.bf16.msra.mxu0 0
      %545 = vmatpush.bf16.msra.mxu0 0
      %546 = vmatpush.bf16.msra.mxu0 0
      %547 = vmatpush.bf16.msra.mxu0 0
      %548 = vmatpush.bf16.msra.mxu0 %v451
      %549 = vmatmul.bf16.gmra.mxu0 %v460
      %v550 = vpop.f32.mrf.mxu0
      %v551 = vadd.f32 0.0, %v550
      %v552 = vpop.f32.mrf.mxu0
      %v553 = vadd.f32 0.0, %v552
      %554 = vmatmul.bf16.gmra.mxu0 %v463
      %v555 = vpop.f32.mrf.mxu0
      %v556 = vadd.f32 0.0, %v555
      %v557 = vpop.f32.mrf.mxu0
      %v558 = vadd.f32 0.0, %v557
      %559 = vdwg.mxu0
      %560 = vmatpush.bf16.msra.mxu0 0
      %561 = vmatpush.bf16.msra.mxu0 0
      %562 = vmatpush.bf16.msra.mxu0 0
      %563 = vmatpush.bf16.msra.mxu0 0
      %564 = vmatpush.bf16.msra.mxu0 0
      %565 = vmatpush.bf16.msra.mxu0 0
      %566 = vmatpush.bf16.msra.mxu0 0
      %567 = vmatpush.bf16.msra.mxu0 %v452
      %568 = vmatmul.bf16.gmra.mxu0 %v460
      %v569 = vpop.f32.mrf.mxu0
      %v570 = vadd.f32 0.0, %v569
      %v571 = vpop.f32.mrf.mxu0
      %v572 = vadd.f32 0.0, %v571
      %573 = vmatmul.bf16.gmra.mxu0 %v463
      %v574 = vpop.f32.mrf.mxu0
      %v575 = vadd.f32 0.0, %v574
      %v576 = vpop.f32.mrf.mxu0
      %v577 = vadd.f32 0.0, %v576
      %578 = vdwg.mxu0
      %v583 = vunpack.c.l.b16 %v186
      %v584 = vunpack.c.l.b16 %v187
      %v585 = vunpack.c.l.b16 %v188
      %v586 = vunpack.c.l.b16 %v189
      %v587 = vpack.c.b16 %v584, %v583
      %v588 = vpack.c.b16 %v586, %v585
      %v595 = vunpack.c.l.b16 %v222
      %v596 = vunpack.c.h.b16 %v222
      %v597 = vunpack.c.l.b16 %v223
      %v598 = vunpack.c.h.b16 %v223
      %v599 = vunpack.c.l.b16 %v224
      %v600 = vunpack.c.h.b16 %v224
      %v601 = vunpack.c.l.b16 %v225
      %v602 = vunpack.c.h.b16 %v225
      %v603 = vunpack.c.l.b16 %v226
      %v604 = vunpack.c.h.b16 %v226
      %v605 = vunpack.c.l.b16 %v227
      %v606 = vunpack.c.h.b16 %v227
      %v607 = vpack.c.b16 %v601, %v595
      %v608 = vpack.c.b16 %v602, %v596
      %v609 = vpack.c.b16 %v603, %v597
      %v610 = vpack.c.b16 %v604, %v598
      %v611 = vpack.c.b16 %v605, %v599
      %v612 = vpack.c.b16 %v606, %v600
      %v620 = vsel %vm298, %v587, 0
      %v623 = vsel %vm298, %v588, 0
      %625 = vmatpush.bf16.msra.mxu0 0
      %626 = vmatpush.bf16.msra.mxu0 0
      %627 = vmatpush.bf16.msra.mxu0 0
      %628 = vmatpush.bf16.msra.mxu0 0
      %629 = vmatpush.bf16.msra.mxu0 0
      %630 = vmatpush.bf16.msra.mxu0 0
      %631 = vmatpush.bf16.msra.mxu0 0
      %632 = vmatpush.bf16.msra.mxu0 %v607
      %633 = vmatmul.bf16.gmra.mxu0 %v620
      %v634 = vpop.f32.mrf.mxu0
      %v635 = vadd.f32 0.0, %v634
      %v636 = vpop.f32.mrf.mxu0
      %v637 = vadd.f32 0.0, %v636
      %638 = vmatmul.bf16.gmra.mxu0 %v623
      %v639 = vpop.f32.mrf.mxu0
      %v640 = vadd.f32 0.0, %v639
      %v641 = vpop.f32.mrf.mxu0
      %v642 = vadd.f32 0.0, %v641
      %643 = vdwg.mxu0
      %644 = vmatpush.bf16.msra.mxu0 0
      %645 = vmatpush.bf16.msra.mxu0 0
      %646 = vmatpush.bf16.msra.mxu0 0
      %647 = vmatpush.bf16.msra.mxu0 0
      %648 = vmatpush.bf16.msra.mxu0 0
      %649 = vmatpush.bf16.msra.mxu0 0
      %650 = vmatpush.bf16.msra.mxu0 0
      %651 = vmatpush.bf16.msra.mxu0 %v608
      %652 = vmatmul.bf16.gmra.mxu0 %v620
      %v653 = vpop.f32.mrf.mxu0
      %v654 = vadd.f32 0.0, %v653
      %v655 = vpop.f32.mrf.mxu0
      %v656 = vadd.f32 0.0, %v655
      %657 = vmatmul.bf16.gmra.mxu0 %v623
      %v658 = vpop.f32.mrf.mxu0
      %v659 = vadd.f32 0.0, %v658
      %v660 = vpop.f32.mrf.mxu0
      %v661 = vadd.f32 0.0, %v660
      %662 = vdwg.mxu0
      %663 = vmatpush.bf16.msra.mxu0 0
      %664 = vmatpush.bf16.msra.mxu0 0
      %665 = vmatpush.bf16.msra.mxu0 0
      %666 = vmatpush.bf16.msra.mxu0 0
      %667 = vmatpush.bf16.msra.mxu0 0
      %668 = vmatpush.bf16.msra.mxu0 0
      %669 = vmatpush.bf16.msra.mxu0 0
      %670 = vmatpush.bf16.msra.mxu0 %v609
      %671 = vmatmul.bf16.gmra.mxu0 %v620
      %v672 = vpop.f32.mrf.mxu0
      %v673 = vadd.f32 0.0, %v672
      %v674 = vpop.f32.mrf.mxu0
      %v675 = vadd.f32 0.0, %v674
      %676 = vmatmul.bf16.gmra.mxu0 %v623
      %v677 = vpop.f32.mrf.mxu0
      %v678 = vadd.f32 0.0, %v677
      %v679 = vpop.f32.mrf.mxu0
      %v680 = vadd.f32 0.0, %v679
      %681 = vdwg.mxu0
      %682 = vmatpush.bf16.msra.mxu0 0
      %683 = vmatpush.bf16.msra.mxu0 0
      %684 = vmatpush.bf16.msra.mxu0 0
      %685 = vmatpush.bf16.msra.mxu0 0
      %686 = vmatpush.bf16.msra.mxu0 0
      %687 = vmatpush.bf16.msra.mxu0 0
      %688 = vmatpush.bf16.msra.mxu0 0
      %689 = vmatpush.bf16.msra.mxu0 %v610
      %690 = vmatmul.bf16.gmra.mxu0 %v620
      %v691 = vpop.f32.mrf.mxu0
      %v692 = vadd.f32 0.0, %v691
      %v693 = vpop.f32.mrf.mxu0
      %v694 = vadd.f32 0.0, %v693
      %695 = vmatmul.bf16.gmra.mxu0 %v623
      %v696 = vpop.f32.mrf.mxu0
      %v697 = vadd.f32 0.0, %v696
      %v698 = vpop.f32.mrf.mxu0
      %v699 = vadd.f32 0.0, %v698
      %700 = vdwg.mxu0
      %701 = vmatpush.bf16.msra.mxu0 0
      %702 = vmatpush.bf16.msra.mxu0 0
      %703 = vmatpush.bf16.msra.mxu0 0
      %704 = vmatpush.bf16.msra.mxu0 0
      %705 = vmatpush.bf16.msra.mxu0 0
      %706 = vmatpush.bf16.msra.mxu0 0
      %707 = vmatpush.bf16.msra.mxu0 0
      %708 = vmatpush.bf16.msra.mxu0 %v611
      %709 = vmatmul.bf16.gmra.mxu0 %v620
      %v710 = vpop.f32.mrf.mxu0
      %v711 = vadd.f32 0.0, %v710
      %v712 = vpop.f32.mrf.mxu0
      %v713 = vadd.f32 0.0, %v712
      %714 = vmatmul.bf16.gmra.mxu0 %v623
      %v715 = vpop.f32.mrf.mxu0
      %v716 = vadd.f32 0.0, %v715
      %v717 = vpop.f32.mrf.mxu0
      %v718 = vadd.f32 0.0, %v717
      %719 = vdwg.mxu0
      %720 = vmatpush.bf16.msra.mxu0 0
      %721 = vmatpush.bf16.msra.mxu0 0
      %722 = vmatpush.bf16.msra.mxu0 0
      %723 = vmatpush.bf16.msra.mxu0 0
      %724 = vmatpush.bf16.msra.mxu0 0
      %725 = vmatpush.bf16.msra.mxu0 0
      %726 = vmatpush.bf16.msra.mxu0 0
      %727 = vmatpush.bf16.msra.mxu0 %v612
      %728 = vmatmul.bf16.gmra.mxu0 %v620
      %v729 = vpop.f32.mrf.mxu0
      %v730 = vadd.f32 0.0, %v729
      %v731 = vpop.f32.mrf.mxu0
      %v732 = vadd.f32 0.0, %v731
      %733 = vmatmul.bf16.gmra.mxu0 %v623
      %v734 = vpop.f32.mrf.mxu0
      %v735 = vadd.f32 0.0, %v734
      %v736 = vpop.f32.mrf.mxu0
      %v737 = vadd.f32 0.0, %v736
      %738 = vdwg.mxu0
      %v743 = vunpack.c.l.b16 %v190
      %v744 = vunpack.c.l.b16 %v191
      %v745 = vunpack.c.l.b16 %v192
      %v746 = vunpack.c.l.b16 %v193
      %v747 = vpack.c.b16 %v744, %v743
      %v748 = vpack.c.b16 %v746, %v745
      %v755 = vunpack.c.l.b16 %v228
      %v756 = vunpack.c.h.b16 %v228
      %v757 = vunpack.c.l.b16 %v229
      %v758 = vunpack.c.h.b16 %v229
      %v759 = vunpack.c.l.b16 %v230
      %v760 = vunpack.c.h.b16 %v230
      %v761 = vunpack.c.l.b16 %v231
      %v762 = vunpack.c.h.b16 %v231
      %v763 = vunpack.c.l.b16 %v232
      %v764 = vunpack.c.h.b16 %v232
      %v765 = vunpack.c.l.b16 %v233
      %v766 = vunpack.c.h.b16 %v233
      %v767 = vpack.c.b16 %v761, %v755
      %v768 = vpack.c.b16 %v762, %v756
      %v769 = vpack.c.b16 %v763, %v757
      %v770 = vpack.c.b16 %v764, %v758
      %v771 = vpack.c.b16 %v765, %v759
      %v772 = vpack.c.b16 %v766, %v760
      %v780 = vsel %vm298, %v747, 0
      %v783 = vsel %vm298, %v748, 0
      %785 = vmatpush.bf16.msra.mxu0 0
      %786 = vmatpush.bf16.msra.mxu0 0
      %787 = vmatpush.bf16.msra.mxu0 0
      %788 = vmatpush.bf16.msra.mxu0 0
      %789 = vmatpush.bf16.msra.mxu0 0
      %790 = vmatpush.bf16.msra.mxu0 0
      %791 = vmatpush.bf16.msra.mxu0 0
      %792 = vmatpush.bf16.msra.mxu0 %v767
      %793 = vmatmul.bf16.gmra.mxu0 %v780
      %v794 = vpop.f32.mrf.mxu0
      %v795 = vadd.f32 0.0, %v794
      %v796 = vpop.f32.mrf.mxu0
      %v797 = vadd.f32 0.0, %v796
      %798 = vmatmul.bf16.gmra.mxu0 %v783
      %v799 = vpop.f32.mrf.mxu0
      %v800 = vadd.f32 0.0, %v799
      %v801 = vpop.f32.mrf.mxu0
      %v802 = vadd.f32 0.0, %v801
      %803 = vdwg.mxu0
      %804 = vmatpush.bf16.msra.mxu0 0
      %805 = vmatpush.bf16.msra.mxu0 0
      %806 = vmatpush.bf16.msra.mxu0 0
      %807 = vmatpush.bf16.msra.mxu0 0
      %808 = vmatpush.bf16.msra.mxu0 0
      %809 = vmatpush.bf16.msra.mxu0 0
      %810 = vmatpush.bf16.msra.mxu0 0
      %811 = vmatpush.bf16.msra.mxu0 %v768
      %812 = vmatmul.bf16.gmra.mxu0 %v780
      %v813 = vpop.f32.mrf.mxu0
      %v814 = vadd.f32 0.0, %v813
      %v815 = vpop.f32.mrf.mxu0
      %v816 = vadd.f32 0.0, %v815
      %817 = vmatmul.bf16.gmra.mxu0 %v783
      %v818 = vpop.f32.mrf.mxu0
      %v819 = vadd.f32 0.0, %v818
      %v820 = vpop.f32.mrf.mxu0
      %v821 = vadd.f32 0.0, %v820
      %822 = vdwg.mxu0
      %823 = vmatpush.bf16.msra.mxu0 0
      %824 = vmatpush.bf16.msra.mxu0 0
      %825 = vmatpush.bf16.msra.mxu0 0
      %826 = vmatpush.bf16.msra.mxu0 0
      %827 = vmatpush.bf16.msra.mxu0 0
      %828 = vmatpush.bf16.msra.mxu0 0
      %829 = vmatpush.bf16.msra.mxu0 0
      %830 = vmatpush.bf16.msra.mxu0 %v769
      %831 = vmatmul.bf16.gmra.mxu0 %v780
      %v832 = vpop.f32.mrf.mxu0
      %v833 = vadd.f32 0.0, %v832
      %v834 = vpop.f32.mrf.mxu0
      %v835 = vadd.f32 0.0, %v834
      %836 = vmatmul.bf16.gmra.mxu0 %v783
      %v837 = vpop.f32.mrf.mxu0
      %v838 = vadd.f32 0.0, %v837
      %v839 = vpop.f32.mrf.mxu0
      %v840 = vadd.f32 0.0, %v839
      %841 = vdwg.mxu0
      %842 = vmatpush.bf16.msra.mxu0 0
      %843 = vmatpush.bf16.msra.mxu0 0
      %844 = vmatpush.bf16.msra.mxu0 0
      %845 = vmatpush.bf16.msra.mxu0 0
      %846 = vmatpush.bf16.msra.mxu0 0
      %847 = vmatpush.bf16.msra.mxu0 0
      %848 = vmatpush.bf16.msra.mxu0 0
      %849 = vmatpush.bf16.msra.mxu0 %v770
      %850 = vmatmul.bf16.gmra.mxu0 %v780
      %v851 = vpop.f32.mrf.mxu0
      %v852 = vadd.f32 0.0, %v851
      %v853 = vpop.f32.mrf.mxu0
      %v854 = vadd.f32 0.0, %v853
      %855 = vmatmul.bf16.gmra.mxu0 %v783
      %v856 = vpop.f32.mrf.mxu0
      %v857 = vadd.f32 0.0, %v856
      %v858 = vpop.f32.mrf.mxu0
      %v859 = vadd.f32 0.0, %v858
      %860 = vdwg.mxu0
      %861 = vmatpush.bf16.msra.mxu0 0
      %862 = vmatpush.bf16.msra.mxu0 0
      %863 = vmatpush.bf16.msra.mxu0 0
      %864 = vmatpush.bf16.msra.mxu0 0
      %865 = vmatpush.bf16.msra.mxu0 0
      %866 = vmatpush.bf16.msra.mxu0 0
      %867 = vmatpush.bf16.msra.mxu0 0
      %868 = vmatpush.bf16.msra.mxu0 %v771
      %869 = vmatmul.bf16.gmra.mxu0 %v780
      %v870 = vpop.f32.mrf.mxu0
      %v871 = vadd.f32 0.0, %v870
      %v872 = vpop.f32.mrf.mxu0
      %v873 = vadd.f32 0.0, %v872
      %874 = vmatmul.bf16.gmra.mxu0 %v783
      %v875 = vpop.f32.mrf.mxu0
      %v876 = vadd.f32 0.0, %v875
      %v877 = vpop.f32.mrf.mxu0
      %v878 = vadd.f32 0.0, %v877
      %879 = vdwg.mxu0
      %880 = vmatpush.bf16.msra.mxu0 0
      %881 = vmatpush.bf16.msra.mxu0 0
      %882 = vmatpush.bf16.msra.mxu0 0
      %883 = vmatpush.bf16.msra.mxu0 0
      %884 = vmatpush.bf16.msra.mxu0 0
      %885 = vmatpush.bf16.msra.mxu0 0
      %886 = vmatpush.bf16.msra.mxu0 0
      %887 = vmatpush.bf16.msra.mxu0 %v772
      %888 = vmatmul.bf16.gmra.mxu0 %v780
      %v889 = vpop.f32.mrf.mxu0
      %v890 = vadd.f32 0.0, %v889
      %v891 = vpop.f32.mrf.mxu0
      %v892 = vadd.f32 0.0, %v891
      %893 = vmatmul.bf16.gmra.mxu0 %v783
      %v894 = vpop.f32.mrf.mxu0
      %v895 = vadd.f32 0.0, %v894
      %v896 = vpop.f32.mrf.mxu0
      %v897 = vadd.f32 0.0, %v896
      %898 = vdwg.mxu0
      %v903 = vunpack.c.l.b16 %v194
      %v904 = vunpack.c.l.b16 %v195
      %v905 = vunpack.c.l.b16 %v196
      %v906 = vunpack.c.l.b16 %v197
      %v907 = vpack.c.b16 %v904, %v903
      %v908 = vpack.c.b16 %v906, %v905
      %v915 = vunpack.c.l.b16 %v234
      %v916 = vunpack.c.h.b16 %v234
      %v917 = vunpack.c.l.b16 %v235
      %v918 = vunpack.c.h.b16 %v235
      %v919 = vunpack.c.l.b16 %v236
      %v920 = vunpack.c.h.b16 %v236
      %v921 = vunpack.c.l.b16 %v237
      %v922 = vunpack.c.h.b16 %v237
      %v923 = vunpack.c.l.b16 %v238
      %v924 = vunpack.c.h.b16 %v238
      %v925 = vunpack.c.l.b16 %v239
      %v926 = vunpack.c.h.b16 %v239
      %v927 = vpack.c.b16 %v921, %v915
      %v928 = vpack.c.b16 %v922, %v916
      %v929 = vpack.c.b16 %v923, %v917
      %v930 = vpack.c.b16 %v924, %v918
      %v931 = vpack.c.b16 %v925, %v919
      %v932 = vpack.c.b16 %v926, %v920
      %v940 = vsel %vm298, %v907, 0
      %v943 = vsel %vm298, %v908, 0
      %945 = vmatpush.bf16.msra.mxu0 0
      %946 = vmatpush.bf16.msra.mxu0 0
      %947 = vmatpush.bf16.msra.mxu0 0
      %948 = vmatpush.bf16.msra.mxu0 0
      %949 = vmatpush.bf16.msra.mxu0 0
      %950 = vmatpush.bf16.msra.mxu0 0
      %951 = vmatpush.bf16.msra.mxu0 0
      %952 = vmatpush.bf16.msra.mxu0 %v927
      %953 = vmatmul.bf16.gmra.mxu0 %v940
      %v954 = vpop.f32.mrf.mxu0
      %v955 = vadd.f32 0.0, %v954
      %v956 = vpop.f32.mrf.mxu0
      %v957 = vadd.f32 0.0, %v956
      %958 = vmatmul.bf16.gmra.mxu0 %v943
      %v959 = vpop.f32.mrf.mxu0
      %v960 = vadd.f32 0.0, %v959
      %v961 = vpop.f32.mrf.mxu0
      %v962 = vadd.f32 0.0, %v961
      %963 = vdwg.mxu0
      %964 = vmatpush.bf16.msra.mxu0 0
      %965 = vmatpush.bf16.msra.mxu0 0
      %966 = vmatpush.bf16.msra.mxu0 0
      %967 = vmatpush.bf16.msra.mxu0 0
      %968 = vmatpush.bf16.msra.mxu0 0
      %969 = vmatpush.bf16.msra.mxu0 0
      %970 = vmatpush.bf16.msra.mxu0 0
      %971 = vmatpush.bf16.msra.mxu0 %v928
      %972 = vmatmul.bf16.gmra.mxu0 %v940
      %v973 = vpop.f32.mrf.mxu0
      %v974 = vadd.f32 0.0, %v973
      %v975 = vpop.f32.mrf.mxu0
      %v976 = vadd.f32 0.0, %v975
      %977 = vmatmul.bf16.gmra.mxu0 %v943
      %v978 = vpop.f32.mrf.mxu0
      %v979 = vadd.f32 0.0, %v978
      %v980 = vpop.f32.mrf.mxu0
      %v981 = vadd.f32 0.0, %v980
      %982 = vdwg.mxu0
      %983 = vmatpush.bf16.msra.mxu0 0
      %984 = vmatpush.bf16.msra.mxu0 0
      %985 = vmatpush.bf16.msra.mxu0 0
      %986 = vmatpush.bf16.msra.mxu0 0
      %987 = vmatpush.bf16.msra.mxu0 0
      %988 = vmatpush.bf16.msra.mxu0 0
      %989 = vmatpush.bf16.msra.mxu0 0
      %990 = vmatpush.bf16.msra.mxu0 %v929
      %991 = vmatmul.bf16.gmra.mxu0 %v940
      %v992 = vpop.f32.mrf.mxu0
      %v993 = vadd.f32 0.0, %v992
      %v994 = vpop.f32.mrf.mxu0
      %v995 = vadd.f32 0.0, %v994
      %996 = vmatmul.bf16.gmra.mxu0 %v943
      %v997 = vpop.f32.mrf.mxu0
      %v998 = vadd.f32 0.0, %v997
      %v999 = vpop.f32.mrf.mxu0
      %v1000 = vadd.f32 0.0, %v999
      %1001 = vdwg.mxu0
      %1002 = vmatpush.bf16.msra.mxu0 0
      %1003 = vmatpush.bf16.msra.mxu0 0
      %1004 = vmatpush.bf16.msra.mxu0 0
      %1005 = vmatpush.bf16.msra.mxu0 0
      %1006 = vmatpush.bf16.msra.mxu0 0
      %1007 = vmatpush.bf16.msra.mxu0 0
      %1008 = vmatpush.bf16.msra.mxu0 0
      %1009 = vmatpush.bf16.msra.mxu0 %v930
      %1010 = vmatmul.bf16.gmra.mxu0 %v940
      %v1011 = vpop.f32.mrf.mxu0
      %v1012 = vadd.f32 0.0, %v1011
      %v1013 = vpop.f32.mrf.mxu0
      %v1014 = vadd.f32 0.0, %v1013
      %1015 = vmatmul.bf16.gmra.mxu0 %v943
      %v1016 = vpop.f32.mrf.mxu0
      %v1017 = vadd.f32 0.0, %v1016
      %v1018 = vpop.f32.mrf.mxu0
      %v1019 = vadd.f32 0.0, %v1018
      %1020 = vdwg.mxu0
      %1021 = vmatpush.bf16.msra.mxu0 0
      %1022 = vmatpush.bf16.msra.mxu0 0
      %1023 = vmatpush.bf16.msra.mxu0 0
      %1024 = vmatpush.bf16.msra.mxu0 0
      %1025 = vmatpush.bf16.msra.mxu0 0
      %1026 = vmatpush.bf16.msra.mxu0 0
      %1027 = vmatpush.bf16.msra.mxu0 0
      %1028 = vmatpush.bf16.msra.mxu0 %v931
      %1029 = vmatmul.bf16.gmra.mxu0 %v940
      %v1030 = vpop.f32.mrf.mxu0
      %v1031 = vadd.f32 0.0, %v1030
      %v1032 = vpop.f32.mrf.mxu0
      %v1033 = vadd.f32 0.0, %v1032
      %1034 = vmatmul.bf16.gmra.mxu0 %v943
      %v1035 = vpop.f32.mrf.mxu0
      %v1036 = vadd.f32 0.0, %v1035
      %v1037 = vpop.f32.mrf.mxu0
      %v1038 = vadd.f32 0.0, %v1037
      %1039 = vdwg.mxu0
      %1040 = vmatpush.bf16.msra.mxu0 0
      %1041 = vmatpush.bf16.msra.mxu0 0
      %1042 = vmatpush.bf16.msra.mxu0 0
      %1043 = vmatpush.bf16.msra.mxu0 0
      %1044 = vmatpush.bf16.msra.mxu0 0
      %1045 = vmatpush.bf16.msra.mxu0 0
      %1046 = vmatpush.bf16.msra.mxu0 0
      %1047 = vmatpush.bf16.msra.mxu0 %v932
      %1048 = vmatmul.bf16.gmra.mxu0 %v940
      %v1049 = vpop.f32.mrf.mxu0
      %v1050 = vadd.f32 0.0, %v1049
      %v1051 = vpop.f32.mrf.mxu0
      %v1052 = vadd.f32 0.0, %v1051
      %1053 = vmatmul.bf16.gmra.mxu0 %v943
      %v1054 = vpop.f32.mrf.mxu0
      %v1055 = vadd.f32 0.0, %v1054
      %v1056 = vpop.f32.mrf.mxu0
      %v1057 = vadd.f32 0.0, %v1056
      %1058 = vdwg.mxu0
      %v1063 = vunpack.c.l.b16 %v198
      %v1064 = vunpack.c.l.b16 %v199
      %v1065 = vunpack.c.l.b16 %v200
      %v1066 = vunpack.c.l.b16 %v201
      %v1067 = vpack.c.b16 %v1064, %v1063
      %v1068 = vpack.c.b16 %v1066, %v1065
      %v1075 = vunpack.c.l.b16 %v240
      %v1076 = vunpack.c.h.b16 %v240
      %v1077 = vunpack.c.l.b16 %v241
      %v1078 = vunpack.c.h.b16 %v241
      %v1079 = vunpack.c.l.b16 %v242
      %v1080 = vunpack.c.h.b16 %v242
      %v1081 = vunpack.c.l.b16 %v243
      %v1082 = vunpack.c.h.b16 %v243
      %v1083 = vunpack.c.l.b16 %v244
      %v1084 = vunpack.c.h.b16 %v244
      %v1085 = vunpack.c.l.b16 %v245
      %v1086 = vunpack.c.h.b16 %v245
      %v1087 = vpack.c.b16 %v1081, %v1075
      %v1088 = vpack.c.b16 %v1082, %v1076
      %v1089 = vpack.c.b16 %v1083, %v1077
      %v1090 = vpack.c.b16 %v1084, %v1078
      %v1091 = vpack.c.b16 %v1085, %v1079
      %v1092 = vpack.c.b16 %v1086, %v1080
      %v1100 = vsel %vm298, %v1067, 0
      %v1103 = vsel %vm298, %v1068, 0
      %1105 = vmatpush.bf16.msra.mxu0 0
      %1106 = vmatpush.bf16.msra.mxu0 0
      %1107 = vmatpush.bf16.msra.mxu0 0
      %1108 = vmatpush.bf16.msra.mxu0 0
      %1109 = vmatpush.bf16.msra.mxu0 0
      %1110 = vmatpush.bf16.msra.mxu0 0
      %1111 = vmatpush.bf16.msra.mxu0 0
      %1112 = vmatpush.bf16.msra.mxu0 %v1087
      %1113 = vmatmul.bf16.gmra.mxu0 %v1100
      %v1114 = vpop.f32.mrf.mxu0
      %v1115 = vadd.f32 0.0, %v1114
      %v1116 = vpop.f32.mrf.mxu0
      %v1117 = vadd.f32 0.0, %v1116
      %1118 = vmatmul.bf16.gmra.mxu0 %v1103
      %v1119 = vpop.f32.mrf.mxu0
      %v1120 = vadd.f32 0.0, %v1119
      %v1121 = vpop.f32.mrf.mxu0
      %v1122 = vadd.f32 0.0, %v1121
      %1123 = vdwg.mxu0
      %1124 = vmatpush.bf16.msra.mxu0 0
      %1125 = vmatpush.bf16.msra.mxu0 0
      %1126 = vmatpush.bf16.msra.mxu0 0
      %1127 = vmatpush.bf16.msra.mxu0 0
      %1128 = vmatpush.bf16.msra.mxu0 0
      %1129 = vmatpush.bf16.msra.mxu0 0
      %1130 = vmatpush.bf16.msra.mxu0 0
      %1131 = vmatpush.bf16.msra.mxu0 %v1088
      %1132 = vmatmul.bf16.gmra.mxu0 %v1100
      %v1133 = vpop.f32.mrf.mxu0
      %v1134 = vadd.f32 0.0, %v1133
      %v1135 = vpop.f32.mrf.mxu0
      %v1136 = vadd.f32 0.0, %v1135
      %1137 = vmatmul.bf16.gmra.mxu0 %v1103
      %v1138 = vpop.f32.mrf.mxu0
      %v1139 = vadd.f32 0.0, %v1138
      %v1140 = vpop.f32.mrf.mxu0
      %v1141 = vadd.f32 0.0, %v1140
      %1142 = vdwg.mxu0
      %1143 = vmatpush.bf16.msra.mxu0 0
      %1144 = vmatpush.bf16.msra.mxu0 0
      %1145 = vmatpush.bf16.msra.mxu0 0
      %1146 = vmatpush.bf16.msra.mxu0 0
      %1147 = vmatpush.bf16.msra.mxu0 0
      %1148 = vmatpush.bf16.msra.mxu0 0
      %1149 = vmatpush.bf16.msra.mxu0 0
      %1150 = vmatpush.bf16.msra.mxu0 %v1089
      %1151 = vmatmul.bf16.gmra.mxu0 %v1100
      %v1152 = vpop.f32.mrf.mxu0
      %v1153 = vadd.f32 0.0, %v1152
      %v1154 = vpop.f32.mrf.mxu0
      %v1155 = vadd.f32 0.0, %v1154
      %1156 = vmatmul.bf16.gmra.mxu0 %v1103
      %v1157 = vpop.f32.mrf.mxu0
      %v1158 = vadd.f32 0.0, %v1157
      %v1159 = vpop.f32.mrf.mxu0
      %v1160 = vadd.f32 0.0, %v1159
      %1161 = vdwg.mxu0
      %1162 = vmatpush.bf16.msra.mxu0 0
      %1163 = vmatpush.bf16.msra.mxu0 0
      %1164 = vmatpush.bf16.msra.mxu0 0
      %1165 = vmatpush.bf16.msra.mxu0 0
      %1166 = vmatpush.bf16.msra.mxu0 0
      %1167 = vmatpush.bf16.msra.mxu0 0
      %1168 = vmatpush.bf16.msra.mxu0 0
      %1169 = vmatpush.bf16.msra.mxu0 %v1090
      %1170 = vmatmul.bf16.gmra.mxu0 %v1100
      %v1171 = vpop.f32.mrf.mxu0
      %v1172 = vadd.f32 0.0, %v1171
      %v1173 = vpop.f32.mrf.mxu0
      %v1174 = vadd.f32 0.0, %v1173
      %1175 = vmatmul.bf16.gmra.mxu0 %v1103
      %v1176 = vpop.f32.mrf.mxu0
      %v1177 = vadd.f32 0.0, %v1176
      %v1178 = vpop.f32.mrf.mxu0
      %v1179 = vadd.f32 0.0, %v1178
      %1180 = vdwg.mxu0
      %1181 = vmatpush.bf16.msra.mxu0 0
      %1182 = vmatpush.bf16.msra.mxu0 0
      %1183 = vmatpush.bf16.msra.mxu0 0
      %1184 = vmatpush.bf16.msra.mxu0 0
      %1185 = vmatpush.bf16.msra.mxu0 0
      %1186 = vmatpush.bf16.msra.mxu0 0
      %1187 = vmatpush.bf16.msra.mxu0 0
      %1188 = vmatpush.bf16.msra.mxu0 %v1091
      %1189 = vmatmul.bf16.gmra.mxu0 %v1100
      %v1190 = vpop.f32.mrf.mxu0
      %v1191 = vadd.f32 0.0, %v1190
      %v1192 = vpop.f32.mrf.mxu0
      %v1193 = vadd.f32 0.0, %v1192
      %1194 = vmatmul.bf16.gmra.mxu0 %v1103
      %v1195 = vpop.f32.mrf.mxu0
      %v1196 = vadd.f32 0.0, %v1195
      %v1197 = vpop.f32.mrf.mxu0
      %v1198 = vadd.f32 0.0, %v1197
      %1199 = vdwg.mxu0
      %1200 = vmatpush.bf16.msra.mxu0 0
      %1201 = vmatpush.bf16.msra.mxu0 0
      %1202 = vmatpush.bf16.msra.mxu0 0
      %1203 = vmatpush.bf16.msra.mxu0 0
      %1204 = vmatpush.bf16.msra.mxu0 0
      %1205 = vmatpush.bf16.msra.mxu0 0
      %1206 = vmatpush.bf16.msra.mxu0 0
      %1207 = vmatpush.bf16.msra.mxu0 %v1092
      %1208 = vmatmul.bf16.gmra.mxu0 %v1100
      %v1209 = vpop.f32.mrf.mxu0
      %v1210 = vadd.f32 0.0, %v1209
      %v1211 = vpop.f32.mrf.mxu0
      %v1212 = vadd.f32 0.0, %v1211
      %1213 = vmatmul.bf16.gmra.mxu0 %v1103
      %v1214 = vpop.f32.mrf.mxu0
      %v1215 = vadd.f32 0.0, %v1214
      %v1216 = vpop.f32.mrf.mxu0
      %v1217 = vadd.f32 0.0, %v1216
      %1218 = vdwg.mxu0
      %v1223 = vunpack.c.l.b16 %v202
      %v1224 = vunpack.c.l.b16 %v203
      %v1225 = vunpack.c.l.b16 %v204
      %v1226 = vunpack.c.l.b16 %v205
      %v1227 = vpack.c.b16 %v1224, %v1223
      %v1228 = vpack.c.b16 %v1226, %v1225
      %v1235 = vunpack.c.l.b16 %v246
      %v1236 = vunpack.c.h.b16 %v246
      %v1237 = vunpack.c.l.b16 %v247
      %v1238 = vunpack.c.h.b16 %v247
      %v1239 = vunpack.c.l.b16 %v248
      %v1240 = vunpack.c.h.b16 %v248
      %v1241 = vunpack.c.l.b16 %v249
      %v1242 = vunpack.c.h.b16 %v249
      %v1243 = vunpack.c.l.b16 %v250
      %v1244 = vunpack.c.h.b16 %v250
      %v1245 = vunpack.c.l.b16 %v251
      %v1246 = vunpack.c.h.b16 %v251
      %v1247 = vpack.c.b16 %v1241, %v1235
      %v1248 = vpack.c.b16 %v1242, %v1236
      %v1249 = vpack.c.b16 %v1243, %v1237
      %v1250 = vpack.c.b16 %v1244, %v1238
      %v1251 = vpack.c.b16 %v1245, %v1239
      %v1252 = vpack.c.b16 %v1246, %v1240
      %v1260 = vsel %vm298, %v1227, 0
      %v1263 = vsel %vm298, %v1228, 0
      %1265 = vmatpush.bf16.msra.mxu0 0
      %1266 = vmatpush.bf16.msra.mxu0 0
      %1267 = vmatpush.bf16.msra.mxu0 0
      %1268 = vmatpush.bf16.msra.mxu0 0
      %1269 = vmatpush.bf16.msra.mxu0 0
      %1270 = vmatpush.bf16.msra.mxu0 0
      %1271 = vmatpush.bf16.msra.mxu0 0
      %1272 = vmatpush.bf16.msra.mxu0 %v1247
      %1273 = vmatmul.bf16.gmra.mxu0 %v1260
      %v1274 = vpop.f32.mrf.mxu0
      %v1275 = vadd.f32 0.0, %v1274
      %v1276 = vpop.f32.mrf.mxu0
      %v1277 = vadd.f32 0.0, %v1276
      %1278 = vmatmul.bf16.gmra.mxu0 %v1263
      %v1279 = vpop.f32.mrf.mxu0
      %v1280 = vadd.f32 0.0, %v1279
      %v1281 = vpop.f32.mrf.mxu0
      %v1282 = vadd.f32 0.0, %v1281
      %1283 = vdwg.mxu0
      %1284 = vmatpush.bf16.msra.mxu0 0
      %1285 = vmatpush.bf16.msra.mxu0 0
      %1286 = vmatpush.bf16.msra.mxu0 0
      %1287 = vmatpush.bf16.msra.mxu0 0
      %1288 = vmatpush.bf16.msra.mxu0 0
      %1289 = vmatpush.bf16.msra.mxu0 0
      %1290 = vmatpush.bf16.msra.mxu0 0
      %1291 = vmatpush.bf16.msra.mxu0 %v1248
      %1292 = vmatmul.bf16.gmra.mxu0 %v1260
      %v1293 = vpop.f32.mrf.mxu0
      %v1294 = vadd.f32 0.0, %v1293
      %v1295 = vpop.f32.mrf.mxu0
      %v1296 = vadd.f32 0.0, %v1295
      %1297 = vmatmul.bf16.gmra.mxu0 %v1263
      %v1298 = vpop.f32.mrf.mxu0
      %v1299 = vadd.f32 0.0, %v1298
      %v1300 = vpop.f32.mrf.mxu0
      %v1301 = vadd.f32 0.0, %v1300
      %1302 = vdwg.mxu0
      %1303 = vmatpush.bf16.msra.mxu0 0
      %1304 = vmatpush.bf16.msra.mxu0 0
      %1305 = vmatpush.bf16.msra.mxu0 0
      %1306 = vmatpush.bf16.msra.mxu0 0
      %1307 = vmatpush.bf16.msra.mxu0 0
      %1308 = vmatpush.bf16.msra.mxu0 0
      %1309 = vmatpush.bf16.msra.mxu0 0
      %1310 = vmatpush.bf16.msra.mxu0 %v1249
      %1311 = vmatmul.bf16.gmra.mxu0 %v1260
      %v1312 = vpop.f32.mrf.mxu0
      %v1313 = vadd.f32 0.0, %v1312
      %v1314 = vpop.f32.mrf.mxu0
      %v1315 = vadd.f32 0.0, %v1314
      %1316 = vmatmul.bf16.gmra.mxu0 %v1263
      %v1317 = vpop.f32.mrf.mxu0
      %v1318 = vadd.f32 0.0, %v1317
      %v1319 = vpop.f32.mrf.mxu0
      %v1320 = vadd.f32 0.0, %v1319
      %1321 = vdwg.mxu0
      %1322 = vmatpush.bf16.msra.mxu0 0
      %1323 = vmatpush.bf16.msra.mxu0 0
      %1324 = vmatpush.bf16.msra.mxu0 0
      %1325 = vmatpush.bf16.msra.mxu0 0
      %1326 = vmatpush.bf16.msra.mxu0 0
      %1327 = vmatpush.bf16.msra.mxu0 0
      %1328 = vmatpush.bf16.msra.mxu0 0
      %1329 = vmatpush.bf16.msra.mxu0 %v1250
      %1330 = vmatmul.bf16.gmra.mxu0 %v1260
      %v1331 = vpop.f32.mrf.mxu0
      %v1332 = vadd.f32 0.0, %v1331
      %v1333 = vpop.f32.mrf.mxu0
      %v1334 = vadd.f32 0.0, %v1333
      %1335 = vmatmul.bf16.gmra.mxu0 %v1263
      %v1336 = vpop.f32.mrf.mxu0
      %v1337 = vadd.f32 0.0, %v1336
      %v1338 = vpop.f32.mrf.mxu0
      %v1339 = vadd.f32 0.0, %v1338
      %1340 = vdwg.mxu0
      %1341 = vmatpush.bf16.msra.mxu0 0
      %1342 = vmatpush.bf16.msra.mxu0 0
      %1343 = vmatpush.bf16.msra.mxu0 0
      %1344 = vmatpush.bf16.msra.mxu0 0
      %1345 = vmatpush.bf16.msra.mxu0 0
      %1346 = vmatpush.bf16.msra.mxu0 0
      %1347 = vmatpush.bf16.msra.mxu0 0
      %1348 = vmatpush.bf16.msra.mxu0 %v1251
      %1349 = vmatmul.bf16.gmra.mxu0 %v1260
      %v1350 = vpop.f32.mrf.mxu0
      %v1351 = vadd.f32 0.0, %v1350
      %v1352 = vpop.f32.mrf.mxu0
      %v1353 = vadd.f32 0.0, %v1352
      %1354 = vmatmul.bf16.gmra.mxu0 %v1263
      %v1355 = vpop.f32.mrf.mxu0
      %v1356 = vadd.f32 0.0, %v1355
      %v1357 = vpop.f32.mrf.mxu0
      %v1358 = vadd.f32 0.0, %v1357
      %1359 = vdwg.mxu0
      %1360 = vmatpush.bf16.msra.mxu0 0
      %1361 = vmatpush.bf16.msra.mxu0 0
      %1362 = vmatpush.bf16.msra.mxu0 0
      %1363 = vmatpush.bf16.msra.mxu0 0
      %1364 = vmatpush.bf16.msra.mxu0 0
      %1365 = vmatpush.bf16.msra.mxu0 0
      %1366 = vmatpush.bf16.msra.mxu0 0
      %1367 = vmatpush.bf16.msra.mxu0 %v1252
      %1368 = vmatmul.bf16.gmra.mxu0 %v1260
      %v1369 = vpop.f32.mrf.mxu0
      %v1370 = vadd.f32 0.0, %v1369
      %v1371 = vpop.f32.mrf.mxu0
      %v1372 = vadd.f32 0.0, %v1371
      %1373 = vmatmul.bf16.gmra.mxu0 %v1263
      %v1374 = vpop.f32.mrf.mxu0
      %v1375 = vadd.f32 0.0, %v1374
      %v1376 = vpop.f32.mrf.mxu0
      %v1377 = vadd.f32 0.0, %v1376
      %1378 = vdwg.mxu0
      %v1383 = vunpack.c.l.b16 %v206
      %v1384 = vunpack.c.l.b16 %v207
      %v1385 = vunpack.c.l.b16 %v208
      %v1386 = vunpack.c.l.b16 %v209
      %v1387 = vpack.c.b16 %v1384, %v1383
      %v1388 = vpack.c.b16 %v1386, %v1385
      %v1395 = vunpack.c.l.b16 %v252
      %v1396 = vunpack.c.h.b16 %v252
      %v1397 = vunpack.c.l.b16 %v253
      %v1398 = vunpack.c.h.b16 %v253
      %v1399 = vunpack.c.l.b16 %v254
      %v1400 = vunpack.c.h.b16 %v254
      %v1401 = vunpack.c.l.b16 %v255
      %v1402 = vunpack.c.h.b16 %v255
      %v1403 = vunpack.c.l.b16 %v256
      %v1404 = vunpack.c.h.b16 %v256
      %v1405 = vunpack.c.l.b16 %v257
      %v1406 = vunpack.c.h.b16 %v257
      %v1407 = vpack.c.b16 %v1401, %v1395
      %v1408 = vpack.c.b16 %v1402, %v1396
      %v1409 = vpack.c.b16 %v1403, %v1397
      %v1410 = vpack.c.b16 %v1404, %v1398
      %v1411 = vpack.c.b16 %v1405, %v1399
      %v1412 = vpack.c.b16 %v1406, %v1400
      %v1420 = vsel %vm298, %v1387, 0
      %v1423 = vsel %vm298, %v1388, 0
      %1425 = vmatpush.bf16.msra.mxu0 0
      %1426 = vmatpush.bf16.msra.mxu0 0
      %1427 = vmatpush.bf16.msra.mxu0 0
      %1428 = vmatpush.bf16.msra.mxu0 0
      %1429 = vmatpush.bf16.msra.mxu0 0
      %1430 = vmatpush.bf16.msra.mxu0 0
      %1431 = vmatpush.bf16.msra.mxu0 0
      %1432 = vmatpush.bf16.msra.mxu0 %v1407
      %1433 = vmatmul.bf16.gmra.mxu0 %v1420
      %v1434 = vpop.f32.mrf.mxu0
      %v1435 = vadd.f32 0.0, %v1434
      %v1436 = vpop.f32.mrf.mxu0
      %v1437 = vadd.f32 0.0, %v1436
      %1438 = vmatmul.bf16.gmra.mxu0 %v1423
      %v1439 = vpop.f32.mrf.mxu0
      %v1440 = vadd.f32 0.0, %v1439
      %v1441 = vpop.f32.mrf.mxu0
      %v1442 = vadd.f32 0.0, %v1441
      %1443 = vdwg.mxu0
      %1444 = vmatpush.bf16.msra.mxu0 0
      %1445 = vmatpush.bf16.msra.mxu0 0
      %1446 = vmatpush.bf16.msra.mxu0 0
      %1447 = vmatpush.bf16.msra.mxu0 0
      %1448 = vmatpush.bf16.msra.mxu0 0
      %1449 = vmatpush.bf16.msra.mxu0 0
      %1450 = vmatpush.bf16.msra.mxu0 0
      %1451 = vmatpush.bf16.msra.mxu0 %v1408
      %1452 = vmatmul.bf16.gmra.mxu0 %v1420
      %v1453 = vpop.f32.mrf.mxu0
      %v1454 = vadd.f32 0.0, %v1453
      %v1455 = vpop.f32.mrf.mxu0
      %v1456 = vadd.f32 0.0, %v1455
      %1457 = vmatmul.bf16.gmra.mxu0 %v1423
      %v1458 = vpop.f32.mrf.mxu0
      %v1459 = vadd.f32 0.0, %v1458
      %v1460 = vpop.f32.mrf.mxu0
      %v1461 = vadd.f32 0.0, %v1460
      %1462 = vdwg.mxu0
      %1463 = vmatpush.bf16.msra.mxu0 0
      %1464 = vmatpush.bf16.msra.mxu0 0
      %1465 = vmatpush.bf16.msra.mxu0 0
      %1466 = vmatpush.bf16.msra.mxu0 0
      %1467 = vmatpush.bf16.msra.mxu0 0
      %1468 = vmatpush.bf16.msra.mxu0 0
      %1469 = vmatpush.bf16.msra.mxu0 0
      %1470 = vmatpush.bf16.msra.mxu0 %v1409
      %1471 = vmatmul.bf16.gmra.mxu0 %v1420
      %v1472 = vpop.f32.mrf.mxu0
      %v1473 = vadd.f32 0.0, %v1472
      %v1474 = vpop.f32.mrf.mxu0
      %v1475 = vadd.f32 0.0, %v1474
      %1476 = vmatmul.bf16.gmra.mxu0 %v1423
      %v1477 = vpop.f32.mrf.mxu0
      %v1478 = vadd.f32 0.0, %v1477
      %v1479 = vpop.f32.mrf.mxu0
      %v1480 = vadd.f32 0.0, %v1479
      %1481 = vdwg.mxu0
      %1482 = vmatpush.bf16.msra.mxu0 0
      %1483 = vmatpush.bf16.msra.mxu0 0
      %1484 = vmatpush.bf16.msra.mxu0 0
      %1485 = vmatpush.bf16.msra.mxu0 0
      %1486 = vmatpush.bf16.msra.mxu0 0
      %1487 = vmatpush.bf16.msra.mxu0 0
      %1488 = vmatpush.bf16.msra.mxu0 0
      %1489 = vmatpush.bf16.msra.mxu0 %v1410
      %1490 = vmatmul.bf16.gmra.mxu0 %v1420
      %v1491 = vpop.f32.mrf.mxu0
      %v1492 = vadd.f32 0.0, %v1491
      %v1493 = vpop.f32.mrf.mxu0
      %v1494 = vadd.f32 0.0, %v1493
      %1495 = vmatmul.bf16.gmra.mxu0 %v1423
      %v1496 = vpop.f32.mrf.mxu0
      %v1497 = vadd.f32 0.0, %v1496
      %v1498 = vpop.f32.mrf.mxu0
      %v1499 = vadd.f32 0.0, %v1498
      %1500 = vdwg.mxu0
      %1501 = vmatpush.bf16.msra.mxu0 0
      %1502 = vmatpush.bf16.msra.mxu0 0
      %1503 = vmatpush.bf16.msra.mxu0 0
      %1504 = vmatpush.bf16.msra.mxu0 0
      %1505 = vmatpush.bf16.msra.mxu0 0
      %1506 = vmatpush.bf16.msra.mxu0 0
      %1507 = vmatpush.bf16.msra.mxu0 0
      %1508 = vmatpush.bf16.msra.mxu0 %v1411
      %1509 = vmatmul.bf16.gmra.mxu0 %v1420
      %v1510 = vpop.f32.mrf.mxu0
      %v1511 = vadd.f32 0.0, %v1510
      %v1512 = vpop.f32.mrf.mxu0
      %v1513 = vadd.f32 0.0, %v1512
      %1514 = vmatmul.bf16.gmra.mxu0 %v1423
      %v1515 = vpop.f32.mrf.mxu0
      %v1516 = vadd.f32 0.0, %v1515
      %v1517 = vpop.f32.mrf.mxu0
      %v1518 = vadd.f32 0.0, %v1517
      %1519 = vdwg.mxu0
      %1520 = vmatpush.bf16.msra.mxu0 0
      %1521 = vmatpush.bf16.msra.mxu0 0
      %1522 = vmatpush.bf16.msra.mxu0 0
      %1523 = vmatpush.bf16.msra.mxu0 0
      %1524 = vmatpush.bf16.msra.mxu0 0
      %1525 = vmatpush.bf16.msra.mxu0 0
      %1526 = vmatpush.bf16.msra.mxu0 0
      %1527 = vmatpush.bf16.msra.mxu0 %v1412
      %1528 = vmatmul.bf16.gmra.mxu0 %v1420
      %v1529 = vpop.f32.mrf.mxu0
      %v1530 = vadd.f32 0.0, %v1529
      %v1531 = vpop.f32.mrf.mxu0
      %v1532 = vadd.f32 0.0, %v1531
      %1533 = vmatmul.bf16.gmra.mxu0 %v1423
      %v1534 = vpop.f32.mrf.mxu0
      %v1535 = vadd.f32 0.0, %v1534
      %v1536 = vpop.f32.mrf.mxu0
      %v1537 = vadd.f32 0.0, %v1536
      %1538 = vdwg.mxu0
      %v1539 = vand.u32 2147483647, %v315
      %v1540 = vand.u32 2147483647, %v334
      %v1541 = vand.u32 2147483647, %v353
      %v1542 = vand.u32 2147483647, %v372
      %v1543 = vand.u32 2147483647, %v391
      %v1544 = vand.u32 2147483647, %v410
      %v1545 = vand.u32 2147483647, %v317
      %v1546 = vand.u32 2147483647, %v336
      %v1547 = vand.u32 2147483647, %v355
      %v1548 = vand.u32 2147483647, %v374
      %v1549 = vand.u32 2147483647, %v393
      %v1550 = vand.u32 2147483647, %v412
      %v1551 = vand.u32 2147483647, %v320
      %v1552 = vand.u32 2147483647, %v339
      %v1553 = vand.u32 2147483647, %v358
      %v1554 = vand.u32 2147483647, %v377
      %v1555 = vand.u32 2147483647, %v396
      %v1556 = vand.u32 2147483647, %v415
      %v1557 = vand.u32 2147483647, %v322
      %v1558 = vand.u32 2147483647, %v341
      %v1559 = vand.u32 2147483647, %v360
      %v1560 = vand.u32 2147483647, %v379
      %v1561 = vand.u32 2147483647, %v398
      %v1562 = vand.u32 2147483647, %v417
      %v1563 = vand.u32 2147483647, %v475
      %v1564 = vand.u32 2147483647, %v494
      %v1565 = vand.u32 2147483647, %v513
      %v1566 = vand.u32 2147483647, %v532
      %v1567 = vand.u32 2147483647, %v551
      %v1568 = vand.u32 2147483647, %v570
      %v1569 = vand.u32 2147483647, %v477
      %v1570 = vand.u32 2147483647, %v496
      %v1571 = vand.u32 2147483647, %v515
      %v1572 = vand.u32 2147483647, %v534
      %v1573 = vand.u32 2147483647, %v553
      %v1574 = vand.u32 2147483647, %v572
      %v1575 = vand.u32 2147483647, %v480
      %v1576 = vand.u32 2147483647, %v499
      %v1577 = vand.u32 2147483647, %v518
      %v1578 = vand.u32 2147483647, %v537
      %v1579 = vand.u32 2147483647, %v556
      %v1580 = vand.u32 2147483647, %v575
      %v1581 = vand.u32 2147483647, %v482
      %v1582 = vand.u32 2147483647, %v501
      %v1583 = vand.u32 2147483647, %v520
      %v1584 = vand.u32 2147483647, %v539
      %v1585 = vand.u32 2147483647, %v558
      %v1586 = vand.u32 2147483647, %v577
      %v1587 = vand.u32 2147483647, %v635
      %v1588 = vand.u32 2147483647, %v654
      %v1589 = vand.u32 2147483647, %v673
      %v1590 = vand.u32 2147483647, %v692
      %v1591 = vand.u32 2147483647, %v711
      %v1592 = vand.u32 2147483647, %v730
      %v1593 = vand.u32 2147483647, %v637
      %v1594 = vand.u32 2147483647, %v656
      %v1595 = vand.u32 2147483647, %v675
      %v1596 = vand.u32 2147483647, %v694
      %v1597 = vand.u32 2147483647, %v713
      %v1598 = vand.u32 2147483647, %v732
      %v1599 = vand.u32 2147483647, %v640
      %v1600 = vand.u32 2147483647, %v659
      %v1601 = vand.u32 2147483647, %v678
      %v1602 = vand.u32 2147483647, %v697
      %v1603 = vand.u32 2147483647, %v716
      %v1604 = vand.u32 2147483647, %v735
      %v1605 = vand.u32 2147483647, %v642
      %v1606 = vand.u32 2147483647, %v661
      %v1607 = vand.u32 2147483647, %v680
      %v1608 = vand.u32 2147483647, %v699
      %v1609 = vand.u32 2147483647, %v718
      %v1610 = vand.u32 2147483647, %v737
      %v1611 = vand.u32 2147483647, %v795
      %v1612 = vand.u32 2147483647, %v814
      %v1613 = vand.u32 2147483647, %v833
      %v1614 = vand.u32 2147483647, %v852
      %v1615 = vand.u32 2147483647, %v871
      %v1616 = vand.u32 2147483647, %v890
      %v1617 = vand.u32 2147483647, %v797
      %v1618 = vand.u32 2147483647, %v816
      %v1619 = vand.u32 2147483647, %v835
      %v1620 = vand.u32 2147483647, %v854
      %v1621 = vand.u32 2147483647, %v873
      %v1622 = vand.u32 2147483647, %v892
      %v1623 = vand.u32 2147483647, %v800
      %v1624 = vand.u32 2147483647, %v819
      %v1625 = vand.u32 2147483647, %v838
      %v1626 = vand.u32 2147483647, %v857
      %v1627 = vand.u32 2147483647, %v876
      %v1628 = vand.u32 2147483647, %v895
      %v1629 = vand.u32 2147483647, %v802
      %v1630 = vand.u32 2147483647, %v821
      %v1631 = vand.u32 2147483647, %v840
      %v1632 = vand.u32 2147483647, %v859
      %v1633 = vand.u32 2147483647, %v878
      %v1634 = vand.u32 2147483647, %v897
      %v1635 = vand.u32 2147483647, %v955
      %v1636 = vand.u32 2147483647, %v974
      %v1637 = vand.u32 2147483647, %v993
      %v1638 = vand.u32 2147483647, %v1012
      %v1639 = vand.u32 2147483647, %v1031
      %v1640 = vand.u32 2147483647, %v1050
      %v1641 = vand.u32 2147483647, %v957
      %v1642 = vand.u32 2147483647, %v976
      %v1643 = vand.u32 2147483647, %v995
      %v1644 = vand.u32 2147483647, %v1014
      %v1645 = vand.u32 2147483647, %v1033
      %v1646 = vand.u32 2147483647, %v1052
      %v1647 = vand.u32 2147483647, %v960
      %v1648 = vand.u32 2147483647, %v979
      %v1649 = vand.u32 2147483647, %v998
      %v1650 = vand.u32 2147483647, %v1017
      %v1651 = vand.u32 2147483647, %v1036
      %v1652 = vand.u32 2147483647, %v1055
      %v1653 = vand.u32 2147483647, %v962
      %v1654 = vand.u32 2147483647, %v981
      %v1655 = vand.u32 2147483647, %v1000
      %v1656 = vand.u32 2147483647, %v1019
      %v1657 = vand.u32 2147483647, %v1038
      %v1658 = vand.u32 2147483647, %v1057
      %v1659 = vand.u32 2147483647, %v1115
      %v1660 = vand.u32 2147483647, %v1134
      %v1661 = vand.u32 2147483647, %v1153
      %v1662 = vand.u32 2147483647, %v1172
      %v1663 = vand.u32 2147483647, %v1191
      %v1664 = vand.u32 2147483647, %v1210
      %v1665 = vand.u32 2147483647, %v1117
      %v1666 = vand.u32 2147483647, %v1136
      %v1667 = vand.u32 2147483647, %v1155
      %v1668 = vand.u32 2147483647, %v1174
      %v1669 = vand.u32 2147483647, %v1193
      %v1670 = vand.u32 2147483647, %v1212
      %v1671 = vand.u32 2147483647, %v1120
      %v1672 = vand.u32 2147483647, %v1139
      %v1673 = vand.u32 2147483647, %v1158
      %v1674 = vand.u32 2147483647, %v1177
      %v1675 = vand.u32 2147483647, %v1196
      %v1676 = vand.u32 2147483647, %v1215
      %v1677 = vand.u32 2147483647, %v1122
      %v1678 = vand.u32 2147483647, %v1141
      %v1679 = vand.u32 2147483647, %v1160
      %v1680 = vand.u32 2147483647, %v1179
      %v1681 = vand.u32 2147483647, %v1198
      %v1682 = vand.u32 2147483647, %v1217
      %v1683 = vand.u32 2147483647, %v1275
      %v1684 = vand.u32 2147483647, %v1294
      %v1685 = vand.u32 2147483647, %v1313
      %v1686 = vand.u32 2147483647, %v1332
      %v1687 = vand.u32 2147483647, %v1351
      %v1688 = vand.u32 2147483647, %v1370
      %v1689 = vand.u32 2147483647, %v1277
      %v1690 = vand.u32 2147483647, %v1296
      %v1691 = vand.u32 2147483647, %v1315
      %v1692 = vand.u32 2147483647, %v1334
      %v1693 = vand.u32 2147483647, %v1353
      %v1694 = vand.u32 2147483647, %v1372
      %v1695 = vand.u32 2147483647, %v1280
      %v1696 = vand.u32 2147483647, %v1299
      %v1697 = vand.u32 2147483647, %v1318
      %v1698 = vand.u32 2147483647, %v1337
      %v1699 = vand.u32 2147483647, %v1356
      %v1700 = vand.u32 2147483647, %v1375
      %v1701 = vand.u32 2147483647, %v1282
      %v1702 = vand.u32 2147483647, %v1301
      %v1703 = vand.u32 2147483647, %v1320
      %v1704 = vand.u32 2147483647, %v1339
      %v1705 = vand.u32 2147483647, %v1358
      %v1706 = vand.u32 2147483647, %v1377
      %v1707 = vand.u32 2147483647, %v1435
      %v1708 = vand.u32 2147483647, %v1454
      %v1709 = vand.u32 2147483647, %v1473
      %v1710 = vand.u32 2147483647, %v1492
      %v1711 = vand.u32 2147483647, %v1511
      %v1712 = vand.u32 2147483647, %v1530
      %v1713 = vand.u32 2147483647, %v1437
      %v1714 = vand.u32 2147483647, %v1456
      %v1715 = vand.u32 2147483647, %v1475
      %v1716 = vand.u32 2147483647, %v1494
      %v1717 = vand.u32 2147483647, %v1513
      %v1718 = vand.u32 2147483647, %v1532
      %v1719 = vand.u32 2147483647, %v1440
      %v1720 = vand.u32 2147483647, %v1459
      %v1721 = vand.u32 2147483647, %v1478
      %v1722 = vand.u32 2147483647, %v1497
      %v1723 = vand.u32 2147483647, %v1516
      %v1724 = vand.u32 2147483647, %v1535
      %v1725 = vand.u32 2147483647, %v1442
      %v1726 = vand.u32 2147483647, %v1461
      %v1727 = vand.u32 2147483647, %v1480
      %v1728 = vand.u32 2147483647, %v1499
      %v1729 = vand.u32 2147483647, %v1518
      %v1730 = vand.u32 2147483647, %v1537
      %v1731 = vmul.f32 %v1539, 0.70710677
      %v1732 = vmul.f32 %v1540, 0.70710677
      %v1733 = vmul.f32 %v1541, 0.70710677
      %v1734 = vmul.f32 %v1542, 0.70710677
      %v1735 = vmul.f32 %v1543, 0.70710677
      %v1736 = vmul.f32 %v1544, 0.70710677
      %v1737 = vmul.f32 %v1545, 0.70710677
      %v1738 = vmul.f32 %v1546, 0.70710677
      %v1739 = vmul.f32 %v1547, 0.70710677
      %v1740 = vmul.f32 %v1548, 0.70710677
      %v1741 = vmul.f32 %v1549, 0.70710677
      %v1742 = vmul.f32 %v1550, 0.70710677
      %v1743 = vmul.f32 %v1551, 0.70710677
      %v1744 = vmul.f32 %v1552, 0.70710677
      %v1745 = vmul.f32 %v1553, 0.70710677
      %v1746 = vmul.f32 %v1554, 0.70710677
      %v1747 = vmul.f32 %v1555, 0.70710677
      %v1748 = vmul.f32 %v1556, 0.70710677
      %v1749 = vmul.f32 %v1557, 0.70710677
      %v1750 = vmul.f32 %v1558, 0.70710677
      %v1751 = vmul.f32 %v1559, 0.70710677
      %v1752 = vmul.f32 %v1560, 0.70710677
      %v1753 = vmul.f32 %v1561, 0.70710677
      %v1754 = vmul.f32 %v1562, 0.70710677
      %v1755 = vmul.f32 %v1563, 0.70710677
      %v1756 = vmul.f32 %v1564, 0.70710677
      %v1757 = vmul.f32 %v1565, 0.70710677
      %v1758 = vmul.f32 %v1566, 0.70710677
      %v1759 = vmul.f32 %v1567, 0.70710677
      %v1760 = vmul.f32 %v1568, 0.70710677
      %v1761 = vmul.f32 %v1569, 0.70710677
      %v1762 = vmul.f32 %v1570, 0.70710677
      %v1763 = vmul.f32 %v1571, 0.70710677
      %v1764 = vmul.f32 %v1572, 0.70710677
      %v1765 = vmul.f32 %v1573, 0.70710677
      %v1766 = vmul.f32 %v1574, 0.70710677
      %v1767 = vmul.f32 %v1575, 0.70710677
      %v1768 = vmul.f32 %v1576, 0.70710677
      %v1769 = vmul.f32 %v1577, 0.70710677
      %v1770 = vmul.f32 %v1578, 0.70710677
      %v1771 = vmul.f32 %v1579, 0.70710677
      %v1772 = vmul.f32 %v1580, 0.70710677
      %v1773 = vmul.f32 %v1581, 0.70710677
      %v1774 = vmul.f32 %v1582, 0.70710677
      %v1775 = vmul.f32 %v1583, 0.70710677
      %v1776 = vmul.f32 %v1584, 0.70710677
      %v1777 = vmul.f32 %v1585, 0.70710677
      %v1778 = vmul.f32 %v1586, 0.70710677
      %v1779 = vmul.f32 %v1587, 0.70710677
      %v1780 = vmul.f32 %v1588, 0.70710677
      %v1781 = vmul.f32 %v1589, 0.70710677
      %v1782 = vmul.f32 %v1590, 0.70710677
      %v1783 = vmul.f32 %v1591, 0.70710677
      %v1784 = vmul.f32 %v1592, 0.70710677
      %v1785 = vmul.f32 %v1593, 0.70710677
      %v1786 = vmul.f32 %v1594, 0.70710677
      %v1787 = vmul.f32 %v1595, 0.70710677
      %v1788 = vmul.f32 %v1596, 0.70710677
      %v1789 = vmul.f32 %v1597, 0.70710677
      %v1790 = vmul.f32 %v1598, 0.70710677
      %v1791 = vmul.f32 %v1599, 0.70710677
      %v1792 = vmul.f32 %v1600, 0.70710677
      %v1793 = vmul.f32 %v1601, 0.70710677
      %v1794 = vmul.f32 %v1602, 0.70710677
      %v1795 = vmul.f32 %v1603, 0.70710677
      %v1796 = vmul.f32 %v1604, 0.70710677
      %v1797 = vmul.f32 %v1605, 0.70710677
      %v1798 = vmul.f32 %v1606, 0.70710677
      %v1799 = vmul.f32 %v1607, 0.70710677
      %v1800 = vmul.f32 %v1608, 0.70710677
      %v1801 = vmul.f32 %v1609, 0.70710677
      %v1802 = vmul.f32 %v1610, 0.70710677
      %v1803 = vmul.f32 %v1611, 0.70710677
      %v1804 = vmul.f32 %v1612, 0.70710677
      %v1805 = vmul.f32 %v1613, 0.70710677
      %v1806 = vmul.f32 %v1614, 0.70710677
      %v1807 = vmul.f32 %v1615, 0.70710677
      %v1808 = vmul.f32 %v1616, 0.70710677
      %v1809 = vmul.f32 %v1617, 0.70710677
      %v1810 = vmul.f32 %v1618, 0.70710677
      %v1811 = vmul.f32 %v1619, 0.70710677
      %v1812 = vmul.f32 %v1620, 0.70710677
      %v1813 = vmul.f32 %v1621, 0.70710677
      %v1814 = vmul.f32 %v1622, 0.70710677
      %v1815 = vmul.f32 %v1623, 0.70710677
      %v1816 = vmul.f32 %v1624, 0.70710677
      %v1817 = vmul.f32 %v1625, 0.70710677
      %v1818 = vmul.f32 %v1626, 0.70710677
      %v1819 = vmul.f32 %v1627, 0.70710677
      %v1820 = vmul.f32 %v1628, 0.70710677
      %v1821 = vmul.f32 %v1629, 0.70710677
      %v1822 = vmul.f32 %v1630, 0.70710677
      %v1823 = vmul.f32 %v1631, 0.70710677
      %v1824 = vmul.f32 %v1632, 0.70710677
      %v1825 = vmul.f32 %v1633, 0.70710677
      %v1826 = vmul.f32 %v1634, 0.70710677
      %v1827 = vmul.f32 %v1635, 0.70710677
      %v1828 = vmul.f32 %v1636, 0.70710677
      %v1829 = vmul.f32 %v1637, 0.70710677
      %v1830 = vmul.f32 %v1638, 0.70710677
      %v1831 = vmul.f32 %v1639, 0.70710677
      %v1832 = vmul.f32 %v1640, 0.70710677
      %v1833 = vmul.f32 %v1641, 0.70710677
      %v1834 = vmul.f32 %v1642, 0.70710677
      %v1835 = vmul.f32 %v1643, 0.70710677
      %v1836 = vmul.f32 %v1644, 0.70710677
      %v1837 = vmul.f32 %v1645, 0.70710677
      %v1838 = vmul.f32 %v1646, 0.70710677
      %v1839 = vmul.f32 %v1647, 0.70710677
      %v1840 = vmul.f32 %v1648, 0.70710677
      %v1841 = vmul.f32 %v1649, 0.70710677
      %v1842 = vmul.f32 %v1650, 0.70710677
      %v1843 = vmul.f32 %v1651, 0.70710677
      %v1844 = vmul.f32 %v1652, 0.70710677
      %v1845 = vmul.f32 %v1653, 0.70710677
      %v1846 = vmul.f32 %v1654, 0.70710677
      %v1847 = vmul.f32 %v1655, 0.70710677
      %v1848 = vmul.f32 %v1656, 0.70710677
      %v1849 = vmul.f32 %v1657, 0.70710677
      %v1850 = vmul.f32 %v1658, 0.70710677
      %v1851 = vmul.f32 %v1659, 0.70710677
      %v1852 = vmul.f32 %v1660, 0.70710677
      %v1853 = vmul.f32 %v1661, 0.70710677
      %v1854 = vmul.f32 %v1662, 0.70710677
      %v1855 = vmul.f32 %v1663, 0.70710677
      %v1856 = vmul.f32 %v1664, 0.70710677
      %v1857 = vmul.f32 %v1665, 0.70710677
      %v1858 = vmul.f32 %v1666, 0.70710677
      %v1859 = vmul.f32 %v1667, 0.70710677
      %v1860 = vmul.f32 %v1668, 0.70710677
      %v1861 = vmul.f32 %v1669, 0.70710677
      %v1862 = vmul.f32 %v1670, 0.70710677
      %v1863 = vmul.f32 %v1671, 0.70710677
      %v1864 = vmul.f32 %v1672, 0.70710677
      %v1865 = vmul.f32 %v1673, 0.70710677
      %v1866 = vmul.f32 %v1674, 0.70710677
      %v1867 = vmul.f32 %v1675, 0.70710677
      %v1868 = vmul.f32 %v1676, 0.70710677
      %v1869 = vmul.f32 %v1677, 0.70710677
      %v1870 = vmul.f32 %v1678, 0.70710677
      %v1871 = vmul.f32 %v1679, 0.70710677
      %v1872 = vmul.f32 %v1680, 0.70710677
      %v1873 = vmul.f32 %v1681, 0.70710677
      %v1874 = vmul.f32 %v1682, 0.70710677
      %v1875 = vmul.f32 %v1683, 0.70710677
      %v1876 = vmul.f32 %v1684, 0.70710677
      %v1877 = vmul.f32 %v1685, 0.70710677
      %v1878 = vmul.f32 %v1686, 0.70710677
      %v1879 = vmul.f32 %v1687, 0.70710677
      %v1880 = vmul.f32 %v1688, 0.70710677
      %v1881 = vmul.f32 %v1689, 0.70710677
      %v1882 = vmul.f32 %v1690, 0.70710677
      %v1883 = vmul.f32 %v1691, 0.70710677
      %v1884 = vmul.f32 %v1692, 0.70710677
      %v1885 = vmul.f32 %v1693, 0.70710677
      %v1886 = vmul.f32 %v1694, 0.70710677
      %v1887 = vmul.f32 %v1695, 0.70710677
      %v1888 = vmul.f32 %v1696, 0.70710677
      %v1889 = vmul.f32 %v1697, 0.70710677
      %v1890 = vmul.f32 %v1698, 0.70710677
      %v1891 = vmul.f32 %v1699, 0.70710677
      %v1892 = vmul.f32 %v1700, 0.70710677
      %v1893 = vmul.f32 %v1701, 0.70710677
      %v1894 = vmul.f32 %v1702, 0.70710677
      %v1895 = vmul.f32 %v1703, 0.70710677
      %v1896 = vmul.f32 %v1704, 0.70710677
      %v1897 = vmul.f32 %v1705, 0.70710677
      %v1898 = vmul.f32 %v1706, 0.70710677
      %v1899 = vmul.f32 %v1707, 0.70710677
      %v1900 = vmul.f32 %v1708, 0.70710677
      %v1901 = vmul.f32 %v1709, 0.70710677
      %v1902 = vmul.f32 %v1710, 0.70710677
      %v1903 = vmul.f32 %v1711, 0.70710677
      %v1904 = vmul.f32 %v1712, 0.70710677
      %v1905 = vmul.f32 %v1713, 0.70710677
      %v1906 = vmul.f32 %v1714, 0.70710677
      %v1907 = vmul.f32 %v1715, 0.70710677
      %v1908 = vmul.f32 %v1716, 0.70710677
      %v1909 = vmul.f32 %v1717, 0.70710677
      %v1910 = vmul.f32 %v1718, 0.70710677
      %v1911 = vmul.f32 %v1719, 0.70710677
      %v1912 = vmul.f32 %v1720, 0.70710677
      %v1913 = vmul.f32 %v1721, 0.70710677
      %v1914 = vmul.f32 %v1722, 0.70710677
      %v1915 = vmul.f32 %v1723, 0.70710677
      %v1916 = vmul.f32 %v1724, 0.70710677
      %v1917 = vmul.f32 %v1725, 0.70710677
      %v1918 = vmul.f32 %v1726, 0.70710677
      %v1919 = vmul.f32 %v1727, 0.70710677
      %v1920 = vmul.f32 %v1728, 0.70710677
      %v1921 = vmul.f32 %v1729, 0.70710677
      %v1922 = vmul.f32 %v1730, 0.70710677
      %v1923 = vmul.f32 %v1731, 0.47047
      %v1924 = vmul.f32 %v1732, 0.47047
      %v1925 = vmul.f32 %v1733, 0.47047
      %v1926 = vmul.f32 %v1734, 0.47047
      %v1927 = vmul.f32 %v1735, 0.47047
      %v1928 = vmul.f32 %v1736, 0.47047
      %v1929 = vmul.f32 %v1737, 0.47047
      %v1930 = vmul.f32 %v1738, 0.47047
      %v1931 = vmul.f32 %v1739, 0.47047
      %v1932 = vmul.f32 %v1740, 0.47047
      %v1933 = vmul.f32 %v1741, 0.47047
      %v1934 = vmul.f32 %v1742, 0.47047
      %v1935 = vmul.f32 %v1743, 0.47047
      %v1936 = vmul.f32 %v1744, 0.47047
      %v1937 = vmul.f32 %v1745, 0.47047
      %v1938 = vmul.f32 %v1746, 0.47047
      %v1939 = vmul.f32 %v1747, 0.47047
      %v1940 = vmul.f32 %v1748, 0.47047
      %v1941 = vmul.f32 %v1749, 0.47047
      %v1942 = vmul.f32 %v1750, 0.47047
      %v1943 = vmul.f32 %v1751, 0.47047
      %v1944 = vmul.f32 %v1752, 0.47047
      %v1945 = vmul.f32 %v1753, 0.47047
      %v1946 = vmul.f32 %v1754, 0.47047
      %v1947 = vmul.f32 %v1755, 0.47047
      %v1948 = vmul.f32 %v1756, 0.47047
      %v1949 = vmul.f32 %v1757, 0.47047
      %v1950 = vmul.f32 %v1758, 0.47047
      %v1951 = vmul.f32 %v1759, 0.47047
      %v1952 = vmul.f32 %v1760, 0.47047
      %v1953 = vmul.f32 %v1761, 0.47047
      %v1954 = vmul.f32 %v1762, 0.47047
      %v1955 = vmul.f32 %v1763, 0.47047
      %v1956 = vmul.f32 %v1764, 0.47047
      %v1957 = vmul.f32 %v1765, 0.47047
      %v1958 = vmul.f32 %v1766, 0.47047
      %v1959 = vmul.f32 %v1767, 0.47047
      %v1960 = vmul.f32 %v1768, 0.47047
      %v1961 = vmul.f32 %v1769, 0.47047
      %v1962 = vmul.f32 %v1770, 0.47047
      %v1963 = vmul.f32 %v1771, 0.47047
      %v1964 = vmul.f32 %v1772, 0.47047
      %v1965 = vmul.f32 %v1773, 0.47047
      %v1966 = vmul.f32 %v1774, 0.47047
      %v1967 = vmul.f32 %v1775, 0.47047
      %v1968 = vmul.f32 %v1776, 0.47047
      %v1969 = vmul.f32 %v1777, 0.47047
      %v1970 = vmul.f32 %v1778, 0.47047
      %v1971 = vmul.f32 %v1779, 0.47047
      %v1972 = vmul.f32 %v1780, 0.47047
      %v1973 = vmul.f32 %v1781, 0.47047
      %v1974 = vmul.f32 %v1782, 0.47047
      %v1975 = vmul.f32 %v1783, 0.47047
      %v1976 = vmul.f32 %v1784, 0.47047
      %v1977 = vmul.f32 %v1785, 0.47047
      %v1978 = vmul.f32 %v1786, 0.47047
      %v1979 = vmul.f32 %v1787, 0.47047
      %v1980 = vmul.f32 %v1788, 0.47047
      %v1981 = vmul.f32 %v1789, 0.47047
      %v1982 = vmul.f32 %v1790, 0.47047
      %v1983 = vmul.f32 %v1791, 0.47047
      %v1984 = vmul.f32 %v1792, 0.47047
      %v1985 = vmul.f32 %v1793, 0.47047
      %v1986 = vmul.f32 %v1794, 0.47047
      %v1987 = vmul.f32 %v1795, 0.47047
      %v1988 = vmul.f32 %v1796, 0.47047
      %v1989 = vmul.f32 %v1797, 0.47047
      %v1990 = vmul.f32 %v1798, 0.47047
      %v1991 = vmul.f32 %v1799, 0.47047
      %v1992 = vmul.f32 %v1800, 0.47047
      %v1993 = vmul.f32 %v1801, 0.47047
      %v1994 = vmul.f32 %v1802, 0.47047
      %v1995 = vmul.f32 %v1803, 0.47047
      %v1996 = vmul.f32 %v1804, 0.47047
      %v1997 = vmul.f32 %v1805, 0.47047
      %v1998 = vmul.f32 %v1806, 0.47047
      %v1999 = vmul.f32 %v1807, 0.47047
      %v2000 = vmul.f32 %v1808, 0.47047
      %v2001 = vmul.f32 %v1809, 0.47047
      %v2002 = vmul.f32 %v1810, 0.47047
      %v2003 = vmul.f32 %v1811, 0.47047
      %v2004 = vmul.f32 %v1812, 0.47047
      %v2005 = vmul.f32 %v1813, 0.47047
      %v2006 = vmul.f32 %v1814, 0.47047
      %v2007 = vmul.f32 %v1815, 0.47047
      %v2008 = vmul.f32 %v1816, 0.47047
      %v2009 = vmul.f32 %v1817, 0.47047
      %v2010 = vmul.f32 %v1818, 0.47047
      %v2011 = vmul.f32 %v1819, 0.47047
      %v2012 = vmul.f32 %v1820, 0.47047
      %v2013 = vmul.f32 %v1821, 0.47047
      %v2014 = vmul.f32 %v1822, 0.47047
      %v2015 = vmul.f32 %v1823, 0.47047
      %v2016 = vmul.f32 %v1824, 0.47047
      %v2017 = vmul.f32 %v1825, 0.47047
      %v2018 = vmul.f32 %v1826, 0.47047
      %v2019 = vmul.f32 %v1827, 0.47047
      %v2020 = vmul.f32 %v1828, 0.47047
      %v2021 = vmul.f32 %v1829, 0.47047
      %v2022 = vmul.f32 %v1830, 0.47047
      %v2023 = vmul.f32 %v1831, 0.47047
      %v2024 = vmul.f32 %v1832, 0.47047
      %v2025 = vmul.f32 %v1833, 0.47047
      %v2026 = vmul.f32 %v1834, 0.47047
      %v2027 = vmul.f32 %v1835, 0.47047
      %v2028 = vmul.f32 %v1836, 0.47047
      %v2029 = vmul.f32 %v1837, 0.47047
      %v2030 = vmul.f32 %v1838, 0.47047
      %v2031 = vmul.f32 %v1839, 0.47047
      %v2032 = vmul.f32 %v1840, 0.47047
      %v2033 = vmul.f32 %v1841, 0.47047
      %v2034 = vmul.f32 %v1842, 0.47047
      %v2035 = vmul.f32 %v1843, 0.47047
      %v2036 = vmul.f32 %v1844, 0.47047
      %v2037 = vmul.f32 %v1845, 0.47047
      %v2038 = vmul.f32 %v1846, 0.47047
      %v2039 = vmul.f32 %v1847, 0.47047
      %v2040 = vmul.f32 %v1848, 0.47047
      %v2041 = vmul.f32 %v1849, 0.47047
      %v2042 = vmul.f32 %v1850, 0.47047
      %v2043 = vmul.f32 %v1851, 0.47047
      %v2044 = vmul.f32 %v1852, 0.47047
      %v2045 = vmul.f32 %v1853, 0.47047
      %v2046 = vmul.f32 %v1854, 0.47047
      %v2047 = vmul.f32 %v1855, 0.47047
      %v2048 = vmul.f32 %v1856, 0.47047
      %v2049 = vmul.f32 %v1857, 0.47047
      %v2050 = vmul.f32 %v1858, 0.47047
      %v2051 = vmul.f32 %v1859, 0.47047
      %v2052 = vmul.f32 %v1860, 0.47047
      %v2053 = vmul.f32 %v1861, 0.47047
      %v2054 = vmul.f32 %v1862, 0.47047
      %v2055 = vmul.f32 %v1863, 0.47047
      %v2056 = vmul.f32 %v1864, 0.47047
      %v2057 = vmul.f32 %v1865, 0.47047
      %v2058 = vmul.f32 %v1866, 0.47047
      %v2059 = vmul.f32 %v1867, 0.47047
      %v2060 = vmul.f32 %v1868, 0.47047
      %v2061 = vmul.f32 %v1869, 0.47047
      %v2062 = vmul.f32 %v1870, 0.47047
      %v2063 = vmul.f32 %v1871, 0.47047
      %v2064 = vmul.f32 %v1872, 0.47047
      %v2065 = vmul.f32 %v1873, 0.47047
      %v2066 = vmul.f32 %v1874, 0.47047
      %v2067 = vmul.f32 %v1875, 0.47047
      %v2068 = vmul.f32 %v1876, 0.47047
      %v2069 = vmul.f32 %v1877, 0.47047
      %v2070 = vmul.f32 %v1878, 0.47047
      %v2071 = vmul.f32 %v1879, 0.47047
      %v2072 = vmul.f32 %v1880, 0.47047
      %v2073 = vmul.f32 %v1881, 0.47047
      %v2074 = vmul.f32 %v1882, 0.47047
      %v2075 = vmul.f32 %v1883, 0.47047
      %v2076 = vmul.f32 %v1884, 0.47047
      %v2077 = vmul.f32 %v1885, 0.47047
      %v2078 = vmul.f32 %v1886, 0.47047
      %v2079 = vmul.f32 %v1887, 0.47047
      %v2080 = vmul.f32 %v1888, 0.47047
      %v2081 = vmul.f32 %v1889, 0.47047
      %v2082 = vmul.f32 %v1890, 0.47047
      %v2083 = vmul.f32 %v1891, 0.47047
      %v2084 = vmul.f32 %v1892, 0.47047
      %v2085 = vmul.f32 %v1893, 0.47047
      %v2086 = vmul.f32 %v1894, 0.47047
      %v2087 = vmul.f32 %v1895, 0.47047
      %v2088 = vmul.f32 %v1896, 0.47047
      %v2089 = vmul.f32 %v1897, 0.47047
      %v2090 = vmul.f32 %v1898, 0.47047
      %v2091 = vmul.f32 %v1899, 0.47047
      %v2092 = vmul.f32 %v1900, 0.47047
      %v2093 = vmul.f32 %v1901, 0.47047
      %v2094 = vmul.f32 %v1902, 0.47047
      %v2095 = vmul.f32 %v1903, 0.47047
      %v2096 = vmul.f32 %v1904, 0.47047
      %v2097 = vmul.f32 %v1905, 0.47047
      %v2098 = vmul.f32 %v1906, 0.47047
      %v2099 = vmul.f32 %v1907, 0.47047
      %v2100 = vmul.f32 %v1908, 0.47047
      %v2101 = vmul.f32 %v1909, 0.47047
      %v2102 = vmul.f32 %v1910, 0.47047
      %v2103 = vmul.f32 %v1911, 0.47047
      %v2104 = vmul.f32 %v1912, 0.47047
      %v2105 = vmul.f32 %v1913, 0.47047
      %v2106 = vmul.f32 %v1914, 0.47047
      %v2107 = vmul.f32 %v1915, 0.47047
      %v2108 = vmul.f32 %v1916, 0.47047
      %v2109 = vmul.f32 %v1917, 0.47047
      %v2110 = vmul.f32 %v1918, 0.47047
      %v2111 = vmul.f32 %v1919, 0.47047
      %v2112 = vmul.f32 %v1920, 0.47047
      %v2113 = vmul.f32 %v1921, 0.47047
      %v2114 = vmul.f32 %v1922, 0.47047
      %v2115 = vadd.f32 %v1923, 1.0
      %v2116 = vadd.f32 %v1924, 1.0
      %v2117 = vadd.f32 %v1925, 1.0
      %v2118 = vadd.f32 %v1926, 1.0
      %v2119 = vadd.f32 %v1927, 1.0
      %v2120 = vadd.f32 %v1928, 1.0
      %v2121 = vadd.f32 %v1929, 1.0
      %v2122 = vadd.f32 %v1930, 1.0
      %v2123 = vadd.f32 %v1931, 1.0
      %v2124 = vadd.f32 %v1932, 1.0
      %v2125 = vadd.f32 %v1933, 1.0
      %v2126 = vadd.f32 %v1934, 1.0
      %v2127 = vadd.f32 %v1935, 1.0
      %v2128 = vadd.f32 %v1936, 1.0
      %v2129 = vadd.f32 %v1937, 1.0
      %v2130 = vadd.f32 %v1938, 1.0
      %v2131 = vadd.f32 %v1939, 1.0
      %v2132 = vadd.f32 %v1940, 1.0
      %v2133 = vadd.f32 %v1941, 1.0
      %v2134 = vadd.f32 %v1942, 1.0
      %v2135 = vadd.f32 %v1943, 1.0
      %v2136 = vadd.f32 %v1944, 1.0
      %v2137 = vadd.f32 %v1945, 1.0
      %v2138 = vadd.f32 %v1946, 1.0
      %v2139 = vadd.f32 %v1947, 1.0
      %v2140 = vadd.f32 %v1948, 1.0
      %v2141 = vadd.f32 %v1949, 1.0
      %v2142 = vadd.f32 %v1950, 1.0
      %v2143 = vadd.f32 %v1951, 1.0
      %v2144 = vadd.f32 %v1952, 1.0
      %v2145 = vadd.f32 %v1953, 1.0
      %v2146 = vadd.f32 %v1954, 1.0
      %v2147 = vadd.f32 %v1955, 1.0
      %v2148 = vadd.f32 %v1956, 1.0
      %v2149 = vadd.f32 %v1957, 1.0
      %v2150 = vadd.f32 %v1958, 1.0
      %v2151 = vadd.f32 %v1959, 1.0
      %v2152 = vadd.f32 %v1960, 1.0
      %v2153 = vadd.f32 %v1961, 1.0
      %v2154 = vadd.f32 %v1962, 1.0
      %v2155 = vadd.f32 %v1963, 1.0
      %v2156 = vadd.f32 %v1964, 1.0
      %v2157 = vadd.f32 %v1965, 1.0
      %v2158 = vadd.f32 %v1966, 1.0
      %v2159 = vadd.f32 %v1967, 1.0
      %v2160 = vadd.f32 %v1968, 1.0
      %v2161 = vadd.f32 %v1969, 1.0
      %v2162 = vadd.f32 %v1970, 1.0
      %v2163 = vadd.f32 %v1971, 1.0
      %v2164 = vadd.f32 %v1972, 1.0
      %v2165 = vadd.f32 %v1973, 1.0
      %v2166 = vadd.f32 %v1974, 1.0
      %v2167 = vadd.f32 %v1975, 1.0
      %v2168 = vadd.f32 %v1976, 1.0
      %v2169 = vadd.f32 %v1977, 1.0
      %v2170 = vadd.f32 %v1978, 1.0
      %v2171 = vadd.f32 %v1979, 1.0
      %v2172 = vadd.f32 %v1980, 1.0
      %v2173 = vadd.f32 %v1981, 1.0
      %v2174 = vadd.f32 %v1982, 1.0
      %v2175 = vadd.f32 %v1983, 1.0
      %v2176 = vadd.f32 %v1984, 1.0
      %v2177 = vadd.f32 %v1985, 1.0
      %v2178 = vadd.f32 %v1986, 1.0
      %v2179 = vadd.f32 %v1987, 1.0
      %v2180 = vadd.f32 %v1988, 1.0
      %v2181 = vadd.f32 %v1989, 1.0
      %v2182 = vadd.f32 %v1990, 1.0
      %v2183 = vadd.f32 %v1991, 1.0
      %v2184 = vadd.f32 %v1992, 1.0
      %v2185 = vadd.f32 %v1993, 1.0
      %v2186 = vadd.f32 %v1994, 1.0
      %v2187 = vadd.f32 %v1995, 1.0
      %v2188 = vadd.f32 %v1996, 1.0
      %v2189 = vadd.f32 %v1997, 1.0
      %v2190 = vadd.f32 %v1998, 1.0
      %v2191 = vadd.f32 %v1999, 1.0
      %v2192 = vadd.f32 %v2000, 1.0
      %v2193 = vadd.f32 %v2001, 1.0
      %v2194 = vadd.f32 %v2002, 1.0
      %v2195 = vadd.f32 %v2003, 1.0
      %v2196 = vadd.f32 %v2004, 1.0
      %v2197 = vadd.f32 %v2005, 1.0
      %v2198 = vadd.f32 %v2006, 1.0
      %v2199 = vadd.f32 %v2007, 1.0
      %v2200 = vadd.f32 %v2008, 1.0
      %v2201 = vadd.f32 %v2009, 1.0
      %v2202 = vadd.f32 %v2010, 1.0
      %v2203 = vadd.f32 %v2011, 1.0
      %v2204 = vadd.f32 %v2012, 1.0
      %v2205 = vadd.f32 %v2013, 1.0
      %v2206 = vadd.f32 %v2014, 1.0
      %v2207 = vadd.f32 %v2015, 1.0
      %v2208 = vadd.f32 %v2016, 1.0
      %v2209 = vadd.f32 %v2017, 1.0
      %v2210 = vadd.f32 %v2018, 1.0
      %v2211 = vadd.f32 %v2019, 1.0
      %v2212 = vadd.f32 %v2020, 1.0
      %v2213 = vadd.f32 %v2021, 1.0
      %v2214 = vadd.f32 %v2022, 1.0
      %v2215 = vadd.f32 %v2023, 1.0
      %v2216 = vadd.f32 %v2024, 1.0
      %v2217 = vadd.f32 %v2025, 1.0
      %v2218 = vadd.f32 %v2026, 1.0
      %v2219 = vadd.f32 %v2027, 1.0
      %v2220 = vadd.f32 %v2028, 1.0
      %v2221 = vadd.f32 %v2029, 1.0
      %v2222 = vadd.f32 %v2030, 1.0
      %v2223 = vadd.f32 %v2031, 1.0
      %v2224 = vadd.f32 %v2032, 1.0
      %v2225 = vadd.f32 %v2033, 1.0
      %v2226 = vadd.f32 %v2034, 1.0
      %v2227 = vadd.f32 %v2035, 1.0
      %v2228 = vadd.f32 %v2036, 1.0
      %v2229 = vadd.f32 %v2037, 1.0
      %v2230 = vadd.f32 %v2038, 1.0
      %v2231 = vadd.f32 %v2039, 1.0
      %v2232 = vadd.f32 %v2040, 1.0
      %v2233 = vadd.f32 %v2041, 1.0
      %v2234 = vadd.f32 %v2042, 1.0
      %v2235 = vadd.f32 %v2043, 1.0
      %v2236 = vadd.f32 %v2044, 1.0
      %v2237 = vadd.f32 %v2045, 1.0
      %v2238 = vadd.f32 %v2046, 1.0
      %v2239 = vadd.f32 %v2047, 1.0
      %v2240 = vadd.f32 %v2048, 1.0
      %v2241 = vadd.f32 %v2049, 1.0
      %v2242 = vadd.f32 %v2050, 1.0
      %v2243 = vadd.f32 %v2051, 1.0
      %v2244 = vadd.f32 %v2052, 1.0
      %v2245 = vadd.f32 %v2053, 1.0
      %v2246 = vadd.f32 %v2054, 1.0
      %v2247 = vadd.f32 %v2055, 1.0
      %v2248 = vadd.f32 %v2056, 1.0
      %v2249 = vadd.f32 %v2057, 1.0
      %v2250 = vadd.f32 %v2058, 1.0
      %v2251 = vadd.f32 %v2059, 1.0
      %v2252 = vadd.f32 %v2060, 1.0
      %v2253 = vadd.f32 %v2061, 1.0
      %v2254 = vadd.f32 %v2062, 1.0
      %v2255 = vadd.f32 %v2063, 1.0
      %v2256 = vadd.f32 %v2064, 1.0
      %v2257 = vadd.f32 %v2065, 1.0
      %v2258 = vadd.f32 %v2066, 1.0
      %v2259 = vadd.f32 %v2067, 1.0
      %v2260 = vadd.f32 %v2068, 1.0
      %v2261 = vadd.f32 %v2069, 1.0
      %v2262 = vadd.f32 %v2070, 1.0
      %v2263 = vadd.f32 %v2071, 1.0
      %v2264 = vadd.f32 %v2072, 1.0
      %v2265 = vadd.f32 %v2073, 1.0
      %v2266 = vadd.f32 %v2074, 1.0
      %v2267 = vadd.f32 %v2075, 1.0
      %v2268 = vadd.f32 %v2076, 1.0
      %v2269 = vadd.f32 %v2077, 1.0
      %v2270 = vadd.f32 %v2078, 1.0
      %v2271 = vadd.f32 %v2079, 1.0
      %v2272 = vadd.f32 %v2080, 1.0
      %v2273 = vadd.f32 %v2081, 1.0
      %v2274 = vadd.f32 %v2082, 1.0
      %v2275 = vadd.f32 %v2083, 1.0
      %v2276 = vadd.f32 %v2084, 1.0
      %v2277 = vadd.f32 %v2085, 1.0
      %v2278 = vadd.f32 %v2086, 1.0
      %v2279 = vadd.f32 %v2087, 1.0
      %v2280 = vadd.f32 %v2088, 1.0
      %v2281 = vadd.f32 %v2089, 1.0
      %v2282 = vadd.f32 %v2090, 1.0
      %v2283 = vadd.f32 %v2091, 1.0
      %v2284 = vadd.f32 %v2092, 1.0
      %v2285 = vadd.f32 %v2093, 1.0
      %v2286 = vadd.f32 %v2094, 1.0
      %v2287 = vadd.f32 %v2095, 1.0
      %v2288 = vadd.f32 %v2096, 1.0
      %v2289 = vadd.f32 %v2097, 1.0
      %v2290 = vadd.f32 %v2098, 1.0
      %v2291 = vadd.f32 %v2099, 1.0
      %v2292 = vadd.f32 %v2100, 1.0
      %v2293 = vadd.f32 %v2101, 1.0
      %v2294 = vadd.f32 %v2102, 1.0
      %v2295 = vadd.f32 %v2103, 1.0
      %v2296 = vadd.f32 %v2104, 1.0
      %v2297 = vadd.f32 %v2105, 1.0
      %v2298 = vadd.f32 %v2106, 1.0
      %v2299 = vadd.f32 %v2107, 1.0
      %v2300 = vadd.f32 %v2108, 1.0
      %v2301 = vadd.f32 %v2109, 1.0
      %v2302 = vadd.f32 %v2110, 1.0
      %v2303 = vadd.f32 %v2111, 1.0
      %v2304 = vadd.f32 %v2112, 1.0
      %v2305 = vadd.f32 %v2113, 1.0
      %v2306 = vadd.f32 %v2114, 1.0
      %v2307 = vrcp.pop %v2115
      %v2308 = vrcp.pop %v2116
      %v2309 = vrcp.pop %v2117
      %v2310 = vrcp.pop %v2118
      %v2311 = vrcp.pop %v2119
      %v2312 = vrcp.pop %v2120
      %v2313 = vrcp.pop %v2121
      %v2314 = vrcp.pop %v2122
      %v2315 = vrcp.pop %v2123
      %v2316 = vrcp.pop %v2124
      %v2317 = vrcp.pop %v2125
      %v2318 = vrcp.pop %v2126
      %v2319 = vrcp.pop %v2127
      %v2320 = vrcp.pop %v2128
      %v2321 = vrcp.pop %v2129
      %v2322 = vrcp.pop %v2130
      %v2323 = vrcp.pop %v2131
      %v2324 = vrcp.pop %v2132
      %v2325 = vrcp.pop %v2133
      %v2326 = vrcp.pop %v2134
      %v2327 = vrcp.pop %v2135
      %v2328 = vrcp.pop %v2136
      %v2329 = vrcp.pop %v2137
      %v2330 = vrcp.pop %v2138
      %v2331 = vrcp.pop %v2139
      %v2332 = vrcp.pop %v2140
      %v2333 = vrcp.pop %v2141
      %v2334 = vrcp.pop %v2142
      %v2335 = vrcp.pop %v2143
      %v2336 = vrcp.pop %v2144
      %v2337 = vrcp.pop %v2145
      %v2338 = vrcp.pop %v2146
      %v2339 = vrcp.pop %v2147
      %v2340 = vrcp.pop %v2148
      %v2341 = vrcp.pop %v2149
      %v2342 = vrcp.pop %v2150
      %v2343 = vrcp.pop %v2151
      %v2344 = vrcp.pop %v2152
      %v2345 = vrcp.pop %v2153
      %v2346 = vrcp.pop %v2154
      %v2347 = vrcp.pop %v2155
      %v2348 = vrcp.pop %v2156
      %v2349 = vrcp.pop %v2157
      %v2350 = vrcp.pop %v2158
      %v2351 = vrcp.pop %v2159
      %v2352 = vrcp.pop %v2160
      %v2353 = vrcp.pop %v2161
      %v2354 = vrcp.pop %v2162
      %v2355 = vrcp.pop %v2163
      %v2356 = vrcp.pop %v2164
      %v2357 = vrcp.pop %v2165
      %v2358 = vrcp.pop %v2166
      %v2359 = vrcp.pop %v2167
      %v2360 = vrcp.pop %v2168
      %v2361 = vrcp.pop %v2169
      %v2362 = vrcp.pop %v2170
      %v2363 = vrcp.pop %v2171
      %v2364 = vrcp.pop %v2172
      %v2365 = vrcp.pop %v2173
      %v2366 = vrcp.pop %v2174
      %v2367 = vrcp.pop %v2175
      %v2368 = vrcp.pop %v2176
      %v2369 = vrcp.pop %v2177
      %v2370 = vrcp.pop %v2178
      %v2371 = vrcp.pop %v2179
      %v2372 = vrcp.pop %v2180
      %v2373 = vrcp.pop %v2181
      %v2374 = vrcp.pop %v2182
      %v2375 = vrcp.pop %v2183
      %v2376 = vrcp.pop %v2184
      %v2377 = vrcp.pop %v2185
      %v2378 = vrcp.pop %v2186
      %v2379 = vrcp.pop %v2187
      %v2380 = vrcp.pop %v2188
      %v2381 = vrcp.pop %v2189
      %v2382 = vrcp.pop %v2190
      %v2383 = vrcp.pop %v2191
      %v2384 = vrcp.pop %v2192
      %v2385 = vrcp.pop %v2193
      %v2386 = vrcp.pop %v2194
      %v2387 = vrcp.pop %v2195
      %v2388 = vrcp.pop %v2196
      %v2389 = vrcp.pop %v2197
      %v2390 = vrcp.pop %v2198
      %v2391 = vrcp.pop %v2199
      %v2392 = vrcp.pop %v2200
      %v2393 = vrcp.pop %v2201
      %v2394 = vrcp.pop %v2202
      %v2395 = vrcp.pop %v2203
      %v2396 = vrcp.pop %v2204
      %v2397 = vrcp.pop %v2205
      %v2398 = vrcp.pop %v2206
      %v2399 = vrcp.pop %v2207
      %v2400 = vrcp.pop %v2208
      %v2401 = vrcp.pop %v2209
      %v2402 = vrcp.pop %v2210
      %v2403 = vrcp.pop %v2211
      %v2404 = vrcp.pop %v2212
      %v2405 = vrcp.pop %v2213
      %v2406 = vrcp.pop %v2214
      %v2407 = vrcp.pop %v2215
      %v2408 = vrcp.pop %v2216
      %v2409 = vrcp.pop %v2217
      %v2410 = vrcp.pop %v2218
      %v2411 = vrcp.pop %v2219
      %v2412 = vrcp.pop %v2220
      %v2413 = vrcp.pop %v2221
      %v2414 = vrcp.pop %v2222
      %v2415 = vrcp.pop %v2223
      %v2416 = vrcp.pop %v2224
      %v2417 = vrcp.pop %v2225
      %v2418 = vrcp.pop %v2226
      %v2419 = vrcp.pop %v2227
      %v2420 = vrcp.pop %v2228
      %v2421 = vrcp.pop %v2229
      %v2422 = vrcp.pop %v2230
      %v2423 = vrcp.pop %v2231
      %v2424 = vrcp.pop %v2232
      %v2425 = vrcp.pop %v2233
      %v2426 = vrcp.pop %v2234
      %v2427 = vrcp.pop %v2235
      %v2428 = vrcp.pop %v2236
      %v2429 = vrcp.pop %v2237
      %v2430 = vrcp.pop %v2238
      %v2431 = vrcp.pop %v2239
      %v2432 = vrcp.pop %v2240
      %v2433 = vrcp.pop %v2241
      %v2434 = vrcp.pop %v2242
      %v2435 = vrcp.pop %v2243
      %v2436 = vrcp.pop %v2244
      %v2437 = vrcp.pop %v2245
      %v2438 = vrcp.pop %v2246
      %v2439 = vrcp.pop %v2247
      %v2440 = vrcp.pop %v2248
      %v2441 = vrcp.pop %v2249
      %v2442 = vrcp.pop %v2250
      %v2443 = vrcp.pop %v2251
      %v2444 = vrcp.pop %v2252
      %v2445 = vrcp.pop %v2253
      %v2446 = vrcp.pop %v2254
      %v2447 = vrcp.pop %v2255
      %v2448 = vrcp.pop %v2256
      %v2449 = vrcp.pop %v2257
      %v2450 = vrcp.pop %v2258
      %v2451 = vrcp.pop %v2259
      %v2452 = vrcp.pop %v2260
      %v2453 = vrcp.pop %v2261
      %v2454 = vrcp.pop %v2262
      %v2455 = vrcp.pop %v2263
      %v2456 = vrcp.pop %v2264
      %v2457 = vrcp.pop %v2265
      %v2458 = vrcp.pop %v2266
      %v2459 = vrcp.pop %v2267
      %v2460 = vrcp.pop %v2268
      %v2461 = vrcp.pop %v2269
      %v2462 = vrcp.pop %v2270
      %v2463 = vrcp.pop %v2271
      %v2464 = vrcp.pop %v2272
      %v2465 = vrcp.pop %v2273
      %v2466 = vrcp.pop %v2274
      %v2467 = vrcp.pop %v2275
      %v2468 = vrcp.pop %v2276
      %v2469 = vrcp.pop %v2277
      %v2470 = vrcp.pop %v2278
      %v2471 = vrcp.pop %v2279
      %v2472 = vrcp.pop %v2280
      %v2473 = vrcp.pop %v2281
      %v2474 = vrcp.pop %v2282
      %v2475 = vrcp.pop %v2283
      %v2476 = vrcp.pop %v2284
      %v2477 = vrcp.pop %v2285
      %v2478 = vrcp.pop %v2286
      %v2479 = vrcp.pop %v2287
      %v2480 = vrcp.pop %v2288
      %v2481 = vrcp.pop %v2289
      %v2482 = vrcp.pop %v2290
      %v2483 = vrcp.pop %v2291
      %v2484 = vrcp.pop %v2292
      %v2485 = vrcp.pop %v2293
      %v2486 = vrcp.pop %v2294
      %v2487 = vrcp.pop %v2295
      %v2488 = vrcp.pop %v2296
      %v2489 = vrcp.pop %v2297
      %v2490 = vrcp.pop %v2298
      %v2491 = vrcp.pop %v2299
      %v2492 = vrcp.pop %v2300
      %v2493 = vrcp.pop %v2301
      %v2494 = vrcp.pop %v2302
      %v2495 = vrcp.pop %v2303
      %v2496 = vrcp.pop %v2304
      %v2497 = vrcp.pop %v2305
      %v2498 = vrcp.pop %v2306
      %v2499 = vmul.f32 %v2307, 0.7478556
      %v2500 = vmul.f32 %v2308, 0.7478556
      %v2501 = vmul.f32 %v2309, 0.7478556
      %v2502 = vmul.f32 %v2310, 0.7478556
      %v2503 = vmul.f32 %v2311, 0.7478556
      %v2504 = vmul.f32 %v2312, 0.7478556
      %v2505 = vmul.f32 %v2313, 0.7478556
      %v2506 = vmul.f32 %v2314, 0.7478556
      %v2507 = vmul.f32 %v2315, 0.7478556
      %v2508 = vmul.f32 %v2316, 0.7478556
      %v2509 = vmul.f32 %v2317, 0.7478556
      %v2510 = vmul.f32 %v2318, 0.7478556
      %v2511 = vmul.f32 %v2319, 0.7478556
      %v2512 = vmul.f32 %v2320, 0.7478556
      %v2513 = vmul.f32 %v2321, 0.7478556
      %v2514 = vmul.f32 %v2322, 0.7478556
      %v2515 = vmul.f32 %v2323, 0.7478556
      %v2516 = vmul.f32 %v2324, 0.7478556
      %v2517 = vmul.f32 %v2325, 0.7478556
      %v2518 = vmul.f32 %v2326, 0.7478556
      %v2519 = vmul.f32 %v2327, 0.7478556
      %v2520 = vmul.f32 %v2328, 0.7478556
      %v2521 = vmul.f32 %v2329, 0.7478556
      %v2522 = vmul.f32 %v2330, 0.7478556
      %v2523 = vmul.f32 %v2331, 0.7478556
      %v2524 = vmul.f32 %v2332, 0.7478556
      %v2525 = vmul.f32 %v2333, 0.7478556
      %v2526 = vmul.f32 %v2334, 0.7478556
      %v2527 = vmul.f32 %v2335, 0.7478556
      %v2528 = vmul.f32 %v2336, 0.7478556
      %v2529 = vmul.f32 %v2337, 0.7478556
      %v2530 = vmul.f32 %v2338, 0.7478556
      %v2531 = vmul.f32 %v2339, 0.7478556
      %v2532 = vmul.f32 %v2340, 0.7478556
      %v2533 = vmul.f32 %v2341, 0.7478556
      %v2534 = vmul.f32 %v2342, 0.7478556
      %v2535 = vmul.f32 %v2343, 0.7478556
      %v2536 = vmul.f32 %v2344, 0.7478556
      %v2537 = vmul.f32 %v2345, 0.7478556
      %v2538 = vmul.f32 %v2346, 0.7478556
      %v2539 = vmul.f32 %v2347, 0.7478556
      %v2540 = vmul.f32 %v2348, 0.7478556
      %v2541 = vmul.f32 %v2349, 0.7478556
      %v2542 = vmul.f32 %v2350, 0.7478556
      %v2543 = vmul.f32 %v2351, 0.7478556
      %v2544 = vmul.f32 %v2352, 0.7478556
      %v2545 = vmul.f32 %v2353, 0.7478556
      %v2546 = vmul.f32 %v2354, 0.7478556
      %v2547 = vmul.f32 %v2355, 0.7478556
      %v2548 = vmul.f32 %v2356, 0.7478556
      %v2549 = vmul.f32 %v2357, 0.7478556
      %v2550 = vmul.f32 %v2358, 0.7478556
      %v2551 = vmul.f32 %v2359, 0.7478556
      %v2552 = vmul.f32 %v2360, 0.7478556
      %v2553 = vmul.f32 %v2361, 0.7478556
      %v2554 = vmul.f32 %v2362, 0.7478556
      %v2555 = vmul.f32 %v2363, 0.7478556
      %v2556 = vmul.f32 %v2364, 0.7478556
      %v2557 = vmul.f32 %v2365, 0.7478556
      %v2558 = vmul.f32 %v2366, 0.7478556
      %v2559 = vmul.f32 %v2367, 0.7478556
      %v2560 = vmul.f32 %v2368, 0.7478556
      %v2561 = vmul.f32 %v2369, 0.7478556
      %v2562 = vmul.f32 %v2370, 0.7478556
      %v2563 = vmul.f32 %v2371, 0.7478556
      %v2564 = vmul.f32 %v2372, 0.7478556
      %v2565 = vmul.f32 %v2373, 0.7478556
      %v2566 = vmul.f32 %v2374, 0.7478556
      %v2567 = vmul.f32 %v2375, 0.7478556
      %v2568 = vmul.f32 %v2376, 0.7478556
      %v2569 = vmul.f32 %v2377, 0.7478556
      %v2570 = vmul.f32 %v2378, 0.7478556
      %v2571 = vmul.f32 %v2379, 0.7478556
      %v2572 = vmul.f32 %v2380, 0.7478556
      %v2573 = vmul.f32 %v2381, 0.7478556
      %v2574 = vmul.f32 %v2382, 0.7478556
      %v2575 = vmul.f32 %v2383, 0.7478556
      %v2576 = vmul.f32 %v2384, 0.7478556
      %v2577 = vmul.f32 %v2385, 0.7478556
      %v2578 = vmul.f32 %v2386, 0.7478556
      %v2579 = vmul.f32 %v2387, 0.7478556
      %v2580 = vmul.f32 %v2388, 0.7478556
      %v2581 = vmul.f32 %v2389, 0.7478556
      %v2582 = vmul.f32 %v2390, 0.7478556
      %v2583 = vmul.f32 %v2391, 0.7478556
      %v2584 = vmul.f32 %v2392, 0.7478556
      %v2585 = vmul.f32 %v2393, 0.7478556
      %v2586 = vmul.f32 %v2394, 0.7478556
      %v2587 = vmul.f32 %v2395, 0.7478556
      %v2588 = vmul.f32 %v2396, 0.7478556
      %v2589 = vmul.f32 %v2397, 0.7478556
      %v2590 = vmul.f32 %v2398, 0.7478556
      %v2591 = vmul.f32 %v2399, 0.7478556
      %v2592 = vmul.f32 %v2400, 0.7478556
      %v2593 = vmul.f32 %v2401, 0.7478556
      %v2594 = vmul.f32 %v2402, 0.7478556
      %v2595 = vmul.f32 %v2403, 0.7478556
      %v2596 = vmul.f32 %v2404, 0.7478556
      %v2597 = vmul.f32 %v2405, 0.7478556
      %v2598 = vmul.f32 %v2406, 0.7478556
      %v2599 = vmul.f32 %v2407, 0.7478556
      %v2600 = vmul.f32 %v2408, 0.7478556
      %v2601 = vmul.f32 %v2409, 0.7478556
      %v2602 = vmul.f32 %v2410, 0.7478556
      %v2603 = vmul.f32 %v2411, 0.7478556
      %v2604 = vmul.f32 %v2412, 0.7478556
      %v2605 = vmul.f32 %v2413, 0.7478556
      %v2606 = vmul.f32 %v2414, 0.7478556
      %v2607 = vmul.f32 %v2415, 0.7478556
      %v2608 = vmul.f32 %v2416, 0.7478556
      %v2609 = vmul.f32 %v2417, 0.7478556
      %v2610 = vmul.f32 %v2418, 0.7478556
      %v2611 = vmul.f32 %v2419, 0.7478556
      %v2612 = vmul.f32 %v2420, 0.7478556
      %v2613 = vmul.f32 %v2421, 0.7478556
      %v2614 = vmul.f32 %v2422, 0.7478556
      %v2615 = vmul.f32 %v2423, 0.7478556
      %v2616 = vmul.f32 %v2424, 0.7478556
      %v2617 = vmul.f32 %v2425, 0.7478556
      %v2618 = vmul.f32 %v2426, 0.7478556
      %v2619 = vmul.f32 %v2427, 0.7478556
      %v2620 = vmul.f32 %v2428, 0.7478556
      %v2621 = vmul.f32 %v2429, 0.7478556
      %v2622 = vmul.f32 %v2430, 0.7478556
      %v2623 = vmul.f32 %v2431, 0.7478556
      %v2624 = vmul.f32 %v2432, 0.7478556
      %v2625 = vmul.f32 %v2433, 0.7478556
      %v2626 = vmul.f32 %v2434, 0.7478556
      %v2627 = vmul.f32 %v2435, 0.7478556
      %v2628 = vmul.f32 %v2436, 0.7478556
      %v2629 = vmul.f32 %v2437, 0.7478556
      %v2630 = vmul.f32 %v2438, 0.7478556
      %v2631 = vmul.f32 %v2439, 0.7478556
      %v2632 = vmul.f32 %v2440, 0.7478556
      %v2633 = vmul.f32 %v2441, 0.7478556
      %v2634 = vmul.f32 %v2442, 0.7478556
      %v2635 = vmul.f32 %v2443, 0.7478556
      %v2636 = vmul.f32 %v2444, 0.7478556
      %v2637 = vmul.f32 %v2445, 0.7478556
      %v2638 = vmul.f32 %v2446, 0.7478556
      %v2639 = vmul.f32 %v2447, 0.7478556
      %v2640 = vmul.f32 %v2448, 0.7478556
      %v2641 = vmul.f32 %v2449, 0.7478556
      %v2642 = vmul.f32 %v2450, 0.7478556
      %v2643 = vmul.f32 %v2451, 0.7478556
      %v2644 = vmul.f32 %v2452, 0.7478556
      %v2645 = vmul.f32 %v2453, 0.7478556
      %v2646 = vmul.f32 %v2454, 0.7478556
      %v2647 = vmul.f32 %v2455, 0.7478556
      %v2648 = vmul.f32 %v2456, 0.7478556
      %v2649 = vmul.f32 %v2457, 0.7478556
      %v2650 = vmul.f32 %v2458, 0.7478556
      %v2651 = vmul.f32 %v2459, 0.7478556
      %v2652 = vmul.f32 %v2460, 0.7478556
      %v2653 = vmul.f32 %v2461, 0.7478556
      %v2654 = vmul.f32 %v2462, 0.7478556
      %v2655 = vmul.f32 %v2463, 0.7478556
      %v2656 = vmul.f32 %v2464, 0.7478556
      %v2657 = vmul.f32 %v2465, 0.7478556
      %v2658 = vmul.f32 %v2466, 0.7478556
      %v2659 = vmul.f32 %v2467, 0.7478556
      %v2660 = vmul.f32 %v2468, 0.7478556
      %v2661 = vmul.f32 %v2469, 0.7478556
      %v2662 = vmul.f32 %v2470, 0.7478556
      %v2663 = vmul.f32 %v2471, 0.7478556
      %v2664 = vmul.f32 %v2472, 0.7478556
      %v2665 = vmul.f32 %v2473, 0.7478556
      %v2666 = vmul.f32 %v2474, 0.7478556
      %v2667 = vmul.f32 %v2475, 0.7478556
      %v2668 = vmul.f32 %v2476, 0.7478556
      %v2669 = vmul.f32 %v2477, 0.7478556
      %v2670 = vmul.f32 %v2478, 0.7478556
      %v2671 = vmul.f32 %v2479, 0.7478556
      %v2672 = vmul.f32 %v2480, 0.7478556
      %v2673 = vmul.f32 %v2481, 0.7478556
      %v2674 = vmul.f32 %v2482, 0.7478556
      %v2675 = vmul.f32 %v2483, 0.7478556
      %v2676 = vmul.f32 %v2484, 0.7478556
      %v2677 = vmul.f32 %v2485, 0.7478556
      %v2678 = vmul.f32 %v2486, 0.7478556
      %v2679 = vmul.f32 %v2487, 0.7478556
      %v2680 = vmul.f32 %v2488, 0.7478556
      %v2681 = vmul.f32 %v2489, 0.7478556
      %v2682 = vmul.f32 %v2490, 0.7478556
      %v2683 = vmul.f32 %v2491, 0.7478556
      %v2684 = vmul.f32 %v2492, 0.7478556
      %v2685 = vmul.f32 %v2493, 0.7478556
      %v2686 = vmul.f32 %v2494, 0.7478556
      %v2687 = vmul.f32 %v2495, 0.7478556
      %v2688 = vmul.f32 %v2496, 0.7478556
      %v2689 = vmul.f32 %v2497, 0.7478556
      %v2690 = vmul.f32 %v2498, 0.7478556
      %v2691 = vadd.f32 %v2499, -0.0958798
      %v2692 = vadd.f32 %v2500, -0.0958798
      %v2693 = vadd.f32 %v2501, -0.0958798
      %v2694 = vadd.f32 %v2502, -0.0958798
      %v2695 = vadd.f32 %v2503, -0.0958798
      %v2696 = vadd.f32 %v2504, -0.0958798
      %v2697 = vadd.f32 %v2505, -0.0958798
      %v2698 = vadd.f32 %v2506, -0.0958798
      %v2699 = vadd.f32 %v2507, -0.0958798
      %v2700 = vadd.f32 %v2508, -0.0958798
      %v2701 = vadd.f32 %v2509, -0.0958798
      %v2702 = vadd.f32 %v2510, -0.0958798
      %v2703 = vadd.f32 %v2511, -0.0958798
      %v2704 = vadd.f32 %v2512, -0.0958798
      %v2705 = vadd.f32 %v2513, -0.0958798
      %v2706 = vadd.f32 %v2514, -0.0958798
      %v2707 = vadd.f32 %v2515, -0.0958798
      %v2708 = vadd.f32 %v2516, -0.0958798
      %v2709 = vadd.f32 %v2517, -0.0958798
      %v2710 = vadd.f32 %v2518, -0.0958798
      %v2711 = vadd.f32 %v2519, -0.0958798
      %v2712 = vadd.f32 %v2520, -0.0958798
      %v2713 = vadd.f32 %v2521, -0.0958798
      %v2714 = vadd.f32 %v2522, -0.0958798
      %v2715 = vadd.f32 %v2523, -0.0958798
      %v2716 = vadd.f32 %v2524, -0.0958798
      %v2717 = vadd.f32 %v2525, -0.0958798
      %v2718 = vadd.f32 %v2526, -0.0958798
      %v2719 = vadd.f32 %v2527, -0.0958798
      %v2720 = vadd.f32 %v2528, -0.0958798
      %v2721 = vadd.f32 %v2529, -0.0958798
      %v2722 = vadd.f32 %v2530, -0.0958798
      %v2723 = vadd.f32 %v2531, -0.0958798
      %v2724 = vadd.f32 %v2532, -0.0958798
      %v2725 = vadd.f32 %v2533, -0.0958798
      %v2726 = vadd.f32 %v2534, -0.0958798
      %v2727 = vadd.f32 %v2535, -0.0958798
      %v2728 = vadd.f32 %v2536, -0.0958798
      %v2729 = vadd.f32 %v2537, -0.0958798
      %v2730 = vadd.f32 %v2538, -0.0958798
      %v2731 = vadd.f32 %v2539, -0.0958798
      %v2732 = vadd.f32 %v2540, -0.0958798
      %v2733 = vadd.f32 %v2541, -0.0958798
      %v2734 = vadd.f32 %v2542, -0.0958798
      %v2735 = vadd.f32 %v2543, -0.0958798
      %v2736 = vadd.f32 %v2544, -0.0958798
      %v2737 = vadd.f32 %v2545, -0.0958798
      %v2738 = vadd.f32 %v2546, -0.0958798
      %v2739 = vadd.f32 %v2547, -0.0958798
      %v2740 = vadd.f32 %v2548, -0.0958798
      %v2741 = vadd.f32 %v2549, -0.0958798
      %v2742 = vadd.f32 %v2550, -0.0958798
      %v2743 = vadd.f32 %v2551, -0.0958798
      %v2744 = vadd.f32 %v2552, -0.0958798
      %v2745 = vadd.f32 %v2553, -0.0958798
      %v2746 = vadd.f32 %v2554, -0.0958798
      %v2747 = vadd.f32 %v2555, -0.0958798
      %v2748 = vadd.f32 %v2556, -0.0958798
      %v2749 = vadd.f32 %v2557, -0.0958798
      %v2750 = vadd.f32 %v2558, -0.0958798
      %v2751 = vadd.f32 %v2559, -0.0958798
      %v2752 = vadd.f32 %v2560, -0.0958798
      %v2753 = vadd.f32 %v2561, -0.0958798
      %v2754 = vadd.f32 %v2562, -0.0958798
      %v2755 = vadd.f32 %v2563, -0.0958798
      %v2756 = vadd.f32 %v2564, -0.0958798
      %v2757 = vadd.f32 %v2565, -0.0958798
      %v2758 = vadd.f32 %v2566, -0.0958798
      %v2759 = vadd.f32 %v2567, -0.0958798
      %v2760 = vadd.f32 %v2568, -0.0958798
      %v2761 = vadd.f32 %v2569, -0.0958798
      %v2762 = vadd.f32 %v2570, -0.0958798
      %v2763 = vadd.f32 %v2571, -0.0958798
      %v2764 = vadd.f32 %v2572, -0.0958798
      %v2765 = vadd.f32 %v2573, -0.0958798
      %v2766 = vadd.f32 %v2574, -0.0958798
      %v2767 = vadd.f32 %v2575, -0.0958798
      %v2768 = vadd.f32 %v2576, -0.0958798
      %v2769 = vadd.f32 %v2577, -0.0958798
      %v2770 = vadd.f32 %v2578, -0.0958798
      %v2771 = vadd.f32 %v2579, -0.0958798
      %v2772 = vadd.f32 %v2580, -0.0958798
      %v2773 = vadd.f32 %v2581, -0.0958798
      %v2774 = vadd.f32 %v2582, -0.0958798
      %v2775 = vadd.f32 %v2583, -0.0958798
      %v2776 = vadd.f32 %v2584, -0.0958798
      %v2777 = vadd.f32 %v2585, -0.0958798
      %v2778 = vadd.f32 %v2586, -0.0958798
      %v2779 = vadd.f32 %v2587, -0.0958798
      %v2780 = vadd.f32 %v2588, -0.0958798
      %v2781 = vadd.f32 %v2589, -0.0958798
      %v2782 = vadd.f32 %v2590, -0.0958798
      %v2783 = vadd.f32 %v2591, -0.0958798
      %v2784 = vadd.f32 %v2592, -0.0958798
      %v2785 = vadd.f32 %v2593, -0.0958798
      %v2786 = vadd.f32 %v2594, -0.0958798
      %v2787 = vadd.f32 %v2595, -0.0958798
      %v2788 = vadd.f32 %v2596, -0.0958798
      %v2789 = vadd.f32 %v2597, -0.0958798
      %v2790 = vadd.f32 %v2598, -0.0958798
      %v2791 = vadd.f32 %v2599, -0.0958798
      %v2792 = vadd.f32 %v2600, -0.0958798
      %v2793 = vadd.f32 %v2601, -0.0958798
      %v2794 = vadd.f32 %v2602, -0.0958798
      %v2795 = vadd.f32 %v2603, -0.0958798
      %v2796 = vadd.f32 %v2604, -0.0958798
      %v2797 = vadd.f32 %v2605, -0.0958798
      %v2798 = vadd.f32 %v2606, -0.0958798
      %v2799 = vadd.f32 %v2607, -0.0958798
      %v2800 = vadd.f32 %v2608, -0.0958798
      %v2801 = vadd.f32 %v2609, -0.0958798
      %v2802 = vadd.f32 %v2610, -0.0958798
      %v2803 = vadd.f32 %v2611, -0.0958798
      %v2804 = vadd.f32 %v2612, -0.0958798
      %v2805 = vadd.f32 %v2613, -0.0958798
      %v2806 = vadd.f32 %v2614, -0.0958798
      %v2807 = vadd.f32 %v2615, -0.0958798
      %v2808 = vadd.f32 %v2616, -0.0958798
      %v2809 = vadd.f32 %v2617, -0.0958798
      %v2810 = vadd.f32 %v2618, -0.0958798
      %v2811 = vadd.f32 %v2619, -0.0958798
      %v2812 = vadd.f32 %v2620, -0.0958798
      %v2813 = vadd.f32 %v2621, -0.0958798
      %v2814 = vadd.f32 %v2622, -0.0958798
      %v2815 = vadd.f32 %v2623, -0.0958798
      %v2816 = vadd.f32 %v2624, -0.0958798
      %v2817 = vadd.f32 %v2625, -0.0958798
      %v2818 = vadd.f32 %v2626, -0.0958798
      %v2819 = vadd.f32 %v2627, -0.0958798
      %v2820 = vadd.f32 %v2628, -0.0958798
      %v2821 = vadd.f32 %v2629, -0.0958798
      %v2822 = vadd.f32 %v2630, -0.0958798
      %v2823 = vadd.f32 %v2631, -0.0958798
      %v2824 = vadd.f32 %v2632, -0.0958798
      %v2825 = vadd.f32 %v2633, -0.0958798
      %v2826 = vadd.f32 %v2634, -0.0958798
      %v2827 = vadd.f32 %v2635, -0.0958798
      %v2828 = vadd.f32 %v2636, -0.0958798
      %v2829 = vadd.f32 %v2637, -0.0958798
      %v2830 = vadd.f32 %v2638, -0.0958798
      %v2831 = vadd.f32 %v2639, -0.0958798
      %v2832 = vadd.f32 %v2640, -0.0958798
      %v2833 = vadd.f32 %v2641, -0.0958798
      %v2834 = vadd.f32 %v2642, -0.0958798
      %v2835 = vadd.f32 %v2643, -0.0958798
      %v2836 = vadd.f32 %v2644, -0.0958798
      %v2837 = vadd.f32 %v2645, -0.0958798
      %v2838 = vadd.f32 %v2646, -0.0958798
      %v2839 = vadd.f32 %v2647, -0.0958798
      %v2840 = vadd.f32 %v2648, -0.0958798
      %v2841 = vadd.f32 %v2649, -0.0958798
      %v2842 = vadd.f32 %v2650, -0.0958798
      %v2843 = vadd.f32 %v2651, -0.0958798
      %v2844 = vadd.f32 %v2652, -0.0958798
      %v2845 = vadd.f32 %v2653, -0.0958798
      %v2846 = vadd.f32 %v2654, -0.0958798
      %v2847 = vadd.f32 %v2655, -0.0958798
      %v2848 = vadd.f32 %v2656, -0.0958798
      %v2849 = vadd.f32 %v2657, -0.0958798
      %v2850 = vadd.f32 %v2658, -0.0958798
      %v2851 = vadd.f32 %v2659, -0.0958798
      %v2852 = vadd.f32 %v2660, -0.0958798
      %v2853 = vadd.f32 %v2661, -0.0958798
      %v2854 = vadd.f32 %v2662, -0.0958798
      %v2855 = vadd.f32 %v2663, -0.0958798
      %v2856 = vadd.f32 %v2664, -0.0958798
      %v2857 = vadd.f32 %v2665, -0.0958798
      %v2858 = vadd.f32 %v2666, -0.0958798
      %v2859 = vadd.f32 %v2667, -0.0958798
      %v2860 = vadd.f32 %v2668, -0.0958798
      %v2861 = vadd.f32 %v2669, -0.0958798
      %v2862 = vadd.f32 %v2670, -0.0958798
      %v2863 = vadd.f32 %v2671, -0.0958798
      %v2864 = vadd.f32 %v2672, -0.0958798
      %v2865 = vadd.f32 %v2673, -0.0958798
      %v2866 = vadd.f32 %v2674, -0.0958798
      %v2867 = vadd.f32 %v2675, -0.0958798
      %v2868 = vadd.f32 %v2676, -0.0958798
      %v2869 = vadd.f32 %v2677, -0.0958798
      %v2870 = vadd.f32 %v2678, -0.0958798
      %v2871 = vadd.f32 %v2679, -0.0958798
      %v2872 = vadd.f32 %v2680, -0.0958798
      %v2873 = vadd.f32 %v2681, -0.0958798
      %v2874 = vadd.f32 %v2682, -0.0958798
      %v2875 = vadd.f32 %v2683, -0.0958798
      %v2876 = vadd.f32 %v2684, -0.0958798
      %v2877 = vadd.f32 %v2685, -0.0958798
      %v2878 = vadd.f32 %v2686, -0.0958798
      %v2879 = vadd.f32 %v2687, -0.0958798
      %v2880 = vadd.f32 %v2688, -0.0958798
      %v2881 = vadd.f32 %v2689, -0.0958798
      %v2882 = vadd.f32 %v2690, -0.0958798
      %v2883 = vmul.f32 %v2691, %v2307
      %v2884 = vmul.f32 %v2692, %v2308
      %v2885 = vmul.f32 %v2693, %v2309
      %v2886 = vmul.f32 %v2694, %v2310
      %v2887 = vmul.f32 %v2695, %v2311
      %v2888 = vmul.f32 %v2696, %v2312
      %v2889 = vmul.f32 %v2697, %v2313
      %v2890 = vmul.f32 %v2698, %v2314
      %v2891 = vmul.f32 %v2699, %v2315
      %v2892 = vmul.f32 %v2700, %v2316
      %v2893 = vmul.f32 %v2701, %v2317
      %v2894 = vmul.f32 %v2702, %v2318
      %v2895 = vmul.f32 %v2703, %v2319
      %v2896 = vmul.f32 %v2704, %v2320
      %v2897 = vmul.f32 %v2705, %v2321
      %v2898 = vmul.f32 %v2706, %v2322
      %v2899 = vmul.f32 %v2707, %v2323
      %v2900 = vmul.f32 %v2708, %v2324
      %v2901 = vmul.f32 %v2709, %v2325
      %v2902 = vmul.f32 %v2710, %v2326
      %v2903 = vmul.f32 %v2711, %v2327
      %v2904 = vmul.f32 %v2712, %v2328
      %v2905 = vmul.f32 %v2713, %v2329
      %v2906 = vmul.f32 %v2714, %v2330
      %v2907 = vmul.f32 %v2715, %v2331
      %v2908 = vmul.f32 %v2716, %v2332
      %v2909 = vmul.f32 %v2717, %v2333
      %v2910 = vmul.f32 %v2718, %v2334
      %v2911 = vmul.f32 %v2719, %v2335
      %v2912 = vmul.f32 %v2720, %v2336
      %v2913 = vmul.f32 %v2721, %v2337
      %v2914 = vmul.f32 %v2722, %v2338
      %v2915 = vmul.f32 %v2723, %v2339
      %v2916 = vmul.f32 %v2724, %v2340
      %v2917 = vmul.f32 %v2725, %v2341
      %v2918 = vmul.f32 %v2726, %v2342
      %v2919 = vmul.f32 %v2727, %v2343
      %v2920 = vmul.f32 %v2728, %v2344
      %v2921 = vmul.f32 %v2729, %v2345
      %v2922 = vmul.f32 %v2730, %v2346
      %v2923 = vmul.f32 %v2731, %v2347
      %v2924 = vmul.f32 %v2732, %v2348
      %v2925 = vmul.f32 %v2733, %v2349
      %v2926 = vmul.f32 %v2734, %v2350
      %v2927 = vmul.f32 %v2735, %v2351
      %v2928 = vmul.f32 %v2736, %v2352
      %v2929 = vmul.f32 %v2737, %v2353
      %v2930 = vmul.f32 %v2738, %v2354
      %v2931 = vmul.f32 %v2739, %v2355
      %v2932 = vmul.f32 %v2740, %v2356
      %v2933 = vmul.f32 %v2741, %v2357
      %v2934 = vmul.f32 %v2742, %v2358
      %v2935 = vmul.f32 %v2743, %v2359
      %v2936 = vmul.f32 %v2744, %v2360
      %v2937 = vmul.f32 %v2745, %v2361
      %v2938 = vmul.f32 %v2746, %v2362
      %v2939 = vmul.f32 %v2747, %v2363
      %v2940 = vmul.f32 %v2748, %v2364
      %v2941 = vmul.f32 %v2749, %v2365
      %v2942 = vmul.f32 %v2750, %v2366
      %v2943 = vmul.f32 %v2751, %v2367
      %v2944 = vmul.f32 %v2752, %v2368
      %v2945 = vmul.f32 %v2753, %v2369
      %v2946 = vmul.f32 %v2754, %v2370
      %v2947 = vmul.f32 %v2755, %v2371
      %v2948 = vmul.f32 %v2756, %v2372
      %v2949 = vmul.f32 %v2757, %v2373
      %v2950 = vmul.f32 %v2758, %v2374
      %v2951 = vmul.f32 %v2759, %v2375
      %v2952 = vmul.f32 %v2760, %v2376
      %v2953 = vmul.f32 %v2761, %v2377
      %v2954 = vmul.f32 %v2762, %v2378
      %v2955 = vmul.f32 %v2763, %v2379
      %v2956 = vmul.f32 %v2764, %v2380
      %v2957 = vmul.f32 %v2765, %v2381
      %v2958 = vmul.f32 %v2766, %v2382
      %v2959 = vmul.f32 %v2767, %v2383
      %v2960 = vmul.f32 %v2768, %v2384
      %v2961 = vmul.f32 %v2769, %v2385
      %v2962 = vmul.f32 %v2770, %v2386
      %v2963 = vmul.f32 %v2771, %v2387
      %v2964 = vmul.f32 %v2772, %v2388
      %v2965 = vmul.f32 %v2773, %v2389
      %v2966 = vmul.f32 %v2774, %v2390
      %v2967 = vmul.f32 %v2775, %v2391
      %v2968 = vmul.f32 %v2776, %v2392
      %v2969 = vmul.f32 %v2777, %v2393
      %v2970 = vmul.f32 %v2778, %v2394
      %v2971 = vmul.f32 %v2779, %v2395
      %v2972 = vmul.f32 %v2780, %v2396
      %v2973 = vmul.f32 %v2781, %v2397
      %v2974 = vmul.f32 %v2782, %v2398
      %v2975 = vmul.f32 %v2783, %v2399
      %v2976 = vmul.f32 %v2784, %v2400
      %v2977 = vmul.f32 %v2785, %v2401
      %v2978 = vmul.f32 %v2786, %v2402
      %v2979 = vmul.f32 %v2787, %v2403
      %v2980 = vmul.f32 %v2788, %v2404
      %v2981 = vmul.f32 %v2789, %v2405
      %v2982 = vmul.f32 %v2790, %v2406
      %v2983 = vmul.f32 %v2791, %v2407
      %v2984 = vmul.f32 %v2792, %v2408
      %v2985 = vmul.f32 %v2793, %v2409
      %v2986 = vmul.f32 %v2794, %v2410
      %v2987 = vmul.f32 %v2795, %v2411
      %v2988 = vmul.f32 %v2796, %v2412
      %v2989 = vmul.f32 %v2797, %v2413
      %v2990 = vmul.f32 %v2798, %v2414
      %v2991 = vmul.f32 %v2799, %v2415
      %v2992 = vmul.f32 %v2800, %v2416
      %v2993 = vmul.f32 %v2801, %v2417
      %v2994 = vmul.f32 %v2802, %v2418
      %v2995 = vmul.f32 %v2803, %v2419
      %v2996 = vmul.f32 %v2804, %v2420
      %v2997 = vmul.f32 %v2805, %v2421
      %v2998 = vmul.f32 %v2806, %v2422
      %v2999 = vmul.f32 %v2807, %v2423
      %v3000 = vmul.f32 %v2808, %v2424
      %v3001 = vmul.f32 %v2809, %v2425
      %v3002 = vmul.f32 %v2810, %v2426
      %v3003 = vmul.f32 %v2811, %v2427
      %v3004 = vmul.f32 %v2812, %v2428
      %v3005 = vmul.f32 %v2813, %v2429
      %v3006 = vmul.f32 %v2814, %v2430
      %v3007 = vmul.f32 %v2815, %v2431
      %v3008 = vmul.f32 %v2816, %v2432
      %v3009 = vmul.f32 %v2817, %v2433
      %v3010 = vmul.f32 %v2818, %v2434
      %v3011 = vmul.f32 %v2819, %v2435
      %v3012 = vmul.f32 %v2820, %v2436
      %v3013 = vmul.f32 %v2821, %v2437
      %v3014 = vmul.f32 %v2822, %v2438
      %v3015 = vmul.f32 %v2823, %v2439
      %v3016 = vmul.f32 %v2824, %v2440
      %v3017 = vmul.f32 %v2825, %v2441
      %v3018 = vmul.f32 %v2826, %v2442
      %v3019 = vmul.f32 %v2827, %v2443
      %v3020 = vmul.f32 %v2828, %v2444
      %v3021 = vmul.f32 %v2829, %v2445
      %v3022 = vmul.f32 %v2830, %v2446
      %v3023 = vmul.f32 %v2831, %v2447
      %v3024 = vmul.f32 %v2832, %v2448
      %v3025 = vmul.f32 %v2833, %v2449
      %v3026 = vmul.f32 %v2834, %v2450
      %v3027 = vmul.f32 %v2835, %v2451
      %v3028 = vmul.f32 %v2836, %v2452
      %v3029 = vmul.f32 %v2837, %v2453
      %v3030 = vmul.f32 %v2838, %v2454
      %v3031 = vmul.f32 %v2839, %v2455
      %v3032 = vmul.f32 %v2840, %v2456
      %v3033 = vmul.f32 %v2841, %v2457
      %v3034 = vmul.f32 %v2842, %v2458
      %v3035 = vmul.f32 %v2843, %v2459
      %v3036 = vmul.f32 %v2844, %v2460
      %v3037 = vmul.f32 %v2845, %v2461
      %v3038 = vmul.f32 %v2846, %v2462
      %v3039 = vmul.f32 %v2847, %v2463
      %v3040 = vmul.f32 %v2848, %v2464
      %v3041 = vmul.f32 %v2849, %v2465
      %v3042 = vmul.f32 %v2850, %v2466
      %v3043 = vmul.f32 %v2851, %v2467
      %v3044 = vmul.f32 %v2852, %v2468
      %v3045 = vmul.f32 %v2853, %v2469
      %v3046 = vmul.f32 %v2854, %v2470
      %v3047 = vmul.f32 %v2855, %v2471
      %v3048 = vmul.f32 %v2856, %v2472
      %v3049 = vmul.f32 %v2857, %v2473
      %v3050 = vmul.f32 %v2858, %v2474
      %v3051 = vmul.f32 %v2859, %v2475
      %v3052 = vmul.f32 %v2860, %v2476
      %v3053 = vmul.f32 %v2861, %v2477
      %v3054 = vmul.f32 %v2862, %v2478
      %v3055 = vmul.f32 %v2863, %v2479
      %v3056 = vmul.f32 %v2864, %v2480
      %v3057 = vmul.f32 %v2865, %v2481
      %v3058 = vmul.f32 %v2866, %v2482
      %v3059 = vmul.f32 %v2867, %v2483
      %v3060 = vmul.f32 %v2868, %v2484
      %v3061 = vmul.f32 %v2869, %v2485
      %v3062 = vmul.f32 %v2870, %v2486
      %v3063 = vmul.f32 %v2871, %v2487
      %v3064 = vmul.f32 %v2872, %v2488
      %v3065 = vmul.f32 %v2873, %v2489
      %v3066 = vmul.f32 %v2874, %v2490
      %v3067 = vmul.f32 %v2875, %v2491
      %v3068 = vmul.f32 %v2876, %v2492
      %v3069 = vmul.f32 %v2877, %v2493
      %v3070 = vmul.f32 %v2878, %v2494
      %v3071 = vmul.f32 %v2879, %v2495
      %v3072 = vmul.f32 %v2880, %v2496
      %v3073 = vmul.f32 %v2881, %v2497
      %v3074 = vmul.f32 %v2882, %v2498
      %v3075 = vadd.f32 %v2883, 0.3480242
      %v3076 = vadd.f32 %v2884, 0.3480242
      %v3077 = vadd.f32 %v2885, 0.3480242
      %v3078 = vadd.f32 %v2886, 0.3480242
      %v3079 = vadd.f32 %v2887, 0.3480242
      %v3080 = vadd.f32 %v2888, 0.3480242
      %v3081 = vadd.f32 %v2889, 0.3480242
      %v3082 = vadd.f32 %v2890, 0.3480242
      %v3083 = vadd.f32 %v2891, 0.3480242
      %v3084 = vadd.f32 %v2892, 0.3480242
      %v3085 = vadd.f32 %v2893, 0.3480242
      %v3086 = vadd.f32 %v2894, 0.3480242
      %v3087 = vadd.f32 %v2895, 0.3480242
      %v3088 = vadd.f32 %v2896, 0.3480242
      %v3089 = vadd.f32 %v2897, 0.3480242
      %v3090 = vadd.f32 %v2898, 0.3480242
      %v3091 = vadd.f32 %v2899, 0.3480242
      %v3092 = vadd.f32 %v2900, 0.3480242
      %v3093 = vadd.f32 %v2901, 0.3480242
      %v3094 = vadd.f32 %v2902, 0.3480242
      %v3095 = vadd.f32 %v2903, 0.3480242
      %v3096 = vadd.f32 %v2904, 0.3480242
      %v3097 = vadd.f32 %v2905, 0.3480242
      %v3098 = vadd.f32 %v2906, 0.3480242
      %v3099 = vadd.f32 %v2907, 0.3480242
      %v3100 = vadd.f32 %v2908, 0.3480242
      %v3101 = vadd.f32 %v2909, 0.3480242
      %v3102 = vadd.f32 %v2910, 0.3480242
      %v3103 = vadd.f32 %v2911, 0.3480242
      %v3104 = vadd.f32 %v2912, 0.3480242
      %v3105 = vadd.f32 %v2913, 0.3480242
      %v3106 = vadd.f32 %v2914, 0.3480242
      %v3107 = vadd.f32 %v2915, 0.3480242
      %v3108 = vadd.f32 %v2916, 0.3480242
      %v3109 = vadd.f32 %v2917, 0.3480242
      %v3110 = vadd.f32 %v2918, 0.3480242
      %v3111 = vadd.f32 %v2919, 0.3480242
      %v3112 = vadd.f32 %v2920, 0.3480242
      %v3113 = vadd.f32 %v2921, 0.3480242
      %v3114 = vadd.f32 %v2922, 0.3480242
      %v3115 = vadd.f32 %v2923, 0.3480242
      %v3116 = vadd.f32 %v2924, 0.3480242
      %v3117 = vadd.f32 %v2925, 0.3480242
      %v3118 = vadd.f32 %v2926, 0.3480242
      %v3119 = vadd.f32 %v2927, 0.3480242
      %v3120 = vadd.f32 %v2928, 0.3480242
      %v3121 = vadd.f32 %v2929, 0.3480242
      %v3122 = vadd.f32 %v2930, 0.3480242
      %v3123 = vadd.f32 %v2931, 0.3480242
      %v3124 = vadd.f32 %v2932, 0.3480242
      %v3125 = vadd.f32 %v2933, 0.3480242
      %v3126 = vadd.f32 %v2934, 0.3480242
      %v3127 = vadd.f32 %v2935, 0.3480242
      %v3128 = vadd.f32 %v2936, 0.3480242
      %v3129 = vadd.f32 %v2937, 0.3480242
      %v3130 = vadd.f32 %v2938, 0.3480242
      %v3131 = vadd.f32 %v2939, 0.3480242
      %v3132 = vadd.f32 %v2940, 0.3480242
      %v3133 = vadd.f32 %v2941, 0.3480242
      %v3134 = vadd.f32 %v2942, 0.3480242
      %v3135 = vadd.f32 %v2943, 0.3480242
      %v3136 = vadd.f32 %v2944, 0.3480242
      %v3137 = vadd.f32 %v2945, 0.3480242
      %v3138 = vadd.f32 %v2946, 0.3480242
      %v3139 = vadd.f32 %v2947, 0.3480242
      %v3140 = vadd.f32 %v2948, 0.3480242
      %v3141 = vadd.f32 %v2949, 0.3480242
      %v3142 = vadd.f32 %v2950, 0.3480242
      %v3143 = vadd.f32 %v2951, 0.3480242
      %v3144 = vadd.f32 %v2952, 0.3480242
      %v3145 = vadd.f32 %v2953, 0.3480242
      %v3146 = vadd.f32 %v2954, 0.3480242
      %v3147 = vadd.f32 %v2955, 0.3480242
      %v3148 = vadd.f32 %v2956, 0.3480242
      %v3149 = vadd.f32 %v2957, 0.3480242
      %v3150 = vadd.f32 %v2958, 0.3480242
      %v3151 = vadd.f32 %v2959, 0.3480242
      %v3152 = vadd.f32 %v2960, 0.3480242
      %v3153 = vadd.f32 %v2961, 0.3480242
      %v3154 = vadd.f32 %v2962, 0.3480242
      %v3155 = vadd.f32 %v2963, 0.3480242
      %v3156 = vadd.f32 %v2964, 0.3480242
      %v3157 = vadd.f32 %v2965, 0.3480242
      %v3158 = vadd.f32 %v2966, 0.3480242
      %v3159 = vadd.f32 %v2967, 0.3480242
      %v3160 = vadd.f32 %v2968, 0.3480242
      %v3161 = vadd.f32 %v2969, 0.3480242
      %v3162 = vadd.f32 %v2970, 0.3480242
      %v3163 = vadd.f32 %v2971, 0.3480242
      %v3164 = vadd.f32 %v2972, 0.3480242
      %v3165 = vadd.f32 %v2973, 0.3480242
      %v3166 = vadd.f32 %v2974, 0.3480242
      %v3167 = vadd.f32 %v2975, 0.3480242
      %v3168 = vadd.f32 %v2976, 0.3480242
      %v3169 = vadd.f32 %v2977, 0.3480242
      %v3170 = vadd.f32 %v2978, 0.3480242
      %v3171 = vadd.f32 %v2979, 0.3480242
      %v3172 = vadd.f32 %v2980, 0.3480242
      %v3173 = vadd.f32 %v2981, 0.3480242
      %v3174 = vadd.f32 %v2982, 0.3480242
      %v3175 = vadd.f32 %v2983, 0.3480242
      %v3176 = vadd.f32 %v2984, 0.3480242
      %v3177 = vadd.f32 %v2985, 0.3480242
      %v3178 = vadd.f32 %v2986, 0.3480242
      %v3179 = vadd.f32 %v2987, 0.3480242
      %v3180 = vadd.f32 %v2988, 0.3480242
      %v3181 = vadd.f32 %v2989, 0.3480242
      %v3182 = vadd.f32 %v2990, 0.3480242
      %v3183 = vadd.f32 %v2991, 0.3480242
      %v3184 = vadd.f32 %v2992, 0.3480242
      %v3185 = vadd.f32 %v2993, 0.3480242
      %v3186 = vadd.f32 %v2994, 0.3480242
      %v3187 = vadd.f32 %v2995, 0.3480242
      %v3188 = vadd.f32 %v2996, 0.3480242
      %v3189 = vadd.f32 %v2997, 0.3480242
      %v3190 = vadd.f32 %v2998, 0.3480242
      %v3191 = vadd.f32 %v2999, 0.3480242
      %v3192 = vadd.f32 %v3000, 0.3480242
      %v3193 = vadd.f32 %v3001, 0.3480242
      %v3194 = vadd.f32 %v3002, 0.3480242
      %v3195 = vadd.f32 %v3003, 0.3480242
      %v3196 = vadd.f32 %v3004, 0.3480242
      %v3197 = vadd.f32 %v3005, 0.3480242
      %v3198 = vadd.f32 %v3006, 0.3480242
      %v3199 = vadd.f32 %v3007, 0.3480242
      %v3200 = vadd.f32 %v3008, 0.3480242
      %v3201 = vadd.f32 %v3009, 0.3480242
      %v3202 = vadd.f32 %v3010, 0.3480242
      %v3203 = vadd.f32 %v3011, 0.3480242
      %v3204 = vadd.f32 %v3012, 0.3480242
      %v3205 = vadd.f32 %v3013, 0.3480242
      %v3206 = vadd.f32 %v3014, 0.3480242
      %v3207 = vadd.f32 %v3015, 0.3480242
      %v3208 = vadd.f32 %v3016, 0.3480242
      %v3209 = vadd.f32 %v3017, 0.3480242
      %v3210 = vadd.f32 %v3018, 0.3480242
      %v3211 = vadd.f32 %v3019, 0.3480242
      %v3212 = vadd.f32 %v3020, 0.3480242
      %v3213 = vadd.f32 %v3021, 0.3480242
      %v3214 = vadd.f32 %v3022, 0.3480242
      %v3215 = vadd.f32 %v3023, 0.3480242
      %v3216 = vadd.f32 %v3024, 0.3480242
      %v3217 = vadd.f32 %v3025, 0.3480242
      %v3218 = vadd.f32 %v3026, 0.3480242
      %v3219 = vadd.f32 %v3027, 0.3480242
      %v3220 = vadd.f32 %v3028, 0.3480242
      %v3221 = vadd.f32 %v3029, 0.3480242
      %v3222 = vadd.f32 %v3030, 0.3480242
      %v3223 = vadd.f32 %v3031, 0.3480242
      %v3224 = vadd.f32 %v3032, 0.3480242
      %v3225 = vadd.f32 %v3033, 0.3480242
      %v3226 = vadd.f32 %v3034, 0.3480242
      %v3227 = vadd.f32 %v3035, 0.3480242
      %v3228 = vadd.f32 %v3036, 0.3480242
      %v3229 = vadd.f32 %v3037, 0.3480242
      %v3230 = vadd.f32 %v3038, 0.3480242
      %v3231 = vadd.f32 %v3039, 0.3480242
      %v3232 = vadd.f32 %v3040, 0.3480242
      %v3233 = vadd.f32 %v3041, 0.3480242
      %v3234 = vadd.f32 %v3042, 0.3480242
      %v3235 = vadd.f32 %v3043, 0.3480242
      %v3236 = vadd.f32 %v3044, 0.3480242
      %v3237 = vadd.f32 %v3045, 0.3480242
      %v3238 = vadd.f32 %v3046, 0.3480242
      %v3239 = vadd.f32 %v3047, 0.3480242
      %v3240 = vadd.f32 %v3048, 0.3480242
      %v3241 = vadd.f32 %v3049, 0.3480242
      %v3242 = vadd.f32 %v3050, 0.3480242
      %v3243 = vadd.f32 %v3051, 0.3480242
      %v3244 = vadd.f32 %v3052, 0.3480242
      %v3245 = vadd.f32 %v3053, 0.3480242
      %v3246 = vadd.f32 %v3054, 0.3480242
      %v3247 = vadd.f32 %v3055, 0.3480242
      %v3248 = vadd.f32 %v3056, 0.3480242
      %v3249 = vadd.f32 %v3057, 0.3480242
      %v3250 = vadd.f32 %v3058, 0.3480242
      %v3251 = vadd.f32 %v3059, 0.3480242
      %v3252 = vadd.f32 %v3060, 0.3480242
      %v3253 = vadd.f32 %v3061, 0.3480242
      %v3254 = vadd.f32 %v3062, 0.3480242
      %v3255 = vadd.f32 %v3063, 0.3480242
      %v3256 = vadd.f32 %v3064, 0.3480242
      %v3257 = vadd.f32 %v3065, 0.3480242
      %v3258 = vadd.f32 %v3066, 0.3480242
      %v3259 = vadd.f32 %v3067, 0.3480242
      %v3260 = vadd.f32 %v3068, 0.3480242
      %v3261 = vadd.f32 %v3069, 0.3480242
      %v3262 = vadd.f32 %v3070, 0.3480242
      %v3263 = vadd.f32 %v3071, 0.3480242
      %v3264 = vadd.f32 %v3072, 0.3480242
      %v3265 = vadd.f32 %v3073, 0.3480242
      %v3266 = vadd.f32 %v3074, 0.3480242
      %v3267 = vmul.f32 %v3075, %v2307
      %v3268 = vmul.f32 %v3076, %v2308
      %v3269 = vmul.f32 %v3077, %v2309
      %v3270 = vmul.f32 %v3078, %v2310
      %v3271 = vmul.f32 %v3079, %v2311
      %v3272 = vmul.f32 %v3080, %v2312
      %v3273 = vmul.f32 %v3081, %v2313
      %v3274 = vmul.f32 %v3082, %v2314
      %v3275 = vmul.f32 %v3083, %v2315
      %v3276 = vmul.f32 %v3084, %v2316
      %v3277 = vmul.f32 %v3085, %v2317
      %v3278 = vmul.f32 %v3086, %v2318
      %v3279 = vmul.f32 %v3087, %v2319
      %v3280 = vmul.f32 %v3088, %v2320
      %v3281 = vmul.f32 %v3089, %v2321
      %v3282 = vmul.f32 %v3090, %v2322
      %v3283 = vmul.f32 %v3091, %v2323
      %v3284 = vmul.f32 %v3092, %v2324
      %v3285 = vmul.f32 %v3093, %v2325
      %v3286 = vmul.f32 %v3094, %v2326
      %v3287 = vmul.f32 %v3095, %v2327
      %v3288 = vmul.f32 %v3096, %v2328
      %v3289 = vmul.f32 %v3097, %v2329
      %v3290 = vmul.f32 %v3098, %v2330
      %v3291 = vmul.f32 %v3099, %v2331
      %v3292 = vmul.f32 %v3100, %v2332
      %v3293 = vmul.f32 %v3101, %v2333
      %v3294 = vmul.f32 %v3102, %v2334
      %v3295 = vmul.f32 %v3103, %v2335
      %v3296 = vmul.f32 %v3104, %v2336
      %v3297 = vmul.f32 %v3105, %v2337
      %v3298 = vmul.f32 %v3106, %v2338
      %v3299 = vmul.f32 %v3107, %v2339
      %v3300 = vmul.f32 %v3108, %v2340
      %v3301 = vmul.f32 %v3109, %v2341
      %v3302 = vmul.f32 %v3110, %v2342
      %v3303 = vmul.f32 %v3111, %v2343
      %v3304 = vmul.f32 %v3112, %v2344
      %v3305 = vmul.f32 %v3113, %v2345
      %v3306 = vmul.f32 %v3114, %v2346
      %v3307 = vmul.f32 %v3115, %v2347
      %v3308 = vmul.f32 %v3116, %v2348
      %v3309 = vmul.f32 %v3117, %v2349
      %v3310 = vmul.f32 %v3118, %v2350
      %v3311 = vmul.f32 %v3119, %v2351
      %v3312 = vmul.f32 %v3120, %v2352
      %v3313 = vmul.f32 %v3121, %v2353
      %v3314 = vmul.f32 %v3122, %v2354
      %v3315 = vmul.f32 %v3123, %v2355
      %v3316 = vmul.f32 %v3124, %v2356
      %v3317 = vmul.f32 %v3125, %v2357
      %v3318 = vmul.f32 %v3126, %v2358
      %v3319 = vmul.f32 %v3127, %v2359
      %v3320 = vmul.f32 %v3128, %v2360
      %v3321 = vmul.f32 %v3129, %v2361
      %v3322 = vmul.f32 %v3130, %v2362
      %v3323 = vmul.f32 %v3131, %v2363
      %v3324 = vmul.f32 %v3132, %v2364
      %v3325 = vmul.f32 %v3133, %v2365
      %v3326 = vmul.f32 %v3134, %v2366
      %v3327 = vmul.f32 %v3135, %v2367
      %v3328 = vmul.f32 %v3136, %v2368
      %v3329 = vmul.f32 %v3137, %v2369
      %v3330 = vmul.f32 %v3138, %v2370
      %v3331 = vmul.f32 %v3139, %v2371
      %v3332 = vmul.f32 %v3140, %v2372
      %v3333 = vmul.f32 %v3141, %v2373
      %v3334 = vmul.f32 %v3142, %v2374
      %v3335 = vmul.f32 %v3143, %v2375
      %v3336 = vmul.f32 %v3144, %v2376
      %v3337 = vmul.f32 %v3145, %v2377
      %v3338 = vmul.f32 %v3146, %v2378
      %v3339 = vmul.f32 %v3147, %v2379
      %v3340 = vmul.f32 %v3148, %v2380
      %v3341 = vmul.f32 %v3149, %v2381
      %v3342 = vmul.f32 %v3150, %v2382
      %v3343 = vmul.f32 %v3151, %v2383
      %v3344 = vmul.f32 %v3152, %v2384
      %v3345 = vmul.f32 %v3153, %v2385
      %v3346 = vmul.f32 %v3154, %v2386
      %v3347 = vmul.f32 %v3155, %v2387
      %v3348 = vmul.f32 %v3156, %v2388
      %v3349 = vmul.f32 %v3157, %v2389
      %v3350 = vmul.f32 %v3158, %v2390
      %v3351 = vmul.f32 %v3159, %v2391
      %v3352 = vmul.f32 %v3160, %v2392
      %v3353 = vmul.f32 %v3161, %v2393
      %v3354 = vmul.f32 %v3162, %v2394
      %v3355 = vmul.f32 %v3163, %v2395
      %v3356 = vmul.f32 %v3164, %v2396
      %v3357 = vmul.f32 %v3165, %v2397
      %v3358 = vmul.f32 %v3166, %v2398
      %v3359 = vmul.f32 %v3167, %v2399
      %v3360 = vmul.f32 %v3168, %v2400
      %v3361 = vmul.f32 %v3169, %v2401
      %v3362 = vmul.f32 %v3170, %v2402
      %v3363 = vmul.f32 %v3171, %v2403
      %v3364 = vmul.f32 %v3172, %v2404
      %v3365 = vmul.f32 %v3173, %v2405
      %v3366 = vmul.f32 %v3174, %v2406
      %v3367 = vmul.f32 %v3175, %v2407
      %v3368 = vmul.f32 %v3176, %v2408
      %v3369 = vmul.f32 %v3177, %v2409
      %v3370 = vmul.f32 %v3178, %v2410
      %v3371 = vmul.f32 %v3179, %v2411
      %v3372 = vmul.f32 %v3180, %v2412
      %v3373 = vmul.f32 %v3181, %v2413
      %v3374 = vmul.f32 %v3182, %v2414
      %v3375 = vmul.f32 %v3183, %v2415
      %v3376 = vmul.f32 %v3184, %v2416
      %v3377 = vmul.f32 %v3185, %v2417
      %v3378 = vmul.f32 %v3186, %v2418
      %v3379 = vmul.f32 %v3187, %v2419
      %v3380 = vmul.f32 %v3188, %v2420
      %v3381 = vmul.f32 %v3189, %v2421
      %v3382 = vmul.f32 %v3190, %v2422
      %v3383 = vmul.f32 %v3191, %v2423
      %v3384 = vmul.f32 %v3192, %v2424
      %v3385 = vmul.f32 %v3193, %v2425
      %v3386 = vmul.f32 %v3194, %v2426
      %v3387 = vmul.f32 %v3195, %v2427
      %v3388 = vmul.f32 %v3196, %v2428
      %v3389 = vmul.f32 %v3197, %v2429
      %v3390 = vmul.f32 %v3198, %v2430
      %v3391 = vmul.f32 %v3199, %v2431
      %v3392 = vmul.f32 %v3200, %v2432
      %v3393 = vmul.f32 %v3201, %v2433
      %v3394 = vmul.f32 %v3202, %v2434
      %v3395 = vmul.f32 %v3203, %v2435
      %v3396 = vmul.f32 %v3204, %v2436
      %v3397 = vmul.f32 %v3205, %v2437
      %v3398 = vmul.f32 %v3206, %v2438
      %v3399 = vmul.f32 %v3207, %v2439
      %v3400 = vmul.f32 %v3208, %v2440
      %v3401 = vmul.f32 %v3209, %v2441
      %v3402 = vmul.f32 %v3210, %v2442
      %v3403 = vmul.f32 %v3211, %v2443
      %v3404 = vmul.f32 %v3212, %v2444
      %v3405 = vmul.f32 %v3213, %v2445
      %v3406 = vmul.f32 %v3214, %v2446
      %v3407 = vmul.f32 %v3215, %v2447
      %v3408 = vmul.f32 %v3216, %v2448
      %v3409 = vmul.f32 %v3217, %v2449
      %v3410 = vmul.f32 %v3218, %v2450
      %v3411 = vmul.f32 %v3219, %v2451
      %v3412 = vmul.f32 %v3220, %v2452
      %v3413 = vmul.f32 %v3221, %v2453
      %v3414 = vmul.f32 %v3222, %v2454
      %v3415 = vmul.f32 %v3223, %v2455
      %v3416 = vmul.f32 %v3224, %v2456
      %v3417 = vmul.f32 %v3225, %v2457
      %v3418 = vmul.f32 %v3226, %v2458
      %v3419 = vmul.f32 %v3227, %v2459
      %v3420 = vmul.f32 %v3228, %v2460
      %v3421 = vmul.f32 %v3229, %v2461
      %v3422 = vmul.f32 %v3230, %v2462
      %v3423 = vmul.f32 %v3231, %v2463
      %v3424 = vmul.f32 %v3232, %v2464
      %v3425 = vmul.f32 %v3233, %v2465
      %v3426 = vmul.f32 %v3234, %v2466
      %v3427 = vmul.f32 %v3235, %v2467
      %v3428 = vmul.f32 %v3236, %v2468
      %v3429 = vmul.f32 %v3237, %v2469
      %v3430 = vmul.f32 %v3238, %v2470
      %v3431 = vmul.f32 %v3239, %v2471
      %v3432 = vmul.f32 %v3240, %v2472
      %v3433 = vmul.f32 %v3241, %v2473
      %v3434 = vmul.f32 %v3242, %v2474
      %v3435 = vmul.f32 %v3243, %v2475
      %v3436 = vmul.f32 %v3244, %v2476
      %v3437 = vmul.f32 %v3245, %v2477
      %v3438 = vmul.f32 %v3246, %v2478
      %v3439 = vmul.f32 %v3247, %v2479
      %v3440 = vmul.f32 %v3248, %v2480
      %v3441 = vmul.f32 %v3249, %v2481
      %v3442 = vmul.f32 %v3250, %v2482
      %v3443 = vmul.f32 %v3251, %v2483
      %v3444 = vmul.f32 %v3252, %v2484
      %v3445 = vmul.f32 %v3253, %v2485
      %v3446 = vmul.f32 %v3254, %v2486
      %v3447 = vmul.f32 %v3255, %v2487
      %v3448 = vmul.f32 %v3256, %v2488
      %v3449 = vmul.f32 %v3257, %v2489
      %v3450 = vmul.f32 %v3258, %v2490
      %v3451 = vmul.f32 %v3259, %v2491
      %v3452 = vmul.f32 %v3260, %v2492
      %v3453 = vmul.f32 %v3261, %v2493
      %v3454 = vmul.f32 %v3262, %v2494
      %v3455 = vmul.f32 %v3263, %v2495
      %v3456 = vmul.f32 %v3264, %v2496
      %v3457 = vmul.f32 %v3265, %v2497
      %v3458 = vmul.f32 %v3266, %v2498
      %v3459 = vmul.f32 %v1731, %v1731
      %v3460 = vmul.f32 %v1732, %v1732
      %v3461 = vmul.f32 %v1733, %v1733
      %v3462 = vmul.f32 %v1734, %v1734
      %v3463 = vmul.f32 %v1735, %v1735
      %v3464 = vmul.f32 %v1736, %v1736
      %v3465 = vmul.f32 %v1737, %v1737
      %v3466 = vmul.f32 %v1738, %v1738
      %v3467 = vmul.f32 %v1739, %v1739
      %v3468 = vmul.f32 %v1740, %v1740
      %v3469 = vmul.f32 %v1741, %v1741
      %v3470 = vmul.f32 %v1742, %v1742
      %v3471 = vmul.f32 %v1743, %v1743
      %v3472 = vmul.f32 %v1744, %v1744
      %v3473 = vmul.f32 %v1745, %v1745
      %v3474 = vmul.f32 %v1746, %v1746
      %v3475 = vmul.f32 %v1747, %v1747
      %v3476 = vmul.f32 %v1748, %v1748
      %v3477 = vmul.f32 %v1749, %v1749
      %v3478 = vmul.f32 %v1750, %v1750
      %v3479 = vmul.f32 %v1751, %v1751
      %v3480 = vmul.f32 %v1752, %v1752
      %v3481 = vmul.f32 %v1753, %v1753
      %v3482 = vmul.f32 %v1754, %v1754
      %v3483 = vmul.f32 %v1755, %v1755
      %v3484 = vmul.f32 %v1756, %v1756
      %v3485 = vmul.f32 %v1757, %v1757
      %v3486 = vmul.f32 %v1758, %v1758
      %v3487 = vmul.f32 %v1759, %v1759
      %v3488 = vmul.f32 %v1760, %v1760
      %v3489 = vmul.f32 %v1761, %v1761
      %v3490 = vmul.f32 %v1762, %v1762
      %v3491 = vmul.f32 %v1763, %v1763
      %v3492 = vmul.f32 %v1764, %v1764
      %v3493 = vmul.f32 %v1765, %v1765
      %v3494 = vmul.f32 %v1766, %v1766
      %v3495 = vmul.f32 %v1767, %v1767
      %v3496 = vmul.f32 %v1768, %v1768
      %v3497 = vmul.f32 %v1769, %v1769
      %v3498 = vmul.f32 %v1770, %v1770
      %v3499 = vmul.f32 %v1771, %v1771
      %v3500 = vmul.f32 %v1772, %v1772
      %v3501 = vmul.f32 %v1773, %v1773
      %v3502 = vmul.f32 %v1774, %v1774
      %v3503 = vmul.f32 %v1775, %v1775
      %v3504 = vmul.f32 %v1776, %v1776
      %v3505 = vmul.f32 %v1777, %v1777
      %v3506 = vmul.f32 %v1778, %v1778
      %v3507 = vmul.f32 %v1779, %v1779
      %v3508 = vmul.f32 %v1780, %v1780
      %v3509 = vmul.f32 %v1781, %v1781
      %v3510 = vmul.f32 %v1782, %v1782
      %v3511 = vmul.f32 %v1783, %v1783
      %v3512 = vmul.f32 %v1784, %v1784
      %v3513 = vmul.f32 %v1785, %v1785
      %v3514 = vmul.f32 %v1786, %v1786
      %v3515 = vmul.f32 %v1787, %v1787
      %v3516 = vmul.f32 %v1788, %v1788
      %v3517 = vmul.f32 %v1789, %v1789
      %v3518 = vmul.f32 %v1790, %v1790
      %v3519 = vmul.f32 %v1791, %v1791
      %v3520 = vmul.f32 %v1792, %v1792
      %v3521 = vmul.f32 %v1793, %v1793
      %v3522 = vmul.f32 %v1794, %v1794
      %v3523 = vmul.f32 %v1795, %v1795
      %v3524 = vmul.f32 %v1796, %v1796
      %v3525 = vmul.f32 %v1797, %v1797
      %v3526 = vmul.f32 %v1798, %v1798
      %v3527 = vmul.f32 %v1799, %v1799
      %v3528 = vmul.f32 %v1800, %v1800
      %v3529 = vmul.f32 %v1801, %v1801
      %v3530 = vmul.f32 %v1802, %v1802
      %v3531 = vmul.f32 %v1803, %v1803
      %v3532 = vmul.f32 %v1804, %v1804
      %v3533 = vmul.f32 %v1805, %v1805
      %v3534 = vmul.f32 %v1806, %v1806
      %v3535 = vmul.f32 %v1807, %v1807
      %v3536 = vmul.f32 %v1808, %v1808
      %v3537 = vmul.f32 %v1809, %v1809
      %v3538 = vmul.f32 %v1810, %v1810
      %v3539 = vmul.f32 %v1811, %v1811
      %v3540 = vmul.f32 %v1812, %v1812
      %v3541 = vmul.f32 %v1813, %v1813
      %v3542 = vmul.f32 %v1814, %v1814
      %v3543 = vmul.f32 %v1815, %v1815
      %v3544 = vmul.f32 %v1816, %v1816
      %v3545 = vmul.f32 %v1817, %v1817
      %v3546 = vmul.f32 %v1818, %v1818
      %v3547 = vmul.f32 %v1819, %v1819
      %v3548 = vmul.f32 %v1820, %v1820
      %v3549 = vmul.f32 %v1821, %v1821
      %v3550 = vmul.f32 %v1822, %v1822
      %v3551 = vmul.f32 %v1823, %v1823
      %v3552 = vmul.f32 %v1824, %v1824
      %v3553 = vmul.f32 %v1825, %v1825
      %v3554 = vmul.f32 %v1826, %v1826
      %v3555 = vmul.f32 %v1827, %v1827
      %v3556 = vmul.f32 %v1828, %v1828
      %v3557 = vmul.f32 %v1829, %v1829
      %v3558 = vmul.f32 %v1830, %v1830
      %v3559 = vmul.f32 %v1831, %v1831
      %v3560 = vmul.f32 %v1832, %v1832
      %v3561 = vmul.f32 %v1833, %v1833
      %v3562 = vmul.f32 %v1834, %v1834
      %v3563 = vmul.f32 %v1835, %v1835
      %v3564 = vmul.f32 %v1836, %v1836
      %v3565 = vmul.f32 %v1837, %v1837
      %v3566 = vmul.f32 %v1838, %v1838
      %v3567 = vmul.f32 %v1839, %v1839
      %v3568 = vmul.f32 %v1840, %v1840
      %v3569 = vmul.f32 %v1841, %v1841
      %v3570 = vmul.f32 %v1842, %v1842
      %v3571 = vmul.f32 %v1843, %v1843
      %v3572 = vmul.f32 %v1844, %v1844
      %v3573 = vmul.f32 %v1845, %v1845
      %v3574 = vmul.f32 %v1846, %v1846
      %v3575 = vmul.f32 %v1847, %v1847
      %v3576 = vmul.f32 %v1848, %v1848
      %v3577 = vmul.f32 %v1849, %v1849
      %v3578 = vmul.f32 %v1850, %v1850
      %v3579 = vmul.f32 %v1851, %v1851
      %v3580 = vmul.f32 %v1852, %v1852
      %v3581 = vmul.f32 %v1853, %v1853
      %v3582 = vmul.f32 %v1854, %v1854
      %v3583 = vmul.f32 %v1855, %v1855
      %v3584 = vmul.f32 %v1856, %v1856
      %v3585 = vmul.f32 %v1857, %v1857
      %v3586 = vmul.f32 %v1858, %v1858
      %v3587 = vmul.f32 %v1859, %v1859
      %v3588 = vmul.f32 %v1860, %v1860
      %v3589 = vmul.f32 %v1861, %v1861
      %v3590 = vmul.f32 %v1862, %v1862
      %v3591 = vmul.f32 %v1863, %v1863
      %v3592 = vmul.f32 %v1864, %v1864
      %v3593 = vmul.f32 %v1865, %v1865
      %v3594 = vmul.f32 %v1866, %v1866
      %v3595 = vmul.f32 %v1867, %v1867
      %v3596 = vmul.f32 %v1868, %v1868
      %v3597 = vmul.f32 %v1869, %v1869
      %v3598 = vmul.f32 %v1870, %v1870
      %v3599 = vmul.f32 %v1871, %v1871
      %v3600 = vmul.f32 %v1872, %v1872
      %v3601 = vmul.f32 %v1873, %v1873
      %v3602 = vmul.f32 %v1874, %v1874
      %v3603 = vmul.f32 %v1875, %v1875
      %v3604 = vmul.f32 %v1876, %v1876
      %v3605 = vmul.f32 %v1877, %v1877
      %v3606 = vmul.f32 %v1878, %v1878
      %v3607 = vmul.f32 %v1879, %v1879
      %v3608 = vmul.f32 %v1880, %v1880
      %v3609 = vmul.f32 %v1881, %v1881
      %v3610 = vmul.f32 %v1882, %v1882
      %v3611 = vmul.f32 %v1883, %v1883
      %v3612 = vmul.f32 %v1884, %v1884
      %v3613 = vmul.f32 %v1885, %v1885
      %v3614 = vmul.f32 %v1886, %v1886
      %v3615 = vmul.f32 %v1887, %v1887
      %v3616 = vmul.f32 %v1888, %v1888
      %v3617 = vmul.f32 %v1889, %v1889
      %v3618 = vmul.f32 %v1890, %v1890
      %v3619 = vmul.f32 %v1891, %v1891
      %v3620 = vmul.f32 %v1892, %v1892
      %v3621 = vmul.f32 %v1893, %v1893
      %v3622 = vmul.f32 %v1894, %v1894
      %v3623 = vmul.f32 %v1895, %v1895
      %v3624 = vmul.f32 %v1896, %v1896
      %v3625 = vmul.f32 %v1897, %v1897
      %v3626 = vmul.f32 %v1898, %v1898
      %v3627 = vmul.f32 %v1899, %v1899
      %v3628 = vmul.f32 %v1900, %v1900
      %v3629 = vmul.f32 %v1901, %v1901
      %v3630 = vmul.f32 %v1902, %v1902
      %v3631 = vmul.f32 %v1903, %v1903
      %v3632 = vmul.f32 %v1904, %v1904
      %v3633 = vmul.f32 %v1905, %v1905
      %v3634 = vmul.f32 %v1906, %v1906
      %v3635 = vmul.f32 %v1907, %v1907
      %v3636 = vmul.f32 %v1908, %v1908
      %v3637 = vmul.f32 %v1909, %v1909
      %v3638 = vmul.f32 %v1910, %v1910
      %v3639 = vmul.f32 %v1911, %v1911
      %v3640 = vmul.f32 %v1912, %v1912
      %v3641 = vmul.f32 %v1913, %v1913
      %v3642 = vmul.f32 %v1914, %v1914
      %v3643 = vmul.f32 %v1915, %v1915
      %v3644 = vmul.f32 %v1916, %v1916
      %v3645 = vmul.f32 %v1917, %v1917
      %v3646 = vmul.f32 %v1918, %v1918
      %v3647 = vmul.f32 %v1919, %v1919
      %v3648 = vmul.f32 %v1920, %v1920
      %v3649 = vmul.f32 %v1921, %v1921
      %v3650 = vmul.f32 %v1922, %v1922
      %v3651 = vsub.f32 0.0, %v3459
      %v3652 = vsub.f32 0.0, %v3460
      %v3653 = vsub.f32 0.0, %v3461
      %v3654 = vsub.f32 0.0, %v3462
      %v3655 = vsub.f32 0.0, %v3463
      %v3656 = vsub.f32 0.0, %v3464
      %v3657 = vsub.f32 0.0, %v3465
      %v3658 = vsub.f32 0.0, %v3466
      %v3659 = vsub.f32 0.0, %v3467
      %v3660 = vsub.f32 0.0, %v3468
      %v3661 = vsub.f32 0.0, %v3469
      %v3662 = vsub.f32 0.0, %v3470
      %v3663 = vsub.f32 0.0, %v3471
      %v3664 = vsub.f32 0.0, %v3472
      %v3665 = vsub.f32 0.0, %v3473
      %v3666 = vsub.f32 0.0, %v3474
      %v3667 = vsub.f32 0.0, %v3475
      %v3668 = vsub.f32 0.0, %v3476
      %v3669 = vsub.f32 0.0, %v3477
      %v3670 = vsub.f32 0.0, %v3478
      %v3671 = vsub.f32 0.0, %v3479
      %v3672 = vsub.f32 0.0, %v3480
      %v3673 = vsub.f32 0.0, %v3481
      %v3674 = vsub.f32 0.0, %v3482
      %v3675 = vsub.f32 0.0, %v3483
      %v3676 = vsub.f32 0.0, %v3484
      %v3677 = vsub.f32 0.0, %v3485
      %v3678 = vsub.f32 0.0, %v3486
      %v3679 = vsub.f32 0.0, %v3487
      %v3680 = vsub.f32 0.0, %v3488
      %v3681 = vsub.f32 0.0, %v3489
      %v3682 = vsub.f32 0.0, %v3490
      %v3683 = vsub.f32 0.0, %v3491
      %v3684 = vsub.f32 0.0, %v3492
      %v3685 = vsub.f32 0.0, %v3493
      %v3686 = vsub.f32 0.0, %v3494
      %v3687 = vsub.f32 0.0, %v3495
      %v3688 = vsub.f32 0.0, %v3496
      %v3689 = vsub.f32 0.0, %v3497
      %v3690 = vsub.f32 0.0, %v3498
      %v3691 = vsub.f32 0.0, %v3499
      %v3692 = vsub.f32 0.0, %v3500
      %v3693 = vsub.f32 0.0, %v3501
      %v3694 = vsub.f32 0.0, %v3502
      %v3695 = vsub.f32 0.0, %v3503
      %v3696 = vsub.f32 0.0, %v3504
      %v3697 = vsub.f32 0.0, %v3505
      %v3698 = vsub.f32 0.0, %v3506
      %v3699 = vsub.f32 0.0, %v3507
      %v3700 = vsub.f32 0.0, %v3508
      %v3701 = vsub.f32 0.0, %v3509
      %v3702 = vsub.f32 0.0, %v3510
      %v3703 = vsub.f32 0.0, %v3511
      %v3704 = vsub.f32 0.0, %v3512
      %v3705 = vsub.f32 0.0, %v3513
      %v3706 = vsub.f32 0.0, %v3514
      %v3707 = vsub.f32 0.0, %v3515
      %v3708 = vsub.f32 0.0, %v3516
      %v3709 = vsub.f32 0.0, %v3517
      %v3710 = vsub.f32 0.0, %v3518
      %v3711 = vsub.f32 0.0, %v3519
      %v3712 = vsub.f32 0.0, %v3520
      %v3713 = vsub.f32 0.0, %v3521
      %v3714 = vsub.f32 0.0, %v3522
      %v3715 = vsub.f32 0.0, %v3523
      %v3716 = vsub.f32 0.0, %v3524
      %v3717 = vsub.f32 0.0, %v3525
      %v3718 = vsub.f32 0.0, %v3526
      %v3719 = vsub.f32 0.0, %v3527
      %v3720 = vsub.f32 0.0, %v3528
      %v3721 = vsub.f32 0.0, %v3529
      %v3722 = vsub.f32 0.0, %v3530
      %v3723 = vsub.f32 0.0, %v3531
      %v3724 = vsub.f32 0.0, %v3532
      %v3725 = vsub.f32 0.0, %v3533
      %v3726 = vsub.f32 0.0, %v3534
      %v3727 = vsub.f32 0.0, %v3535
      %v3728 = vsub.f32 0.0, %v3536
      %v3729 = vsub.f32 0.0, %v3537
      %v3730 = vsub.f32 0.0, %v3538
      %v3731 = vsub.f32 0.0, %v3539
      %v3732 = vsub.f32 0.0, %v3540
      %v3733 = vsub.f32 0.0, %v3541
      %v3734 = vsub.f32 0.0, %v3542
      %v3735 = vsub.f32 0.0, %v3543
      %v3736 = vsub.f32 0.0, %v3544
      %v3737 = vsub.f32 0.0, %v3545
      %v3738 = vsub.f32 0.0, %v3546
      %v3739 = vsub.f32 0.0, %v3547
      %v3740 = vsub.f32 0.0, %v3548
      %v3741 = vsub.f32 0.0, %v3549
      %v3742 = vsub.f32 0.0, %v3550
      %v3743 = vsub.f32 0.0, %v3551
      %v3744 = vsub.f32 0.0, %v3552
      %v3745 = vsub.f32 0.0, %v3553
      %v3746 = vsub.f32 0.0, %v3554
      %v3747 = vsub.f32 0.0, %v3555
      %v3748 = vsub.f32 0.0, %v3556
      %v3749 = vsub.f32 0.0, %v3557
      %v3750 = vsub.f32 0.0, %v3558
      %v3751 = vsub.f32 0.0, %v3559
      %v3752 = vsub.f32 0.0, %v3560
      %v3753 = vsub.f32 0.0, %v3561
      %v3754 = vsub.f32 0.0, %v3562
      %v3755 = vsub.f32 0.0, %v3563
      %v3756 = vsub.f32 0.0, %v3564
      %v3757 = vsub.f32 0.0, %v3565
      %v3758 = vsub.f32 0.0, %v3566
      %v3759 = vsub.f32 0.0, %v3567
      %v3760 = vsub.f32 0.0, %v3568
      %v3761 = vsub.f32 0.0, %v3569
      %v3762 = vsub.f32 0.0, %v3570
      %v3763 = vsub.f32 0.0, %v3571
      %v3764 = vsub.f32 0.0, %v3572
      %v3765 = vsub.f32 0.0, %v3573
      %v3766 = vsub.f32 0.0, %v3574
      %v3767 = vsub.f32 0.0, %v3575
      %v3768 = vsub.f32 0.0, %v3576
      %v3769 = vsub.f32 0.0, %v3577
      %v3770 = vsub.f32 0.0, %v3578
      %v3771 = vsub.f32 0.0, %v3579
      %v3772 = vsub.f32 0.0, %v3580
      %v3773 = vsub.f32 0.0, %v3581
      %v3774 = vsub.f32 0.0, %v3582
      %v3775 = vsub.f32 0.0, %v3583
      %v3776 = vsub.f32 0.0, %v3584
      %v3777 = vsub.f32 0.0, %v3585
      %v3778 = vsub.f32 0.0, %v3586
      %v3779 = vsub.f32 0.0, %v3587
      %v3780 = vsub.f32 0.0, %v3588
      %v3781 = vsub.f32 0.0, %v3589
      %v3782 = vsub.f32 0.0, %v3590
      %v3783 = vsub.f32 0.0, %v3591
      %v3784 = vsub.f32 0.0, %v3592
      %v3785 = vsub.f32 0.0, %v3593
      %v3786 = vsub.f32 0.0, %v3594
      %v3787 = vsub.f32 0.0, %v3595
      %v3788 = vsub.f32 0.0, %v3596
      %v3789 = vsub.f32 0.0, %v3597
      %v3790 = vsub.f32 0.0, %v3598
      %v3791 = vsub.f32 0.0, %v3599
      %v3792 = vsub.f32 0.0, %v3600
      %v3793 = vsub.f32 0.0, %v3601
      %v3794 = vsub.f32 0.0, %v3602
      %v3795 = vsub.f32 0.0, %v3603
      %v3796 = vsub.f32 0.0, %v3604
      %v3797 = vsub.f32 0.0, %v3605
      %v3798 = vsub.f32 0.0, %v3606
      %v3799 = vsub.f32 0.0, %v3607
      %v3800 = vsub.f32 0.0, %v3608
      %v3801 = vsub.f32 0.0, %v3609
      %v3802 = vsub.f32 0.0, %v3610
      %v3803 = vsub.f32 0.0, %v3611
      %v3804 = vsub.f32 0.0, %v3612
      %v3805 = vsub.f32 0.0, %v3613
      %v3806 = vsub.f32 0.0, %v3614
      %v3807 = vsub.f32 0.0, %v3615
      %v3808 = vsub.f32 0.0, %v3616
      %v3809 = vsub.f32 0.0, %v3617
      %v3810 = vsub.f32 0.0, %v3618
      %v3811 = vsub.f32 0.0, %v3619
      %v3812 = vsub.f32 0.0, %v3620
      %v3813 = vsub.f32 0.0, %v3621
      %v3814 = vsub.f32 0.0, %v3622
      %v3815 = vsub.f32 0.0, %v3623
      %v3816 = vsub.f32 0.0, %v3624
      %v3817 = vsub.f32 0.0, %v3625
      %v3818 = vsub.f32 0.0, %v3626
      %v3819 = vsub.f32 0.0, %v3627
      %v3820 = vsub.f32 0.0, %v3628
      %v3821 = vsub.f32 0.0, %v3629
      %v3822 = vsub.f32 0.0, %v3630
      %v3823 = vsub.f32 0.0, %v3631
      %v3824 = vsub.f32 0.0, %v3632
      %v3825 = vsub.f32 0.0, %v3633
      %v3826 = vsub.f32 0.0, %v3634
      %v3827 = vsub.f32 0.0, %v3635
      %v3828 = vsub.f32 0.0, %v3636
      %v3829 = vsub.f32 0.0, %v3637
      %v3830 = vsub.f32 0.0, %v3638
      %v3831 = vsub.f32 0.0, %v3639
      %v3832 = vsub.f32 0.0, %v3640
      %v3833 = vsub.f32 0.0, %v3641
      %v3834 = vsub.f32 0.0, %v3642
      %v3835 = vsub.f32 0.0, %v3643
      %v3836 = vsub.f32 0.0, %v3644
      %v3837 = vsub.f32 0.0, %v3645
      %v3838 = vsub.f32 0.0, %v3646
      %v3839 = vsub.f32 0.0, %v3647
      %v3840 = vsub.f32 0.0, %v3648
      %v3841 = vsub.f32 0.0, %v3649
      %v3842 = vsub.f32 0.0, %v3650
      %v3843 = vmul.f32 %v3651, 1.442695
      %v3844 = vpow.pop %v3843
      %v3845 = vmul.f32 %v3652, 1.442695
      %v3846 = vpow.pop %v3845
      %v3847 = vmul.f32 %v3653, 1.442695
      %v3848 = vpow.pop %v3847
      %v3849 = vmul.f32 %v3654, 1.442695
      %v3850 = vpow.pop %v3849
      %v3851 = vmul.f32 %v3655, 1.442695
      %v3852 = vpow.pop %v3851
      %v3853 = vmul.f32 %v3656, 1.442695
      %v3854 = vpow.pop %v3853
      %v3855 = vmul.f32 %v3657, 1.442695
      %v3856 = vpow.pop %v3855
      %v3857 = vmul.f32 %v3658, 1.442695
      %v3858 = vpow.pop %v3857
      %v3859 = vmul.f32 %v3659, 1.442695
      %v3860 = vpow.pop %v3859
      %v3861 = vmul.f32 %v3660, 1.442695
      %v3862 = vpow.pop %v3861
      %v3863 = vmul.f32 %v3661, 1.442695
      %v3864 = vpow.pop %v3863
      %v3865 = vmul.f32 %v3662, 1.442695
      %v3866 = vpow.pop %v3865
      %v3867 = vmul.f32 %v3663, 1.442695
      %v3868 = vpow.pop %v3867
      %v3869 = vmul.f32 %v3664, 1.442695
      %v3870 = vpow.pop %v3869
      %v3871 = vmul.f32 %v3665, 1.442695
      %v3872 = vpow.pop %v3871
      %v3873 = vmul.f32 %v3666, 1.442695
      %v3874 = vpow.pop %v3873
      %v3875 = vmul.f32 %v3667, 1.442695
      %v3876 = vpow.pop %v3875
      %v3877 = vmul.f32 %v3668, 1.442695
      %v3878 = vpow.pop %v3877
      %v3879 = vmul.f32 %v3669, 1.442695
      %v3880 = vpow.pop %v3879
      %v3881 = vmul.f32 %v3670, 1.442695
      %v3882 = vpow.pop %v3881
      %v3883 = vmul.f32 %v3671, 1.442695
      %v3884 = vpow.pop %v3883
      %v3885 = vmul.f32 %v3672, 1.442695
      %v3886 = vpow.pop %v3885
      %v3887 = vmul.f32 %v3673, 1.442695
      %v3888 = vpow.pop %v3887
      %v3889 = vmul.f32 %v3674, 1.442695
      %v3890 = vpow.pop %v3889
      %v3891 = vmul.f32 %v3675, 1.442695
      %v3892 = vpow.pop %v3891
      %v3893 = vmul.f32 %v3676, 1.442695
      %v3894 = vpow.pop %v3893
      %v3895 = vmul.f32 %v3677, 1.442695
      %v3896 = vpow.pop %v3895
      %v3897 = vmul.f32 %v3678, 1.442695
      %v3898 = vpow.pop %v3897
      %v3899 = vmul.f32 %v3679, 1.442695
      %v3900 = vpow.pop %v3899
      %v3901 = vmul.f32 %v3680, 1.442695
      %v3902 = vpow.pop %v3901
      %v3903 = vmul.f32 %v3681, 1.442695
      %v3904 = vpow.pop %v3903
      %v3905 = vmul.f32 %v3682, 1.442695
      %v3906 = vpow.pop %v3905
      %v3907 = vmul.f32 %v3683, 1.442695
      %v3908 = vpow.pop %v3907
      %v3909 = vmul.f32 %v3684, 1.442695
      %v3910 = vpow.pop %v3909
      %v3911 = vmul.f32 %v3685, 1.442695
      %v3912 = vpow.pop %v3911
      %v3913 = vmul.f32 %v3686, 1.442695
      %v3914 = vpow.pop %v3913
      %v3915 = vmul.f32 %v3687, 1.442695
      %v3916 = vpow.pop %v3915
      %v3917 = vmul.f32 %v3688, 1.442695
      %v3918 = vpow.pop %v3917
      %v3919 = vmul.f32 %v3689, 1.442695
      %v3920 = vpow.pop %v3919
      %v3921 = vmul.f32 %v3690, 1.442695
      %v3922 = vpow.pop %v3921
      %v3923 = vmul.f32 %v3691, 1.442695
      %v3924 = vpow.pop %v3923
      %v3925 = vmul.f32 %v3692, 1.442695
      %v3926 = vpow.pop %v3925
      %v3927 = vmul.f32 %v3693, 1.442695
      %v3928 = vpow.pop %v3927
      %v3929 = vmul.f32 %v3694, 1.442695
      %v3930 = vpow.pop %v3929
      %v3931 = vmul.f32 %v3695, 1.442695
      %v3932 = vpow.pop %v3931
      %v3933 = vmul.f32 %v3696, 1.442695
      %v3934 = vpow.pop %v3933
      %v3935 = vmul.f32 %v3697, 1.442695
      %v3936 = vpow.pop %v3935
      %v3937 = vmul.f32 %v3698, 1.442695
      %v3938 = vpow.pop %v3937
      %v3939 = vmul.f32 %v3699, 1.442695
      %v3940 = vpow.pop %v3939
      %v3941 = vmul.f32 %v3700, 1.442695
      %v3942 = vpow.pop %v3941
      %v3943 = vmul.f32 %v3701, 1.442695
      %v3944 = vpow.pop %v3943
      %v3945 = vmul.f32 %v3702, 1.442695
      %v3946 = vpow.pop %v3945
      %v3947 = vmul.f32 %v3703, 1.442695
      %v3948 = vpow.pop %v3947
      %v3949 = vmul.f32 %v3704, 1.442695
      %v3950 = vpow.pop %v3949
      %v3951 = vmul.f32 %v3705, 1.442695
      %v3952 = vpow.pop %v3951
      %v3953 = vmul.f32 %v3706, 1.442695
      %v3954 = vpow.pop %v3953
      %v3955 = vmul.f32 %v3707, 1.442695
      %v3956 = vpow.pop %v3955
      %v3957 = vmul.f32 %v3708, 1.442695
      %v3958 = vpow.pop %v3957
      %v3959 = vmul.f32 %v3709, 1.442695
      %v3960 = vpow.pop %v3959
      %v3961 = vmul.f32 %v3710, 1.442695
      %v3962 = vpow.pop %v3961
      %v3963 = vmul.f32 %v3711, 1.442695
      %v3964 = vpow.pop %v3963
      %v3965 = vmul.f32 %v3712, 1.442695
      %v3966 = vpow.pop %v3965
      %v3967 = vmul.f32 %v3713, 1.442695
      %v3968 = vpow.pop %v3967
      %v3969 = vmul.f32 %v3714, 1.442695
      %v3970 = vpow.pop %v3969
      %v3971 = vmul.f32 %v3715, 1.442695
      %v3972 = vpow.pop %v3971
      %v3973 = vmul.f32 %v3716, 1.442695
      %v3974 = vpow.pop %v3973
      %v3975 = vmul.f32 %v3717, 1.442695
      %v3976 = vpow.pop %v3975
      %v3977 = vmul.f32 %v3718, 1.442695
      %v3978 = vpow.pop %v3977
      %v3979 = vmul.f32 %v3719, 1.442695
      %v3980 = vpow.pop %v3979
      %v3981 = vmul.f32 %v3720, 1.442695
      %v3982 = vpow.pop %v3981
      %v3983 = vmul.f32 %v3721, 1.442695
      %v3984 = vpow.pop %v3983
      %v3985 = vmul.f32 %v3722, 1.442695
      %v3986 = vpow.pop %v3985
      %v3987 = vmul.f32 %v3723, 1.442695
      %v3988 = vpow.pop %v3987
      %v3989 = vmul.f32 %v3724, 1.442695
      %v3990 = vpow.pop %v3989
      %v3991 = vmul.f32 %v3725, 1.442695
      %v3992 = vpow.pop %v3991
      %v3993 = vmul.f32 %v3726, 1.442695
      %v3994 = vpow.pop %v3993
      %v3995 = vmul.f32 %v3727, 1.442695
      %v3996 = vpow.pop %v3995
      %v3997 = vmul.f32 %v3728, 1.442695
      %v3998 = vpow.pop %v3997
      %v3999 = vmul.f32 %v3729, 1.442695
      %v4000 = vpow.pop %v3999
      %v4001 = vmul.f32 %v3730, 1.442695
      %v4002 = vpow.pop %v4001
      %v4003 = vmul.f32 %v3731, 1.442695
      %v4004 = vpow.pop %v4003
      %v4005 = vmul.f32 %v3732, 1.442695
      %v4006 = vpow.pop %v4005
      %v4007 = vmul.f32 %v3733, 1.442695
      %v4008 = vpow.pop %v4007
      %v4009 = vmul.f32 %v3734, 1.442695
      %v4010 = vpow.pop %v4009
      %v4011 = vmul.f32 %v3735, 1.442695
      %v4012 = vpow.pop %v4011
      %v4013 = vmul.f32 %v3736, 1.442695
      %v4014 = vpow.pop %v4013
      %v4015 = vmul.f32 %v3737, 1.442695
      %v4016 = vpow.pop %v4015
      %v4017 = vmul.f32 %v3738, 1.442695
      %v4018 = vpow.pop %v4017
      %v4019 = vmul.f32 %v3739, 1.442695
      %v4020 = vpow.pop %v4019
      %v4021 = vmul.f32 %v3740, 1.442695
      %v4022 = vpow.pop %v4021
      %v4023 = vmul.f32 %v3741, 1.442695
      %v4024 = vpow.pop %v4023
      %v4025 = vmul.f32 %v3742, 1.442695
      %v4026 = vpow.pop %v4025
      %v4027 = vmul.f32 %v3743, 1.442695
      %v4028 = vpow.pop %v4027
      %v4029 = vmul.f32 %v3744, 1.442695
      %v4030 = vpow.pop %v4029
      %v4031 = vmul.f32 %v3745, 1.442695
      %v4032 = vpow.pop %v4031
      %v4033 = vmul.f32 %v3746, 1.442695
      %v4034 = vpow.pop %v4033
      %v4035 = vmul.f32 %v3747, 1.442695
      %v4036 = vpow.pop %v4035
      %v4037 = vmul.f32 %v3748, 1.442695
      %v4038 = vpow.pop %v4037
      %v4039 = vmul.f32 %v3749, 1.442695
      %v4040 = vpow.pop %v4039
      %v4041 = vmul.f32 %v3750, 1.442695
      %v4042 = vpow.pop %v4041
      %v4043 = vmul.f32 %v3751, 1.442695
      %v4044 = vpow.pop %v4043
      %v4045 = vmul.f32 %v3752, 1.442695
      %v4046 = vpow.pop %v4045
      %v4047 = vmul.f32 %v3753, 1.442695
      %v4048 = vpow.pop %v4047
      %v4049 = vmul.f32 %v3754, 1.442695
      %v4050 = vpow.pop %v4049
      %v4051 = vmul.f32 %v3755, 1.442695
      %v4052 = vpow.pop %v4051
      %v4053 = vmul.f32 %v3756, 1.442695
      %v4054 = vpow.pop %v4053
      %v4055 = vmul.f32 %v3757, 1.442695
      %v4056 = vpow.pop %v4055
      %v4057 = vmul.f32 %v3758, 1.442695
      %v4058 = vpow.pop %v4057
      %v4059 = vmul.f32 %v3759, 1.442695
      %v4060 = vpow.pop %v4059
      %v4061 = vmul.f32 %v3760, 1.442695
      %v4062 = vpow.pop %v4061
      %v4063 = vmul.f32 %v3761, 1.442695
      %v4064 = vpow.pop %v4063
      %v4065 = vmul.f32 %v3762, 1.442695
      %v4066 = vpow.pop %v4065
      %v4067 = vmul.f32 %v3763, 1.442695
      %v4068 = vpow.pop %v4067
      %v4069 = vmul.f32 %v3764, 1.442695
      %v4070 = vpow.pop %v4069
      %v4071 = vmul.f32 %v3765, 1.442695
      %v4072 = vpow.pop %v4071
      %v4073 = vmul.f32 %v3766, 1.442695
      %v4074 = vpow.pop %v4073
      %v4075 = vmul.f32 %v3767, 1.442695
      %v4076 = vpow.pop %v4075
      %v4077 = vmul.f32 %v3768, 1.442695
      %v4078 = vpow.pop %v4077
      %v4079 = vmul.f32 %v3769, 1.442695
      %v4080 = vpow.pop %v4079
      %v4081 = vmul.f32 %v3770, 1.442695
      %v4082 = vpow.pop %v4081
      %v4083 = vmul.f32 %v3771, 1.442695
      %v4084 = vpow.pop %v4083
      %v4085 = vmul.f32 %v3772, 1.442695
      %v4086 = vpow.pop %v4085
      %v4087 = vmul.f32 %v3773, 1.442695
      %v4088 = vpow.pop %v4087
      %v4089 = vmul.f32 %v3774, 1.442695
      %v4090 = vpow.pop %v4089
      %v4091 = vmul.f32 %v3775, 1.442695
      %v4092 = vpow.pop %v4091
      %v4093 = vmul.f32 %v3776, 1.442695
      %v4094 = vpow.pop %v4093
      %v4095 = vmul.f32 %v3777, 1.442695
      %v4096 = vpow.pop %v4095
      %v4097 = vmul.f32 %v3778, 1.442695
      %v4098 = vpow.pop %v4097
      %v4099 = vmul.f32 %v3779, 1.442695
      %v4100 = vpow.pop %v4099
      %v4101 = vmul.f32 %v3780, 1.442695
      %v4102 = vpow.pop %v4101
      %v4103 = vmul.f32 %v3781, 1.442695
      %v4104 = vpow.pop %v4103
      %v4105 = vmul.f32 %v3782, 1.442695
      %v4106 = vpow.pop %v4105
      %v4107 = vmul.f32 %v3783, 1.442695
      %v4108 = vpow.pop %v4107
      %v4109 = vmul.f32 %v3784, 1.442695
      %v4110 = vpow.pop %v4109
      %v4111 = vmul.f32 %v3785, 1.442695
      %v4112 = vpow.pop %v4111
      %v4113 = vmul.f32 %v3786, 1.442695
      %v4114 = vpow.pop %v4113
      %v4115 = vmul.f32 %v3787, 1.442695
      %v4116 = vpow.pop %v4115
      %v4117 = vmul.f32 %v3788, 1.442695
      %v4118 = vpow.pop %v4117
      %v4119 = vmul.f32 %v3789, 1.442695
      %v4120 = vpow.pop %v4119
      %v4121 = vmul.f32 %v3790, 1.442695
      %v4122 = vpow.pop %v4121
      %v4123 = vmul.f32 %v3791, 1.442695
      %v4124 = vpow.pop %v4123
      %v4125 = vmul.f32 %v3792, 1.442695
      %v4126 = vpow.pop %v4125
      %v4127 = vmul.f32 %v3793, 1.442695
      %v4128 = vpow.pop %v4127
      %v4129 = vmul.f32 %v3794, 1.442695
      %v4130 = vpow.pop %v4129
      %v4131 = vmul.f32 %v3795, 1.442695
      %v4132 = vpow.pop %v4131
      %v4133 = vmul.f32 %v3796, 1.442695
      %v4134 = vpow.pop %v4133
      %v4135 = vmul.f32 %v3797, 1.442695
      %v4136 = vpow.pop %v4135
      %v4137 = vmul.f32 %v3798, 1.442695
      %v4138 = vpow.pop %v4137
      %v4139 = vmul.f32 %v3799, 1.442695
      %v4140 = vpow.pop %v4139
      %v4141 = vmul.f32 %v3800, 1.442695
      %v4142 = vpow.pop %v4141
      %v4143 = vmul.f32 %v3801, 1.442695
      %v4144 = vpow.pop %v4143
      %v4145 = vmul.f32 %v3802, 1.442695
      %v4146 = vpow.pop %v4145
      %v4147 = vmul.f32 %v3803, 1.442695
      %v4148 = vpow.pop %v4147
      %v4149 = vmul.f32 %v3804, 1.442695
      %v4150 = vpow.pop %v4149
      %v4151 = vmul.f32 %v3805, 1.442695
      %v4152 = vpow.pop %v4151
      %v4153 = vmul.f32 %v3806, 1.442695
      %v4154 = vpow.pop %v4153
      %v4155 = vmul.f32 %v3807, 1.442695
      %v4156 = vpow.pop %v4155
      %v4157 = vmul.f32 %v3808, 1.442695
      %v4158 = vpow.pop %v4157
      %v4159 = vmul.f32 %v3809, 1.442695
      %v4160 = vpow.pop %v4159
      %v4161 = vmul.f32 %v3810, 1.442695
      %v4162 = vpow.pop %v4161
      %v4163 = vmul.f32 %v3811, 1.442695
      %v4164 = vpow.pop %v4163
      %v4165 = vmul.f32 %v3812, 1.442695
      %v4166 = vpow.pop %v4165
      %v4167 = vmul.f32 %v3813, 1.442695
      %v4168 = vpow.pop %v4167
      %v4169 = vmul.f32 %v3814, 1.442695
      %v4170 = vpow.pop %v4169
      %v4171 = vmul.f32 %v3815, 1.442695
      %v4172 = vpow.pop %v4171
      %v4173 = vmul.f32 %v3816, 1.442695
      %v4174 = vpow.pop %v4173
      %v4175 = vmul.f32 %v3817, 1.442695
      %v4176 = vpow.pop %v4175
      %v4177 = vmul.f32 %v3818, 1.442695
      %v4178 = vpow.pop %v4177
      %v4179 = vmul.f32 %v3819, 1.442695
      %v4180 = vpow.pop %v4179
      %v4181 = vmul.f32 %v3820, 1.442695
      %v4182 = vpow.pop %v4181
      %v4183 = vmul.f32 %v3821, 1.442695
      %v4184 = vpow.pop %v4183
      %v4185 = vmul.f32 %v3822, 1.442695
      %v4186 = vpow.pop %v4185
      %v4187 = vmul.f32 %v3823, 1.442695
      %v4188 = vpow.pop %v4187
      %v4189 = vmul.f32 %v3824, 1.442695
      %v4190 = vpow.pop %v4189
      %v4191 = vmul.f32 %v3825, 1.442695
      %v4192 = vpow.pop %v4191
      %v4193 = vmul.f32 %v3826, 1.442695
      %v4194 = vpow.pop %v4193
      %v4195 = vmul.f32 %v3827, 1.442695
      %v4196 = vpow.pop %v4195
      %v4197 = vmul.f32 %v3828, 1.442695
      %v4198 = vpow.pop %v4197
      %v4199 = vmul.f32 %v3829, 1.442695
      %v4200 = vpow.pop %v4199
      %v4201 = vmul.f32 %v3830, 1.442695
      %v4202 = vpow.pop %v4201
      %v4203 = vmul.f32 %v3831, 1.442695
      %v4204 = vpow.pop %v4203
      %v4205 = vmul.f32 %v3832, 1.442695
      %v4206 = vpow.pop %v4205
      %v4207 = vmul.f32 %v3833, 1.442695
      %v4208 = vpow.pop %v4207
      %v4209 = vmul.f32 %v3834, 1.442695
      %v4210 = vpow.pop %v4209
      %v4211 = vmul.f32 %v3835, 1.442695
      %v4212 = vpow.pop %v4211
      %v4213 = vmul.f32 %v3836, 1.442695
      %v4214 = vpow.pop %v4213
      %v4215 = vmul.f32 %v3837, 1.442695
      %v4216 = vpow.pop %v4215
      %v4217 = vmul.f32 %v3838, 1.442695
      %v4218 = vpow.pop %v4217
      %v4219 = vmul.f32 %v3839, 1.442695
      %v4220 = vpow.pop %v4219
      %v4221 = vmul.f32 %v3840, 1.442695
      %v4222 = vpow.pop %v4221
      %v4223 = vmul.f32 %v3841, 1.442695
      %v4224 = vpow.pop %v4223
      %v4225 = vmul.f32 %v3842, 1.442695
      %v4226 = vpow.pop %v4225
      %v4227 = vmul.f32 %v3267, %v3844
      %v4228 = vmul.f32 %v3268, %v3846
      %v4229 = vmul.f32 %v3269, %v3848
      %v4230 = vmul.f32 %v3270, %v3850
      %v4231 = vmul.f32 %v3271, %v3852
      %v4232 = vmul.f32 %v3272, %v3854
      %v4233 = vmul.f32 %v3273, %v3856
      %v4234 = vmul.f32 %v3274, %v3858
      %v4235 = vmul.f32 %v3275, %v3860
      %v4236 = vmul.f32 %v3276, %v3862
      %v4237 = vmul.f32 %v3277, %v3864
      %v4238 = vmul.f32 %v3278, %v3866
      %v4239 = vmul.f32 %v3279, %v3868
      %v4240 = vmul.f32 %v3280, %v3870
      %v4241 = vmul.f32 %v3281, %v3872
      %v4242 = vmul.f32 %v3282, %v3874
      %v4243 = vmul.f32 %v3283, %v3876
      %v4244 = vmul.f32 %v3284, %v3878
      %v4245 = vmul.f32 %v3285, %v3880
      %v4246 = vmul.f32 %v3286, %v3882
      %v4247 = vmul.f32 %v3287, %v3884
      %v4248 = vmul.f32 %v3288, %v3886
      %v4249 = vmul.f32 %v3289, %v3888
      %v4250 = vmul.f32 %v3290, %v3890
      %v4251 = vmul.f32 %v3291, %v3892
      %v4252 = vmul.f32 %v3292, %v3894
      %v4253 = vmul.f32 %v3293, %v3896
      %v4254 = vmul.f32 %v3294, %v3898
      %v4255 = vmul.f32 %v3295, %v3900
      %v4256 = vmul.f32 %v3296, %v3902
      %v4257 = vmul.f32 %v3297, %v3904
      %v4258 = vmul.f32 %v3298, %v3906
      %v4259 = vmul.f32 %v3299, %v3908
      %v4260 = vmul.f32 %v3300, %v3910
      %v4261 = vmul.f32 %v3301, %v3912
      %v4262 = vmul.f32 %v3302, %v3914
      %v4263 = vmul.f32 %v3303, %v3916
      %v4264 = vmul.f32 %v3304, %v3918
      %v4265 = vmul.f32 %v3305, %v3920
      %v4266 = vmul.f32 %v3306, %v3922
      %v4267 = vmul.f32 %v3307, %v3924
      %v4268 = vmul.f32 %v3308, %v3926
      %v4269 = vmul.f32 %v3309, %v3928
      %v4270 = vmul.f32 %v3310, %v3930
      %v4271 = vmul.f32 %v3311, %v3932
      %v4272 = vmul.f32 %v3312, %v3934
      %v4273 = vmul.f32 %v3313, %v3936
      %v4274 = vmul.f32 %v3314, %v3938
      %v4275 = vmul.f32 %v3315, %v3940
      %v4276 = vmul.f32 %v3316, %v3942
      %v4277 = vmul.f32 %v3317, %v3944
      %v4278 = vmul.f32 %v3318, %v3946
      %v4279 = vmul.f32 %v3319, %v3948
      %v4280 = vmul.f32 %v3320, %v3950
      %v4281 = vmul.f32 %v3321, %v3952
      %v4282 = vmul.f32 %v3322, %v3954
      %v4283 = vmul.f32 %v3323, %v3956
      %v4284 = vmul.f32 %v3324, %v3958
      %v4285 = vmul.f32 %v3325, %v3960
      %v4286 = vmul.f32 %v3326, %v3962
      %v4287 = vmul.f32 %v3327, %v3964
      %v4288 = vmul.f32 %v3328, %v3966
      %v4289 = vmul.f32 %v3329, %v3968
      %v4290 = vmul.f32 %v3330, %v3970
      %v4291 = vmul.f32 %v3331, %v3972
      %v4292 = vmul.f32 %v3332, %v3974
      %v4293 = vmul.f32 %v3333, %v3976
      %v4294 = vmul.f32 %v3334, %v3978
      %v4295 = vmul.f32 %v3335, %v3980
      %v4296 = vmul.f32 %v3336, %v3982
      %v4297 = vmul.f32 %v3337, %v3984
      %v4298 = vmul.f32 %v3338, %v3986
      %v4299 = vmul.f32 %v3339, %v3988
      %v4300 = vmul.f32 %v3340, %v3990
      %v4301 = vmul.f32 %v3341, %v3992
      %v4302 = vmul.f32 %v3342, %v3994
      %v4303 = vmul.f32 %v3343, %v3996
      %v4304 = vmul.f32 %v3344, %v3998
      %v4305 = vmul.f32 %v3345, %v4000
      %v4306 = vmul.f32 %v3346, %v4002
      %v4307 = vmul.f32 %v3347, %v4004
      %v4308 = vmul.f32 %v3348, %v4006
      %v4309 = vmul.f32 %v3349, %v4008
      %v4310 = vmul.f32 %v3350, %v4010
      %v4311 = vmul.f32 %v3351, %v4012
      %v4312 = vmul.f32 %v3352, %v4014
      %v4313 = vmul.f32 %v3353, %v4016
      %v4314 = vmul.f32 %v3354, %v4018
      %v4315 = vmul.f32 %v3355, %v4020
      %v4316 = vmul.f32 %v3356, %v4022
      %v4317 = vmul.f32 %v3357, %v4024
      %v4318 = vmul.f32 %v3358, %v4026
      %v4319 = vmul.f32 %v3359, %v4028
      %v4320 = vmul.f32 %v3360, %v4030
      %v4321 = vmul.f32 %v3361, %v4032
      %v4322 = vmul.f32 %v3362, %v4034
      %v4323 = vmul.f32 %v3363, %v4036
      %v4324 = vmul.f32 %v3364, %v4038
      %v4325 = vmul.f32 %v3365, %v4040
      %v4326 = vmul.f32 %v3366, %v4042
      %v4327 = vmul.f32 %v3367, %v4044
      %v4328 = vmul.f32 %v3368, %v4046
      %v4329 = vmul.f32 %v3369, %v4048
      %v4330 = vmul.f32 %v3370, %v4050
      %v4331 = vmul.f32 %v3371, %v4052
      %v4332 = vmul.f32 %v3372, %v4054
      %v4333 = vmul.f32 %v3373, %v4056
      %v4334 = vmul.f32 %v3374, %v4058
      %v4335 = vmul.f32 %v3375, %v4060
      %v4336 = vmul.f32 %v3376, %v4062
      %v4337 = vmul.f32 %v3377, %v4064
      %v4338 = vmul.f32 %v3378, %v4066
      %v4339 = vmul.f32 %v3379, %v4068
      %v4340 = vmul.f32 %v3380, %v4070
      %v4341 = vmul.f32 %v3381, %v4072
      %v4342 = vmul.f32 %v3382, %v4074
      %v4343 = vmul.f32 %v3383, %v4076
      %v4344 = vmul.f32 %v3384, %v4078
      %v4345 = vmul.f32 %v3385, %v4080
      %v4346 = vmul.f32 %v3386, %v4082
      %v4347 = vmul.f32 %v3387, %v4084
      %v4348 = vmul.f32 %v3388, %v4086
      %v4349 = vmul.f32 %v3389, %v4088
      %v4350 = vmul.f32 %v3390, %v4090
      %v4351 = vmul.f32 %v3391, %v4092
      %v4352 = vmul.f32 %v3392, %v4094
      %v4353 = vmul.f32 %v3393, %v4096
      %v4354 = vmul.f32 %v3394, %v4098
      %v4355 = vmul.f32 %v3395, %v4100
      %v4356 = vmul.f32 %v3396, %v4102
      %v4357 = vmul.f32 %v3397, %v4104
      %v4358 = vmul.f32 %v3398, %v4106
      %v4359 = vmul.f32 %v3399, %v4108
      %v4360 = vmul.f32 %v3400, %v4110
      %v4361 = vmul.f32 %v3401, %v4112
      %v4362 = vmul.f32 %v3402, %v4114
      %v4363 = vmul.f32 %v3403, %v4116
      %v4364 = vmul.f32 %v3404, %v4118
      %v4365 = vmul.f32 %v3405, %v4120
      %v4366 = vmul.f32 %v3406, %v4122
      %v4367 = vmul.f32 %v3407, %v4124
      %v4368 = vmul.f32 %v3408, %v4126
      %v4369 = vmul.f32 %v3409, %v4128
      %v4370 = vmul.f32 %v3410, %v4130
      %v4371 = vmul.f32 %v3411, %v4132
      %v4372 = vmul.f32 %v3412, %v4134
      %v4373 = vmul.f32 %v3413, %v4136
      %v4374 = vmul.f32 %v3414, %v4138
      %v4375 = vmul.f32 %v3415, %v4140
      %v4376 = vmul.f32 %v3416, %v4142
      %v4377 = vmul.f32 %v3417, %v4144
      %v4378 = vmul.f32 %v3418, %v4146
      %v4379 = vmul.f32 %v3419, %v4148
      %v4380 = vmul.f32 %v3420, %v4150
      %v4381 = vmul.f32 %v3421, %v4152
      %v4382 = vmul.f32 %v3422, %v4154
      %v4383 = vmul.f32 %v3423, %v4156
      %v4384 = vmul.f32 %v3424, %v4158
      %v4385 = vmul.f32 %v3425, %v4160
      %v4386 = vmul.f32 %v3426, %v4162
      %v4387 = vmul.f32 %v3427, %v4164
      %v4388 = vmul.f32 %v3428, %v4166
      %v4389 = vmul.f32 %v3429, %v4168
      %v4390 = vmul.f32 %v3430, %v4170
      %v4391 = vmul.f32 %v3431, %v4172
      %v4392 = vmul.f32 %v3432, %v4174
      %v4393 = vmul.f32 %v3433, %v4176
      %v4394 = vmul.f32 %v3434, %v4178
      %v4395 = vmul.f32 %v3435, %v4180
      %v4396 = vmul.f32 %v3436, %v4182
      %v4397 = vmul.f32 %v3437, %v4184
      %v4398 = vmul.f32 %v3438, %v4186
      %v4399 = vmul.f32 %v3439, %v4188
      %v4400 = vmul.f32 %v3440, %v4190
      %v4401 = vmul.f32 %v3441, %v4192
      %v4402 = vmul.f32 %v3442, %v4194
      %v4403 = vmul.f32 %v3443, %v4196
      %v4404 = vmul.f32 %v3444, %v4198
      %v4405 = vmul.f32 %v3445, %v4200
      %v4406 = vmul.f32 %v3446, %v4202
      %v4407 = vmul.f32 %v3447, %v4204
      %v4408 = vmul.f32 %v3448, %v4206
      %v4409 = vmul.f32 %v3449, %v4208
      %v4410 = vmul.f32 %v3450, %v4210
      %v4411 = vmul.f32 %v3451, %v4212
      %v4412 = vmul.f32 %v3452, %v4214
      %v4413 = vmul.f32 %v3453, %v4216
      %v4414 = vmul.f32 %v3454, %v4218
      %v4415 = vmul.f32 %v3455, %v4220
      %v4416 = vmul.f32 %v3456, %v4222
      %v4417 = vmul.f32 %v3457, %v4224
      %v4418 = vmul.f32 %v3458, %v4226
      %v4419 = vsub.f32 1.0, %v4227
      %v4420 = vsub.f32 1.0, %v4228
      %v4421 = vsub.f32 1.0, %v4229
      %v4422 = vsub.f32 1.0, %v4230
      %v4423 = vsub.f32 1.0, %v4231
      %v4424 = vsub.f32 1.0, %v4232
      %v4425 = vsub.f32 1.0, %v4233
      %v4426 = vsub.f32 1.0, %v4234
      %v4427 = vsub.f32 1.0, %v4235
      %v4428 = vsub.f32 1.0, %v4236
      %v4429 = vsub.f32 1.0, %v4237
      %v4430 = vsub.f32 1.0, %v4238
      %v4431 = vsub.f32 1.0, %v4239
      %v4432 = vsub.f32 1.0, %v4240
      %v4433 = vsub.f32 1.0, %v4241
      %v4434 = vsub.f32 1.0, %v4242
      %v4435 = vsub.f32 1.0, %v4243
      %v4436 = vsub.f32 1.0, %v4244
      %v4437 = vsub.f32 1.0, %v4245
      %v4438 = vsub.f32 1.0, %v4246
      %v4439 = vsub.f32 1.0, %v4247
      %v4440 = vsub.f32 1.0, %v4248
      %v4441 = vsub.f32 1.0, %v4249
      %v4442 = vsub.f32 1.0, %v4250
      %v4443 = vsub.f32 1.0, %v4251
      %v4444 = vsub.f32 1.0, %v4252
      %v4445 = vsub.f32 1.0, %v4253
      %v4446 = vsub.f32 1.0, %v4254
      %v4447 = vsub.f32 1.0, %v4255
      %v4448 = vsub.f32 1.0, %v4256
      %v4449 = vsub.f32 1.0, %v4257
      %v4450 = vsub.f32 1.0, %v4258
      %v4451 = vsub.f32 1.0, %v4259
      %v4452 = vsub.f32 1.0, %v4260
      %v4453 = vsub.f32 1.0, %v4261
      %v4454 = vsub.f32 1.0, %v4262
      %v4455 = vsub.f32 1.0, %v4263
      %v4456 = vsub.f32 1.0, %v4264
      %v4457 = vsub.f32 1.0, %v4265
      %v4458 = vsub.f32 1.0, %v4266
      %v4459 = vsub.f32 1.0, %v4267
      %v4460 = vsub.f32 1.0, %v4268
      %v4461 = vsub.f32 1.0, %v4269
      %v4462 = vsub.f32 1.0, %v4270
      %v4463 = vsub.f32 1.0, %v4271
      %v4464 = vsub.f32 1.0, %v4272
      %v4465 = vsub.f32 1.0, %v4273
      %v4466 = vsub.f32 1.0, %v4274
      %v4467 = vsub.f32 1.0, %v4275
      %v4468 = vsub.f32 1.0, %v4276
      %v4469 = vsub.f32 1.0, %v4277
      %v4470 = vsub.f32 1.0, %v4278
      %v4471 = vsub.f32 1.0, %v4279
      %v4472 = vsub.f32 1.0, %v4280
      %v4473 = vsub.f32 1.0, %v4281
      %v4474 = vsub.f32 1.0, %v4282
      %v4475 = vsub.f32 1.0, %v4283
      %v4476 = vsub.f32 1.0, %v4284
      %v4477 = vsub.f32 1.0, %v4285
      %v4478 = vsub.f32 1.0, %v4286
      %v4479 = vsub.f32 1.0, %v4287
      %v4480 = vsub.f32 1.0, %v4288
      %v4481 = vsub.f32 1.0, %v4289
      %v4482 = vsub.f32 1.0, %v4290
      %v4483 = vsub.f32 1.0, %v4291
      %v4484 = vsub.f32 1.0, %v4292
      %v4485 = vsub.f32 1.0, %v4293
      %v4486 = vsub.f32 1.0, %v4294
      %v4487 = vsub.f32 1.0, %v4295
      %v4488 = vsub.f32 1.0, %v4296
      %v4489 = vsub.f32 1.0, %v4297
      %v4490 = vsub.f32 1.0, %v4298
      %v4491 = vsub.f32 1.0, %v4299
      %v4492 = vsub.f32 1.0, %v4300
      %v4493 = vsub.f32 1.0, %v4301
      %v4494 = vsub.f32 1.0, %v4302
      %v4495 = vsub.f32 1.0, %v4303
      %v4496 = vsub.f32 1.0, %v4304
      %v4497 = vsub.f32 1.0, %v4305
      %v4498 = vsub.f32 1.0, %v4306
      %v4499 = vsub.f32 1.0, %v4307
      %v4500 = vsub.f32 1.0, %v4308
      %v4501 = vsub.f32 1.0, %v4309
      %v4502 = vsub.f32 1.0, %v4310
      %v4503 = vsub.f32 1.0, %v4311
      %v4504 = vsub.f32 1.0, %v4312
      %v4505 = vsub.f32 1.0, %v4313
      %v4506 = vsub.f32 1.0, %v4314
      %v4507 = vsub.f32 1.0, %v4315
      %v4508 = vsub.f32 1.0, %v4316
      %v4509 = vsub.f32 1.0, %v4317
      %v4510 = vsub.f32 1.0, %v4318
      %v4511 = vsub.f32 1.0, %v4319
      %v4512 = vsub.f32 1.0, %v4320
      %v4513 = vsub.f32 1.0, %v4321
      %v4514 = vsub.f32 1.0, %v4322
      %v4515 = vsub.f32 1.0, %v4323
      %v4516 = vsub.f32 1.0, %v4324
      %v4517 = vsub.f32 1.0, %v4325
      %v4518 = vsub.f32 1.0, %v4326
      %v4519 = vsub.f32 1.0, %v4327
      %v4520 = vsub.f32 1.0, %v4328
      %v4521 = vsub.f32 1.0, %v4329
      %v4522 = vsub.f32 1.0, %v4330
      %v4523 = vsub.f32 1.0, %v4331
      %v4524 = vsub.f32 1.0, %v4332
      %v4525 = vsub.f32 1.0, %v4333
      %v4526 = vsub.f32 1.0, %v4334
      %v4527 = vsub.f32 1.0, %v4335
      %v4528 = vsub.f32 1.0, %v4336
      %v4529 = vsub.f32 1.0, %v4337
      %v4530 = vsub.f32 1.0, %v4338
      %v4531 = vsub.f32 1.0, %v4339
      %v4532 = vsub.f32 1.0, %v4340
      %v4533 = vsub.f32 1.0, %v4341
      %v4534 = vsub.f32 1.0, %v4342
      %v4535 = vsub.f32 1.0, %v4343
      %v4536 = vsub.f32 1.0, %v4344
      %v4537 = vsub.f32 1.0, %v4345
      %v4538 = vsub.f32 1.0, %v4346
      %v4539 = vsub.f32 1.0, %v4347
      %v4540 = vsub.f32 1.0, %v4348
      %v4541 = vsub.f32 1.0, %v4349
      %v4542 = vsub.f32 1.0, %v4350
      %v4543 = vsub.f32 1.0, %v4351
      %v4544 = vsub.f32 1.0, %v4352
      %v4545 = vsub.f32 1.0, %v4353
      %v4546 = vsub.f32 1.0, %v4354
      %v4547 = vsub.f32 1.0, %v4355
      %v4548 = vsub.f32 1.0, %v4356
      %v4549 = vsub.f32 1.0, %v4357
      %v4550 = vsub.f32 1.0, %v4358
      %v4551 = vsub.f32 1.0, %v4359
      %v4552 = vsub.f32 1.0, %v4360
      %v4553 = vsub.f32 1.0, %v4361
      %v4554 = vsub.f32 1.0, %v4362
      %v4555 = vsub.f32 1.0, %v4363
      %v4556 = vsub.f32 1.0, %v4364
      %v4557 = vsub.f32 1.0, %v4365
      %v4558 = vsub.f32 1.0, %v4366
      %v4559 = vsub.f32 1.0, %v4367
      %v4560 = vsub.f32 1.0, %v4368
      %v4561 = vsub.f32 1.0, %v4369
      %v4562 = vsub.f32 1.0, %v4370
      %v4563 = vsub.f32 1.0, %v4371
      %v4564 = vsub.f32 1.0, %v4372
      %v4565 = vsub.f32 1.0, %v4373
      %v4566 = vsub.f32 1.0, %v4374
      %v4567 = vsub.f32 1.0, %v4375
      %v4568 = vsub.f32 1.0, %v4376
      %v4569 = vsub.f32 1.0, %v4377
      %v4570 = vsub.f32 1.0, %v4378
      %v4571 = vsub.f32 1.0, %v4379
      %v4572 = vsub.f32 1.0, %v4380
      %v4573 = vsub.f32 1.0, %v4381
      %v4574 = vsub.f32 1.0, %v4382
      %v4575 = vsub.f32 1.0, %v4383
      %v4576 = vsub.f32 1.0, %v4384
      %v4577 = vsub.f32 1.0, %v4385
      %v4578 = vsub.f32 1.0, %v4386
      %v4579 = vsub.f32 1.0, %v4387
      %v4580 = vsub.f32 1.0, %v4388
      %v4581 = vsub.f32 1.0, %v4389
      %v4582 = vsub.f32 1.0, %v4390
      %v4583 = vsub.f32 1.0, %v4391
      %v4584 = vsub.f32 1.0, %v4392
      %v4585 = vsub.f32 1.0, %v4393
      %v4586 = vsub.f32 1.0, %v4394
      %v4587 = vsub.f32 1.0, %v4395
      %v4588 = vsub.f32 1.0, %v4396
      %v4589 = vsub.f32 1.0, %v4397
      %v4590 = vsub.f32 1.0, %v4398
      %v4591 = vsub.f32 1.0, %v4399
      %v4592 = vsub.f32 1.0, %v4400
      %v4593 = vsub.f32 1.0, %v4401
      %v4594 = vsub.f32 1.0, %v4402
      %v4595 = vsub.f32 1.0, %v4403
      %v4596 = vsub.f32 1.0, %v4404
      %v4597 = vsub.f32 1.0, %v4405
      %v4598 = vsub.f32 1.0, %v4406
      %v4599 = vsub.f32 1.0, %v4407
      %v4600 = vsub.f32 1.0, %v4408
      %v4601 = vsub.f32 1.0, %v4409
      %v4602 = vsub.f32 1.0, %v4410
      %v4603 = vsub.f32 1.0, %v4411
      %v4604 = vsub.f32 1.0, %v4412
      %v4605 = vsub.f32 1.0, %v4413
      %v4606 = vsub.f32 1.0, %v4414
      %v4607 = vsub.f32 1.0, %v4415
      %v4608 = vsub.f32 1.0, %v4416
      %v4609 = vsub.f32 1.0, %v4417
      %v4610 = vsub.f32 1.0, %v4418
      %v4611 = vmul.f32 %v315, 0.5
      %v4612 = vmul.f32 %v334, 0.5
      %v4613 = vmul.f32 %v353, 0.5
      %v4614 = vmul.f32 %v372, 0.5
      %v4615 = vmul.f32 %v391, 0.5
      %v4616 = vmul.f32 %v410, 0.5
      %v4617 = vmul.f32 %v317, 0.5
      %v4618 = vmul.f32 %v336, 0.5
      %v4619 = vmul.f32 %v355, 0.5
      %v4620 = vmul.f32 %v374, 0.5
      %v4621 = vmul.f32 %v393, 0.5
      %v4622 = vmul.f32 %v412, 0.5
      %v4623 = vmul.f32 %v320, 0.5
      %v4624 = vmul.f32 %v339, 0.5
      %v4625 = vmul.f32 %v358, 0.5
      %v4626 = vmul.f32 %v377, 0.5
      %v4627 = vmul.f32 %v396, 0.5
      %v4628 = vmul.f32 %v415, 0.5
      %v4629 = vmul.f32 %v322, 0.5
      %v4630 = vmul.f32 %v341, 0.5
      %v4631 = vmul.f32 %v360, 0.5
      %v4632 = vmul.f32 %v379, 0.5
      %v4633 = vmul.f32 %v398, 0.5
      %v4634 = vmul.f32 %v417, 0.5
      %v4635 = vmul.f32 %v475, 0.5
      %v4636 = vmul.f32 %v494, 0.5
      %v4637 = vmul.f32 %v513, 0.5
      %v4638 = vmul.f32 %v532, 0.5
      %v4639 = vmul.f32 %v551, 0.5
      %v4640 = vmul.f32 %v570, 0.5
      %v4641 = vmul.f32 %v477, 0.5
      %v4642 = vmul.f32 %v496, 0.5
      %v4643 = vmul.f32 %v515, 0.5
      %v4644 = vmul.f32 %v534, 0.5
      %v4645 = vmul.f32 %v553, 0.5
      %v4646 = vmul.f32 %v572, 0.5
      %v4647 = vmul.f32 %v480, 0.5
      %v4648 = vmul.f32 %v499, 0.5
      %v4649 = vmul.f32 %v518, 0.5
      %v4650 = vmul.f32 %v537, 0.5
      %v4651 = vmul.f32 %v556, 0.5
      %v4652 = vmul.f32 %v575, 0.5
      %v4653 = vmul.f32 %v482, 0.5
      %v4654 = vmul.f32 %v501, 0.5
      %v4655 = vmul.f32 %v520, 0.5
      %v4656 = vmul.f32 %v539, 0.5
      %v4657 = vmul.f32 %v558, 0.5
      %v4658 = vmul.f32 %v577, 0.5
      %v4659 = vmul.f32 %v635, 0.5
      %v4660 = vmul.f32 %v654, 0.5
      %v4661 = vmul.f32 %v673, 0.5
      %v4662 = vmul.f32 %v692, 0.5
      %v4663 = vmul.f32 %v711, 0.5
      %v4664 = vmul.f32 %v730, 0.5
      %v4665 = vmul.f32 %v637, 0.5
      %v4666 = vmul.f32 %v656, 0.5
      %v4667 = vmul.f32 %v675, 0.5
      %v4668 = vmul.f32 %v694, 0.5
      %v4669 = vmul.f32 %v713, 0.5
      %v4670 = vmul.f32 %v732, 0.5
      %v4671 = vmul.f32 %v640, 0.5
      %v4672 = vmul.f32 %v659, 0.5
      %v4673 = vmul.f32 %v678, 0.5
      %v4674 = vmul.f32 %v697, 0.5
      %v4675 = vmul.f32 %v716, 0.5
      %v4676 = vmul.f32 %v735, 0.5
      %v4677 = vmul.f32 %v642, 0.5
      %v4678 = vmul.f32 %v661, 0.5
      %v4679 = vmul.f32 %v680, 0.5
      %v4680 = vmul.f32 %v699, 0.5
      %v4681 = vmul.f32 %v718, 0.5
      %v4682 = vmul.f32 %v737, 0.5
      %v4683 = vmul.f32 %v795, 0.5
      %v4684 = vmul.f32 %v814, 0.5
      %v4685 = vmul.f32 %v833, 0.5
      %v4686 = vmul.f32 %v852, 0.5
      %v4687 = vmul.f32 %v871, 0.5
      %v4688 = vmul.f32 %v890, 0.5
      %v4689 = vmul.f32 %v797, 0.5
      %v4690 = vmul.f32 %v816, 0.5
      %v4691 = vmul.f32 %v835, 0.5
      %v4692 = vmul.f32 %v854, 0.5
      %v4693 = vmul.f32 %v873, 0.5
      %v4694 = vmul.f32 %v892, 0.5
      %v4695 = vmul.f32 %v800, 0.5
      %v4696 = vmul.f32 %v819, 0.5
      %v4697 = vmul.f32 %v838, 0.5
      %v4698 = vmul.f32 %v857, 0.5
      %v4699 = vmul.f32 %v876, 0.5
      %v4700 = vmul.f32 %v895, 0.5
      %v4701 = vmul.f32 %v802, 0.5
      %v4702 = vmul.f32 %v821, 0.5
      %v4703 = vmul.f32 %v840, 0.5
      %v4704 = vmul.f32 %v859, 0.5
      %v4705 = vmul.f32 %v878, 0.5
      %v4706 = vmul.f32 %v897, 0.5
      %v4707 = vmul.f32 %v955, 0.5
      %v4708 = vmul.f32 %v974, 0.5
      %v4709 = vmul.f32 %v993, 0.5
      %v4710 = vmul.f32 %v1012, 0.5
      %v4711 = vmul.f32 %v1031, 0.5
      %v4712 = vmul.f32 %v1050, 0.5
      %v4713 = vmul.f32 %v957, 0.5
      %v4714 = vmul.f32 %v976, 0.5
      %v4715 = vmul.f32 %v995, 0.5
      %v4716 = vmul.f32 %v1014, 0.5
      %v4717 = vmul.f32 %v1033, 0.5
      %v4718 = vmul.f32 %v1052, 0.5
      %v4719 = vmul.f32 %v960, 0.5
      %v4720 = vmul.f32 %v979, 0.5
      %v4721 = vmul.f32 %v998, 0.5
      %v4722 = vmul.f32 %v1017, 0.5
      %v4723 = vmul.f32 %v1036, 0.5
      %v4724 = vmul.f32 %v1055, 0.5
      %v4725 = vmul.f32 %v962, 0.5
      %v4726 = vmul.f32 %v981, 0.5
      %v4727 = vmul.f32 %v1000, 0.5
      %v4728 = vmul.f32 %v1019, 0.5
      %v4729 = vmul.f32 %v1038, 0.5
      %v4730 = vmul.f32 %v1057, 0.5
      %v4731 = vmul.f32 %v1115, 0.5
      %v4732 = vmul.f32 %v1134, 0.5
      %v4733 = vmul.f32 %v1153, 0.5
      %v4734 = vmul.f32 %v1172, 0.5
      %v4735 = vmul.f32 %v1191, 0.5
      %v4736 = vmul.f32 %v1210, 0.5
      %v4737 = vmul.f32 %v1117, 0.5
      %v4738 = vmul.f32 %v1136, 0.5
      %v4739 = vmul.f32 %v1155, 0.5
      %v4740 = vmul.f32 %v1174, 0.5
      %v4741 = vmul.f32 %v1193, 0.5
      %v4742 = vmul.f32 %v1212, 0.5
      %v4743 = vmul.f32 %v1120, 0.5
      %v4744 = vmul.f32 %v1139, 0.5
      %v4745 = vmul.f32 %v1158, 0.5
      %v4746 = vmul.f32 %v1177, 0.5
      %v4747 = vmul.f32 %v1196, 0.5
      %v4748 = vmul.f32 %v1215, 0.5
      %v4749 = vmul.f32 %v1122, 0.5
      %v4750 = vmul.f32 %v1141, 0.5
      %v4751 = vmul.f32 %v1160, 0.5
      %v4752 = vmul.f32 %v1179, 0.5
      %v4753 = vmul.f32 %v1198, 0.5
      %v4754 = vmul.f32 %v1217, 0.5
      %v4755 = vmul.f32 %v1275, 0.5
      %v4756 = vmul.f32 %v1294, 0.5
      %v4757 = vmul.f32 %v1313, 0.5
      %v4758 = vmul.f32 %v1332, 0.5
      %v4759 = vmul.f32 %v1351, 0.5
      %v4760 = vmul.f32 %v1370, 0.5
      %v4761 = vmul.f32 %v1277, 0.5
      %v4762 = vmul.f32 %v1296, 0.5
      %v4763 = vmul.f32 %v1315, 0.5
      %v4764 = vmul.f32 %v1334, 0.5
      %v4765 = vmul.f32 %v1353, 0.5
      %v4766 = vmul.f32 %v1372, 0.5
      %v4767 = vmul.f32 %v1280, 0.5
      %v4768 = vmul.f32 %v1299, 0.5
      %v4769 = vmul.f32 %v1318, 0.5
      %v4770 = vmul.f32 %v1337, 0.5
      %v4771 = vmul.f32 %v1356, 0.5
      %v4772 = vmul.f32 %v1375, 0.5
      %v4773 = vmul.f32 %v1282, 0.5
      %v4774 = vmul.f32 %v1301, 0.5
      %v4775 = vmul.f32 %v1320, 0.5
      %v4776 = vmul.f32 %v1339, 0.5
      %v4777 = vmul.f32 %v1358, 0.5
      %v4778 = vmul.f32 %v1377, 0.5
      %v4779 = vmul.f32 %v1435, 0.5
      %v4780 = vmul.f32 %v1454, 0.5
      %v4781 = vmul.f32 %v1473, 0.5
      %v4782 = vmul.f32 %v1492, 0.5
      %v4783 = vmul.f32 %v1511, 0.5
      %v4784 = vmul.f32 %v1530, 0.5
      %v4785 = vmul.f32 %v1437, 0.5
      %v4786 = vmul.f32 %v1456, 0.5
      %v4787 = vmul.f32 %v1475, 0.5
      %v4788 = vmul.f32 %v1494, 0.5
      %v4789 = vmul.f32 %v1513, 0.5
      %v4790 = vmul.f32 %v1532, 0.5
      %v4791 = vmul.f32 %v1440, 0.5
      %v4792 = vmul.f32 %v1459, 0.5
      %v4793 = vmul.f32 %v1478, 0.5
      %v4794 = vmul.f32 %v1497, 0.5
      %v4795 = vmul.f32 %v1516, 0.5
      %v4796 = vmul.f32 %v1535, 0.5
      %v4797 = vmul.f32 %v1442, 0.5
      %v4798 = vmul.f32 %v1461, 0.5
      %v4799 = vmul.f32 %v1480, 0.5
      %v4800 = vmul.f32 %v1499, 0.5
      %v4801 = vmul.f32 %v1518, 0.5
      %v4802 = vmul.f32 %v1537, 0.5
      %v4803 = vmul.f32 %v1539, 0.5
      %v4804 = vmul.f32 %v1540, 0.5
      %v4805 = vmul.f32 %v1541, 0.5
      %v4806 = vmul.f32 %v1542, 0.5
      %v4807 = vmul.f32 %v1543, 0.5
      %v4808 = vmul.f32 %v1544, 0.5
      %v4809 = vmul.f32 %v1545, 0.5
      %v4810 = vmul.f32 %v1546, 0.5
      %v4811 = vmul.f32 %v1547, 0.5
      %v4812 = vmul.f32 %v1548, 0.5
      %v4813 = vmul.f32 %v1549, 0.5
      %v4814 = vmul.f32 %v1550, 0.5
      %v4815 = vmul.f32 %v1551, 0.5
      %v4816 = vmul.f32 %v1552, 0.5
      %v4817 = vmul.f32 %v1553, 0.5
      %v4818 = vmul.f32 %v1554, 0.5
      %v4819 = vmul.f32 %v1555, 0.5
      %v4820 = vmul.f32 %v1556, 0.5
      %v4821 = vmul.f32 %v1557, 0.5
      %v4822 = vmul.f32 %v1558, 0.5
      %v4823 = vmul.f32 %v1559, 0.5
      %v4824 = vmul.f32 %v1560, 0.5
      %v4825 = vmul.f32 %v1561, 0.5
      %v4826 = vmul.f32 %v1562, 0.5
      %v4827 = vmul.f32 %v1563, 0.5
      %v4828 = vmul.f32 %v1564, 0.5
      %v4829 = vmul.f32 %v1565, 0.5
      %v4830 = vmul.f32 %v1566, 0.5
      %v4831 = vmul.f32 %v1567, 0.5
      %v4832 = vmul.f32 %v1568, 0.5
      %v4833 = vmul.f32 %v1569, 0.5
      %v4834 = vmul.f32 %v1570, 0.5
      %v4835 = vmul.f32 %v1571, 0.5
      %v4836 = vmul.f32 %v1572, 0.5
      %v4837 = vmul.f32 %v1573, 0.5
      %v4838 = vmul.f32 %v1574, 0.5
      %v4839 = vmul.f32 %v1575, 0.5
      %v4840 = vmul.f32 %v1576, 0.5
      %v4841 = vmul.f32 %v1577, 0.5
      %v4842 = vmul.f32 %v1578, 0.5
      %v4843 = vmul.f32 %v1579, 0.5
      %v4844 = vmul.f32 %v1580, 0.5
      %v4845 = vmul.f32 %v1581, 0.5
      %v4846 = vmul.f32 %v1582, 0.5
      %v4847 = vmul.f32 %v1583, 0.5
      %v4848 = vmul.f32 %v1584, 0.5
      %v4849 = vmul.f32 %v1585, 0.5
      %v4850 = vmul.f32 %v1586, 0.5
      %v4851 = vmul.f32 %v1587, 0.5
      %v4852 = vmul.f32 %v1588, 0.5
      %v4853 = vmul.f32 %v1589, 0.5
      %v4854 = vmul.f32 %v1590, 0.5
      %v4855 = vmul.f32 %v1591, 0.5
      %v4856 = vmul.f32 %v1592, 0.5
      %v4857 = vmul.f32 %v1593, 0.5
      %v4858 = vmul.f32 %v1594, 0.5
      %v4859 = vmul.f32 %v1595, 0.5
      %v4860 = vmul.f32 %v1596, 0.5
      %v4861 = vmul.f32 %v1597, 0.5
      %v4862 = vmul.f32 %v1598, 0.5
      %v4863 = vmul.f32 %v1599, 0.5
      %v4864 = vmul.f32 %v1600, 0.5
      %v4865 = vmul.f32 %v1601, 0.5
      %v4866 = vmul.f32 %v1602, 0.5
      %v4867 = vmul.f32 %v1603, 0.5
      %v4868 = vmul.f32 %v1604, 0.5
      %v4869 = vmul.f32 %v1605, 0.5
      %v4870 = vmul.f32 %v1606, 0.5
      %v4871 = vmul.f32 %v1607, 0.5
      %v4872 = vmul.f32 %v1608, 0.5
      %v4873 = vmul.f32 %v1609, 0.5
      %v4874 = vmul.f32 %v1610, 0.5
      %v4875 = vmul.f32 %v1611, 0.5
      %v4876 = vmul.f32 %v1612, 0.5
      %v4877 = vmul.f32 %v1613, 0.5
      %v4878 = vmul.f32 %v1614, 0.5
      %v4879 = vmul.f32 %v1615, 0.5
      %v4880 = vmul.f32 %v1616, 0.5
      %v4881 = vmul.f32 %v1617, 0.5
      %v4882 = vmul.f32 %v1618, 0.5
      %v4883 = vmul.f32 %v1619, 0.5
      %v4884 = vmul.f32 %v1620, 0.5
      %v4885 = vmul.f32 %v1621, 0.5
      %v4886 = vmul.f32 %v1622, 0.5
      %v4887 = vmul.f32 %v1623, 0.5
      %v4888 = vmul.f32 %v1624, 0.5
      %v4889 = vmul.f32 %v1625, 0.5
      %v4890 = vmul.f32 %v1626, 0.5
      %v4891 = vmul.f32 %v1627, 0.5
      %v4892 = vmul.f32 %v1628, 0.5
      %v4893 = vmul.f32 %v1629, 0.5
      %v4894 = vmul.f32 %v1630, 0.5
      %v4895 = vmul.f32 %v1631, 0.5
      %v4896 = vmul.f32 %v1632, 0.5
      %v4897 = vmul.f32 %v1633, 0.5
      %v4898 = vmul.f32 %v1634, 0.5
      %v4899 = vmul.f32 %v1635, 0.5
      %v4900 = vmul.f32 %v1636, 0.5
      %v4901 = vmul.f32 %v1637, 0.5
      %v4902 = vmul.f32 %v1638, 0.5
      %v4903 = vmul.f32 %v1639, 0.5
      %v4904 = vmul.f32 %v1640, 0.5
      %v4905 = vmul.f32 %v1641, 0.5
      %v4906 = vmul.f32 %v1642, 0.5
      %v4907 = vmul.f32 %v1643, 0.5
      %v4908 = vmul.f32 %v1644, 0.5
      %v4909 = vmul.f32 %v1645, 0.5
      %v4910 = vmul.f32 %v1646, 0.5
      %v4911 = vmul.f32 %v1647, 0.5
      %v4912 = vmul.f32 %v1648, 0.5
      %v4913 = vmul.f32 %v1649, 0.5
      %v4914 = vmul.f32 %v1650, 0.5
      %v4915 = vmul.f32 %v1651, 0.5
      %v4916 = vmul.f32 %v1652, 0.5
      %v4917 = vmul.f32 %v1653, 0.5
      %v4918 = vmul.f32 %v1654, 0.5
      %v4919 = vmul.f32 %v1655, 0.5
      %v4920 = vmul.f32 %v1656, 0.5
      %v4921 = vmul.f32 %v1657, 0.5
      %v4922 = vmul.f32 %v1658, 0.5
      %v4923 = vmul.f32 %v1659, 0.5
      %v4924 = vmul.f32 %v1660, 0.5
      %v4925 = vmul.f32 %v1661, 0.5
      %v4926 = vmul.f32 %v1662, 0.5
      %v4927 = vmul.f32 %v1663, 0.5
      %v4928 = vmul.f32 %v1664, 0.5
      %v4929 = vmul.f32 %v1665, 0.5
      %v4930 = vmul.f32 %v1666, 0.5
      %v4931 = vmul.f32 %v1667, 0.5
      %v4932 = vmul.f32 %v1668, 0.5
      %v4933 = vmul.f32 %v1669, 0.5
      %v4934 = vmul.f32 %v1670, 0.5
      %v4935 = vmul.f32 %v1671, 0.5
      %v4936 = vmul.f32 %v1672, 0.5
      %v4937 = vmul.f32 %v1673, 0.5
      %v4938 = vmul.f32 %v1674, 0.5
      %v4939 = vmul.f32 %v1675, 0.5
      %v4940 = vmul.f32 %v1676, 0.5
      %v4941 = vmul.f32 %v1677, 0.5
      %v4942 = vmul.f32 %v1678, 0.5
      %v4943 = vmul.f32 %v1679, 0.5
      %v4944 = vmul.f32 %v1680, 0.5
      %v4945 = vmul.f32 %v1681, 0.5
      %v4946 = vmul.f32 %v1682, 0.5
      %v4947 = vmul.f32 %v1683, 0.5
      %v4948 = vmul.f32 %v1684, 0.5
      %v4949 = vmul.f32 %v1685, 0.5
      %v4950 = vmul.f32 %v1686, 0.5
      %v4951 = vmul.f32 %v1687, 0.5
      %v4952 = vmul.f32 %v1688, 0.5
      %v4953 = vmul.f32 %v1689, 0.5
      %v4954 = vmul.f32 %v1690, 0.5
      %v4955 = vmul.f32 %v1691, 0.5
      %v4956 = vmul.f32 %v1692, 0.5
      %v4957 = vmul.f32 %v1693, 0.5
      %v4958 = vmul.f32 %v1694, 0.5
      %v4959 = vmul.f32 %v1695, 0.5
      %v4960 = vmul.f32 %v1696, 0.5
      %v4961 = vmul.f32 %v1697, 0.5
      %v4962 = vmul.f32 %v1698, 0.5
      %v4963 = vmul.f32 %v1699, 0.5
      %v4964 = vmul.f32 %v1700, 0.5
      %v4965 = vmul.f32 %v1701, 0.5
      %v4966 = vmul.f32 %v1702, 0.5
      %v4967 = vmul.f32 %v1703, 0.5
      %v4968 = vmul.f32 %v1704, 0.5
      %v4969 = vmul.f32 %v1705, 0.5
      %v4970 = vmul.f32 %v1706, 0.5
      %v4971 = vmul.f32 %v1707, 0.5
      %v4972 = vmul.f32 %v1708, 0.5
      %v4973 = vmul.f32 %v1709, 0.5
      %v4974 = vmul.f32 %v1710, 0.5
      %v4975 = vmul.f32 %v1711, 0.5
      %v4976 = vmul.f32 %v1712, 0.5
      %v4977 = vmul.f32 %v1713, 0.5
      %v4978 = vmul.f32 %v1714, 0.5
      %v4979 = vmul.f32 %v1715, 0.5
      %v4980 = vmul.f32 %v1716, 0.5
      %v4981 = vmul.f32 %v1717, 0.5
      %v4982 = vmul.f32 %v1718, 0.5
      %v4983 = vmul.f32 %v1719, 0.5
      %v4984 = vmul.f32 %v1720, 0.5
      %v4985 = vmul.f32 %v1721, 0.5
      %v4986 = vmul.f32 %v1722, 0.5
      %v4987 = vmul.f32 %v1723, 0.5
      %v4988 = vmul.f32 %v1724, 0.5
      %v4989 = vmul.f32 %v1725, 0.5
      %v4990 = vmul.f32 %v1726, 0.5
      %v4991 = vmul.f32 %v1727, 0.5
      %v4992 = vmul.f32 %v1728, 0.5
      %v4993 = vmul.f32 %v1729, 0.5
      %v4994 = vmul.f32 %v1730, 0.5
      %v4995 = vmul.f32 %v4803, %v4419
      %v4996 = vmul.f32 %v4804, %v4420
      %v4997 = vmul.f32 %v4805, %v4421
      %v4998 = vmul.f32 %v4806, %v4422
      %v4999 = vmul.f32 %v4807, %v4423
      %v5000 = vmul.f32 %v4808, %v4424
      %v5001 = vmul.f32 %v4809, %v4425
      %v5002 = vmul.f32 %v4810, %v4426
      %v5003 = vmul.f32 %v4811, %v4427
      %v5004 = vmul.f32 %v4812, %v4428
      %v5005 = vmul.f32 %v4813, %v4429
      %v5006 = vmul.f32 %v4814, %v4430
      %v5007 = vmul.f32 %v4815, %v4431
      %v5008 = vmul.f32 %v4816, %v4432
      %v5009 = vmul.f32 %v4817, %v4433
      %v5010 = vmul.f32 %v4818, %v4434
      %v5011 = vmul.f32 %v4819, %v4435
      %v5012 = vmul.f32 %v4820, %v4436
      %v5013 = vmul.f32 %v4821, %v4437
      %v5014 = vmul.f32 %v4822, %v4438
      %v5015 = vmul.f32 %v4823, %v4439
      %v5016 = vmul.f32 %v4824, %v4440
      %v5017 = vmul.f32 %v4825, %v4441
      %v5018 = vmul.f32 %v4826, %v4442
      %v5019 = vmul.f32 %v4827, %v4443
      %v5020 = vmul.f32 %v4828, %v4444
      %v5021 = vmul.f32 %v4829, %v4445
      %v5022 = vmul.f32 %v4830, %v4446
      %v5023 = vmul.f32 %v4831, %v4447
      %v5024 = vmul.f32 %v4832, %v4448
      %v5025 = vmul.f32 %v4833, %v4449
      %v5026 = vmul.f32 %v4834, %v4450
      %v5027 = vmul.f32 %v4835, %v4451
      %v5028 = vmul.f32 %v4836, %v4452
      %v5029 = vmul.f32 %v4837, %v4453
      %v5030 = vmul.f32 %v4838, %v4454
      %v5031 = vmul.f32 %v4839, %v4455
      %v5032 = vmul.f32 %v4840, %v4456
      %v5033 = vmul.f32 %v4841, %v4457
      %v5034 = vmul.f32 %v4842, %v4458
      %v5035 = vmul.f32 %v4843, %v4459
      %v5036 = vmul.f32 %v4844, %v4460
      %v5037 = vmul.f32 %v4845, %v4461
      %v5038 = vmul.f32 %v4846, %v4462
      %v5039 = vmul.f32 %v4847, %v4463
      %v5040 = vmul.f32 %v4848, %v4464
      %v5041 = vmul.f32 %v4849, %v4465
      %v5042 = vmul.f32 %v4850, %v4466
      %v5043 = vmul.f32 %v4851, %v4467
      %v5044 = vmul.f32 %v4852, %v4468
      %v5045 = vmul.f32 %v4853, %v4469
      %v5046 = vmul.f32 %v4854, %v4470
      %v5047 = vmul.f32 %v4855, %v4471
      %v5048 = vmul.f32 %v4856, %v4472
      %v5049 = vmul.f32 %v4857, %v4473
      %v5050 = vmul.f32 %v4858, %v4474
      %v5051 = vmul.f32 %v4859, %v4475
      %v5052 = vmul.f32 %v4860, %v4476
      %v5053 = vmul.f32 %v4861, %v4477
      %v5054 = vmul.f32 %v4862, %v4478
      %v5055 = vmul.f32 %v4863, %v4479
      %v5056 = vmul.f32 %v4864, %v4480
      %v5057 = vmul.f32 %v4865, %v4481
      %v5058 = vmul.f32 %v4866, %v4482
      %v5059 = vmul.f32 %v4867, %v4483
      %v5060 = vmul.f32 %v4868, %v4484
      %v5061 = vmul.f32 %v4869, %v4485
      %v5062 = vmul.f32 %v4870, %v4486
      %v5063 = vmul.f32 %v4871, %v4487
      %v5064 = vmul.f32 %v4872, %v4488
      %v5065 = vmul.f32 %v4873, %v4489
      %v5066 = vmul.f32 %v4874, %v4490
      %v5067 = vmul.f32 %v4875, %v4491
      %v5068 = vmul.f32 %v4876, %v4492
      %v5069 = vmul.f32 %v4877, %v4493
      %v5070 = vmul.f32 %v4878, %v4494
      %v5071 = vmul.f32 %v4879, %v4495
      %v5072 = vmul.f32 %v4880, %v4496
      %v5073 = vmul.f32 %v4881, %v4497
      %v5074 = vmul.f32 %v4882, %v4498
      %v5075 = vmul.f32 %v4883, %v4499
      %v5076 = vmul.f32 %v4884, %v4500
      %v5077 = vmul.f32 %v4885, %v4501
      %v5078 = vmul.f32 %v4886, %v4502
      %v5079 = vmul.f32 %v4887, %v4503
      %v5080 = vmul.f32 %v4888, %v4504
      %v5081 = vmul.f32 %v4889, %v4505
      %v5082 = vmul.f32 %v4890, %v4506
      %v5083 = vmul.f32 %v4891, %v4507
      %v5084 = vmul.f32 %v4892, %v4508
      %v5085 = vmul.f32 %v4893, %v4509
      %v5086 = vmul.f32 %v4894, %v4510
      %v5087 = vmul.f32 %v4895, %v4511
      %v5088 = vmul.f32 %v4896, %v4512
      %v5089 = vmul.f32 %v4897, %v4513
      %v5090 = vmul.f32 %v4898, %v4514
      %v5091 = vmul.f32 %v4899, %v4515
      %v5092 = vmul.f32 %v4900, %v4516
      %v5093 = vmul.f32 %v4901, %v4517
      %v5094 = vmul.f32 %v4902, %v4518
      %v5095 = vmul.f32 %v4903, %v4519
      %v5096 = vmul.f32 %v4904, %v4520
      %v5097 = vmul.f32 %v4905, %v4521
      %v5098 = vmul.f32 %v4906, %v4522
      %v5099 = vmul.f32 %v4907, %v4523
      %v5100 = vmul.f32 %v4908, %v4524
      %v5101 = vmul.f32 %v4909, %v4525
      %v5102 = vmul.f32 %v4910, %v4526
      %v5103 = vmul.f32 %v4911, %v4527
      %v5104 = vmul.f32 %v4912, %v4528
      %v5105 = vmul.f32 %v4913, %v4529
      %v5106 = vmul.f32 %v4914, %v4530
      %v5107 = vmul.f32 %v4915, %v4531
      %v5108 = vmul.f32 %v4916, %v4532
      %v5109 = vmul.f32 %v4917, %v4533
      %v5110 = vmul.f32 %v4918, %v4534
      %v5111 = vmul.f32 %v4919, %v4535
      %v5112 = vmul.f32 %v4920, %v4536
      %v5113 = vmul.f32 %v4921, %v4537
      %v5114 = vmul.f32 %v4922, %v4538
      %v5115 = vmul.f32 %v4923, %v4539
      %v5116 = vmul.f32 %v4924, %v4540
      %v5117 = vmul.f32 %v4925, %v4541
      %v5118 = vmul.f32 %v4926, %v4542
      %v5119 = vmul.f32 %v4927, %v4543
      %v5120 = vmul.f32 %v4928, %v4544
      %v5121 = vmul.f32 %v4929, %v4545
      %v5122 = vmul.f32 %v4930, %v4546
      %v5123 = vmul.f32 %v4931, %v4547
      %v5124 = vmul.f32 %v4932, %v4548
      %v5125 = vmul.f32 %v4933, %v4549
      %v5126 = vmul.f32 %v4934, %v4550
      %v5127 = vmul.f32 %v4935, %v4551
      %v5128 = vmul.f32 %v4936, %v4552
      %v5129 = vmul.f32 %v4937, %v4553
      %v5130 = vmul.f32 %v4938, %v4554
      %v5131 = vmul.f32 %v4939, %v4555
      %v5132 = vmul.f32 %v4940, %v4556
      %v5133 = vmul.f32 %v4941, %v4557
      %v5134 = vmul.f32 %v4942, %v4558
      %v5135 = vmul.f32 %v4943, %v4559
      %v5136 = vmul.f32 %v4944, %v4560
      %v5137 = vmul.f32 %v4945, %v4561
      %v5138 = vmul.f32 %v4946, %v4562
      %v5139 = vmul.f32 %v4947, %v4563
      %v5140 = vmul.f32 %v4948, %v4564
      %v5141 = vmul.f32 %v4949, %v4565
      %v5142 = vmul.f32 %v4950, %v4566
      %v5143 = vmul.f32 %v4951, %v4567
      %v5144 = vmul.f32 %v4952, %v4568
      %v5145 = vmul.f32 %v4953, %v4569
      %v5146 = vmul.f32 %v4954, %v4570
      %v5147 = vmul.f32 %v4955, %v4571
      %v5148 = vmul.f32 %v4956, %v4572
      %v5149 = vmul.f32 %v4957, %v4573
      %v5150 = vmul.f32 %v4958, %v4574
      %v5151 = vmul.f32 %v4959, %v4575
      %v5152 = vmul.f32 %v4960, %v4576
      %v5153 = vmul.f32 %v4961, %v4577
      %v5154 = vmul.f32 %v4962, %v4578
      %v5155 = vmul.f32 %v4963, %v4579
      %v5156 = vmul.f32 %v4964, %v4580
      %v5157 = vmul.f32 %v4965, %v4581
      %v5158 = vmul.f32 %v4966, %v4582
      %v5159 = vmul.f32 %v4967, %v4583
      %v5160 = vmul.f32 %v4968, %v4584
      %v5161 = vmul.f32 %v4969, %v4585
      %v5162 = vmul.f32 %v4970, %v4586
      %v5163 = vmul.f32 %v4971, %v4587
      %v5164 = vmul.f32 %v4972, %v4588
      %v5165 = vmul.f32 %v4973, %v4589
      %v5166 = vmul.f32 %v4974, %v4590
      %v5167 = vmul.f32 %v4975, %v4591
      %v5168 = vmul.f32 %v4976, %v4592
      %v5169 = vmul.f32 %v4977, %v4593
      %v5170 = vmul.f32 %v4978, %v4594
      %v5171 = vmul.f32 %v4979, %v4595
      %v5172 = vmul.f32 %v4980, %v4596
      %v5173 = vmul.f32 %v4981, %v4597
      %v5174 = vmul.f32 %v4982, %v4598
      %v5175 = vmul.f32 %v4983, %v4599
      %v5176 = vmul.f32 %v4984, %v4600
      %v5177 = vmul.f32 %v4985, %v4601
      %v5178 = vmul.f32 %v4986, %v4602
      %v5179 = vmul.f32 %v4987, %v4603
      %v5180 = vmul.f32 %v4988, %v4604
      %v5181 = vmul.f32 %v4989, %v4605
      %v5182 = vmul.f32 %v4990, %v4606
      %v5183 = vmul.f32 %v4991, %v4607
      %v5184 = vmul.f32 %v4992, %v4608
      %v5185 = vmul.f32 %v4993, %v4609
      %v5186 = vmul.f32 %v4994, %v4610
      %v5187 = vadd.f32 %v4611, %v4995
      %v5188 = vadd.f32 %v4612, %v4996
      %v5189 = vadd.f32 %v4613, %v4997
      %v5190 = vadd.f32 %v4614, %v4998
      %v5191 = vadd.f32 %v4615, %v4999
      %v5192 = vadd.f32 %v4616, %v5000
      %v5193 = vadd.f32 %v4617, %v5001
      %v5194 = vadd.f32 %v4618, %v5002
      %v5195 = vadd.f32 %v4619, %v5003
      %v5196 = vadd.f32 %v4620, %v5004
      %v5197 = vadd.f32 %v4621, %v5005
      %v5198 = vadd.f32 %v4622, %v5006
      %v5199 = vadd.f32 %v4623, %v5007
      %v5200 = vadd.f32 %v4624, %v5008
      %v5201 = vadd.f32 %v4625, %v5009
      %v5202 = vadd.f32 %v4626, %v5010
      %v5203 = vadd.f32 %v4627, %v5011
      %v5204 = vadd.f32 %v4628, %v5012
      %v5205 = vadd.f32 %v4629, %v5013
      %v5206 = vadd.f32 %v4630, %v5014
      %v5207 = vadd.f32 %v4631, %v5015
      %v5208 = vadd.f32 %v4632, %v5016
      %v5209 = vadd.f32 %v4633, %v5017
      %v5210 = vadd.f32 %v4634, %v5018
      %v5211 = vadd.f32 %v4635, %v5019
      %v5212 = vadd.f32 %v4636, %v5020
      %v5213 = vadd.f32 %v4637, %v5021
      %v5214 = vadd.f32 %v4638, %v5022
      %v5215 = vadd.f32 %v4639, %v5023
      %v5216 = vadd.f32 %v4640, %v5024
      %v5217 = vadd.f32 %v4641, %v5025
      %v5218 = vadd.f32 %v4642, %v5026
      %v5219 = vadd.f32 %v4643, %v5027
      %v5220 = vadd.f32 %v4644, %v5028
      %v5221 = vadd.f32 %v4645, %v5029
      %v5222 = vadd.f32 %v4646, %v5030
      %v5223 = vadd.f32 %v4647, %v5031
      %v5224 = vadd.f32 %v4648, %v5032
      %v5225 = vadd.f32 %v4649, %v5033
      %v5226 = vadd.f32 %v4650, %v5034
      %v5227 = vadd.f32 %v4651, %v5035
      %v5228 = vadd.f32 %v4652, %v5036
      %v5229 = vadd.f32 %v4653, %v5037
      %v5230 = vadd.f32 %v4654, %v5038
      %v5231 = vadd.f32 %v4655, %v5039
      %v5232 = vadd.f32 %v4656, %v5040
      %v5233 = vadd.f32 %v4657, %v5041
      %v5234 = vadd.f32 %v4658, %v5042
      %v5235 = vadd.f32 %v4659, %v5043
      %v5236 = vadd.f32 %v4660, %v5044
      %v5237 = vadd.f32 %v4661, %v5045
      %v5238 = vadd.f32 %v4662, %v5046
      %v5239 = vadd.f32 %v4663, %v5047
      %v5240 = vadd.f32 %v4664, %v5048
      %v5241 = vadd.f32 %v4665, %v5049
      %v5242 = vadd.f32 %v4666, %v5050
      %v5243 = vadd.f32 %v4667, %v5051
      %v5244 = vadd.f32 %v4668, %v5052
      %v5245 = vadd.f32 %v4669, %v5053
      %v5246 = vadd.f32 %v4670, %v5054
      %v5247 = vadd.f32 %v4671, %v5055
      %v5248 = vadd.f32 %v4672, %v5056
      %v5249 = vadd.f32 %v4673, %v5057
      %v5250 = vadd.f32 %v4674, %v5058
      %v5251 = vadd.f32 %v4675, %v5059
      %v5252 = vadd.f32 %v4676, %v5060
      %v5253 = vadd.f32 %v4677, %v5061
      %v5254 = vadd.f32 %v4678, %v5062
      %v5255 = vadd.f32 %v4679, %v5063
      %v5256 = vadd.f32 %v4680, %v5064
      %v5257 = vadd.f32 %v4681, %v5065
      %v5258 = vadd.f32 %v4682, %v5066
      %v5259 = vadd.f32 %v4683, %v5067
      %v5260 = vadd.f32 %v4684, %v5068
      %v5261 = vadd.f32 %v4685, %v5069
      %v5262 = vadd.f32 %v4686, %v5070
      %v5263 = vadd.f32 %v4687, %v5071
      %v5264 = vadd.f32 %v4688, %v5072
      %v5265 = vadd.f32 %v4689, %v5073
      %v5266 = vadd.f32 %v4690, %v5074
      %v5267 = vadd.f32 %v4691, %v5075
      %v5268 = vadd.f32 %v4692, %v5076
      %v5269 = vadd.f32 %v4693, %v5077
      %v5270 = vadd.f32 %v4694, %v5078
      %v5271 = vadd.f32 %v4695, %v5079
      %v5272 = vadd.f32 %v4696, %v5080
      %v5273 = vadd.f32 %v4697, %v5081
      %v5274 = vadd.f32 %v4698, %v5082
      %v5275 = vadd.f32 %v4699, %v5083
      %v5276 = vadd.f32 %v4700, %v5084
      %v5277 = vadd.f32 %v4701, %v5085
      %v5278 = vadd.f32 %v4702, %v5086
      %v5279 = vadd.f32 %v4703, %v5087
      %v5280 = vadd.f32 %v4704, %v5088
      %v5281 = vadd.f32 %v4705, %v5089
      %v5282 = vadd.f32 %v4706, %v5090
      %v5283 = vadd.f32 %v4707, %v5091
      %v5284 = vadd.f32 %v4708, %v5092
      %v5285 = vadd.f32 %v4709, %v5093
      %v5286 = vadd.f32 %v4710, %v5094
      %v5287 = vadd.f32 %v4711, %v5095
      %v5288 = vadd.f32 %v4712, %v5096
      %v5289 = vadd.f32 %v4713, %v5097
      %v5290 = vadd.f32 %v4714, %v5098
      %v5291 = vadd.f32 %v4715, %v5099
      %v5292 = vadd.f32 %v4716, %v5100
      %v5293 = vadd.f32 %v4717, %v5101
      %v5294 = vadd.f32 %v4718, %v5102
      %v5295 = vadd.f32 %v4719, %v5103
      %v5296 = vadd.f32 %v4720, %v5104
      %v5297 = vadd.f32 %v4721, %v5105
      %v5298 = vadd.f32 %v4722, %v5106
      %v5299 = vadd.f32 %v4723, %v5107
      %v5300 = vadd.f32 %v4724, %v5108
      %v5301 = vadd.f32 %v4725, %v5109
      %v5302 = vadd.f32 %v4726, %v5110
      %v5303 = vadd.f32 %v4727, %v5111
      %v5304 = vadd.f32 %v4728, %v5112
      %v5305 = vadd.f32 %v4729, %v5113
      %v5306 = vadd.f32 %v4730, %v5114
      %v5307 = vadd.f32 %v4731, %v5115
      %v5308 = vadd.f32 %v4732, %v5116
      %v5309 = vadd.f32 %v4733, %v5117
      %v5310 = vadd.f32 %v4734, %v5118
      %v5311 = vadd.f32 %v4735, %v5119
      %v5312 = vadd.f32 %v4736, %v5120
      %v5313 = vadd.f32 %v4737, %v5121
      %v5314 = vadd.f32 %v4738, %v5122
      %v5315 = vadd.f32 %v4739, %v5123
      %v5316 = vadd.f32 %v4740, %v5124
      %v5317 = vadd.f32 %v4741, %v5125
      %v5318 = vadd.f32 %v4742, %v5126
      %v5319 = vadd.f32 %v4743, %v5127
      %v5320 = vadd.f32 %v4744, %v5128
      %v5321 = vadd.f32 %v4745, %v5129
      %v5322 = vadd.f32 %v4746, %v5130
      %v5323 = vadd.f32 %v4747, %v5131
      %v5324 = vadd.f32 %v4748, %v5132
      %v5325 = vadd.f32 %v4749, %v5133
      %v5326 = vadd.f32 %v4750, %v5134
      %v5327 = vadd.f32 %v4751, %v5135
      %v5328 = vadd.f32 %v4752, %v5136
      %v5329 = vadd.f32 %v4753, %v5137
      %v5330 = vadd.f32 %v4754, %v5138
      %v5331 = vadd.f32 %v4755, %v5139
      %v5332 = vadd.f32 %v4756, %v5140
      %v5333 = vadd.f32 %v4757, %v5141
      %v5334 = vadd.f32 %v4758, %v5142
      %v5335 = vadd.f32 %v4759, %v5143
      %v5336 = vadd.f32 %v4760, %v5144
      %v5337 = vadd.f32 %v4761, %v5145
      %v5338 = vadd.f32 %v4762, %v5146
      %v5339 = vadd.f32 %v4763, %v5147
      %v5340 = vadd.f32 %v4764, %v5148
      %v5341 = vadd.f32 %v4765, %v5149
      %v5342 = vadd.f32 %v4766, %v5150
      %v5343 = vadd.f32 %v4767, %v5151
      %v5344 = vadd.f32 %v4768, %v5152
      %v5345 = vadd.f32 %v4769, %v5153
      %v5346 = vadd.f32 %v4770, %v5154
      %v5347 = vadd.f32 %v4771, %v5155
      %v5348 = vadd.f32 %v4772, %v5156
      %v5349 = vadd.f32 %v4773, %v5157
      %v5350 = vadd.f32 %v4774, %v5158
      %v5351 = vadd.f32 %v4775, %v5159
      %v5352 = vadd.f32 %v4776, %v5160
      %v5353 = vadd.f32 %v4777, %v5161
      %v5354 = vadd.f32 %v4778, %v5162
      %v5355 = vadd.f32 %v4779, %v5163
      %v5356 = vadd.f32 %v4780, %v5164
      %v5357 = vadd.f32 %v4781, %v5165
      %v5358 = vadd.f32 %v4782, %v5166
      %v5359 = vadd.f32 %v4783, %v5167
      %v5360 = vadd.f32 %v4784, %v5168
      %v5361 = vadd.f32 %v4785, %v5169
      %v5362 = vadd.f32 %v4786, %v5170
      %v5363 = vadd.f32 %v4787, %v5171
      %v5364 = vadd.f32 %v4788, %v5172
      %v5365 = vadd.f32 %v4789, %v5173
      %v5366 = vadd.f32 %v4790, %v5174
      %v5367 = vadd.f32 %v4791, %v5175
      %v5368 = vadd.f32 %v4792, %v5176
      %v5369 = vadd.f32 %v4793, %v5177
      %v5370 = vadd.f32 %v4794, %v5178
      %v5371 = vadd.f32 %v4795, %v5179
      %v5372 = vadd.f32 %v4796, %v5180
      %v5373 = vadd.f32 %v4797, %v5181
      %v5374 = vadd.f32 %v4798, %v5182
      %v5375 = vadd.f32 %v4799, %v5183
      %v5376 = vadd.f32 %v4800, %v5184
      %v5377 = vadd.f32 %v4801, %v5185
      %v5378 = vadd.f32 %v4802, %v5186
      %5379 = vst [vmem:[%s175] sm:$0xff] %v5187
      %5380 = vst [vmem:[%s175 + $0x8] sm:$0xff] %v5188
      %5381 = vst [vmem:[%s175 + $0x10] sm:$0xff] %v5189
      %5382 = vst [vmem:[%s175 + $0x18] sm:$0xff] %v5190
      %5383 = vst [vmem:[%s175 + $0x20] sm:$0xff] %v5191
      %vm5384 = vcmask 203776
      %5385 = vst.msk [vmem:[%s175 + $0x28] sm:$0xff] %vm5384, %v5192
      %5386 = vst [vmem:[%s175 + $0x30] sm:$0xff] %v5193
      %5387 = vst [vmem:[%s175 + $0x38] sm:$0xff] %v5194
      %5388 = vst [vmem:[%s175 + $0x40] sm:$0xff] %v5195
      %5389 = vst [vmem:[%s175 + $0x48] sm:$0xff] %v5196
      %5390 = vst [vmem:[%s175 + $0x50] sm:$0xff] %v5197
      %5391 = vst.msk [vmem:[%s175 + $0x58] sm:$0xff] %vm5384, %v5198
      %5392 = vst [vmem:[%s175 + $0x60] sm:$0xff] %v5199
      %5393 = vst [vmem:[%s175 + $0x68] sm:$0xff] %v5200
      %5394 = vst [vmem:[%s175 + $0x70] sm:$0xff] %v5201
      %5395 = vst [vmem:[%s175 + $0x78] sm:$0xff] %v5202
      %5396 = vst [vmem:[%s175 + $0x80] sm:$0xff] %v5203
      %5397 = vst.msk [vmem:[%s175 + $0x88] sm:$0xff] %vm5384, %v5204
      %5398 = vst [vmem:[%s175 + $0x90] sm:$0xff] %v5205
      %5399 = vst [vmem:[%s175 + $0x98] sm:$0xff] %v5206
      %5400 = vst [vmem:[%s175 + $0xa0] sm:$0xff] %v5207
      %5401 = vst [vmem:[%s175 + $0xa8] sm:$0xff] %v5208
      %5402 = vst [vmem:[%s175 + $0xb0] sm:$0xff] %v5209
      %5403 = vst.msk [vmem:[%s175 + $0xb8] sm:$0xff] %vm5384, %v5210
      %5404 = vst [vmem:[%s175 + $0xc0] sm:$0xff] %v5211
      %5405 = vst [vmem:[%s175 + $0xc8] sm:$0xff] %v5212
      %5406 = vst [vmem:[%s175 + $0xd0] sm:$0xff] %v5213
      %5407 = vst [vmem:[%s175 + $0xd8] sm:$0xff] %v5214
      %5408 = vst [vmem:[%s175 + $0xe0] sm:$0xff] %v5215
      %5409 = vst.msk [vmem:[%s175 + $0xe8] sm:$0xff] %vm5384, %v5216
      %5410 = vst [vmem:[%s175 + $0xf0] sm:$0xff] %v5217
      %5411 = vst [vmem:[%s175 + $0xf8] sm:$0xff] %v5218
      %5412 = vst [vmem:[%s175 + $0x100] sm:$0xff] %v5219
      %5413 = vst [vmem:[%s175 + $0x108] sm:$0xff] %v5220
      %5414 = vst [vmem:[%s175 + $0x110] sm:$0xff] %v5221
      %5415 = vst.msk [vmem:[%s175 + $0x118] sm:$0xff] %vm5384, %v5222
      %5416 = vst [vmem:[%s175 + $0x120] sm:$0xff] %v5223
      %5417 = vst [vmem:[%s175 + $0x128] sm:$0xff] %v5224
      %5418 = vst [vmem:[%s175 + $0x130] sm:$0xff] %v5225
      %5419 = vst [vmem:[%s175 + $0x138] sm:$0xff] %v5226
      %5420 = vst [vmem:[%s175 + $0x140] sm:$0xff] %v5227
      %5421 = vst.msk [vmem:[%s175 + $0x148] sm:$0xff] %vm5384, %v5228
      %5422 = vst [vmem:[%s175 + $0x150] sm:$0xff] %v5229
      %5423 = vst [vmem:[%s175 + $0x158] sm:$0xff] %v5230
      %5424 = vst [vmem:[%s175 + $0x160] sm:$0xff] %v5231
      %5425 = vst [vmem:[%s175 + $0x168] sm:$0xff] %v5232
      %5426 = vst [vmem:[%s175 + $0x170] sm:$0xff] %v5233
      %5427 = vst.msk [vmem:[%s175 + $0x178] sm:$0xff] %vm5384, %v5234
      %5428 = vst [vmem:[%s175 + $0x180] sm:$0xff] %v5235
      %5429 = vst [vmem:[%s175 + $0x188] sm:$0xff] %v5236
      %5430 = vst [vmem:[%s175 + $0x190] sm:$0xff] %v5237
      %5431 = vst [vmem:[%s175 + $0x198] sm:$0xff] %v5238
      %5432 = vst [vmem:[%s175 + $0x1a0] sm:$0xff] %v5239
      %5433 = vst.msk [vmem:[%s175 + $0x1a8] sm:$0xff] %vm5384, %v5240
      %5434 = vst [vmem:[%s175 + $0x1b0] sm:$0xff] %v5241
      %5435 = vst [vmem:[%s175 + $0x1b8] sm:$0xff] %v5242
      %5436 = vst [vmem:[%s175 + $0x1c0] sm:$0xff] %v5243
      %5437 = vst [vmem:[%s175 + $0x1c8] sm:$0xff] %v5244
      %5438 = vst [vmem:[%s175 + $0x1d0] sm:$0xff] %v5245
      %5439 = vst.msk [vmem:[%s175 + $0x1d8] sm:$0xff] %vm5384, %v5246
      %5440 = vst [vmem:[%s175 + $0x1e0] sm:$0xff] %v5247
      %5441 = vst [vmem:[%s175 + $0x1e8] sm:$0xff] %v5248
      %5442 = vst [vmem:[%s175 + $0x1f0] sm:$0xff] %v5249
      %5443 = vst [vmem:[%s175 + $0x1f8] sm:$0xff] %v5250
      %5444 = vst [vmem:[%s175 + $0x200] sm:$0xff] %v5251
      %5445 = vst.msk [vmem:[%s175 + $0x208] sm:$0xff] %vm5384, %v5252
      %5446 = vst [vmem:[%s175 + $0x210] sm:$0xff] %v5253
      %5447 = vst [vmem:[%s175 + $0x218] sm:$0xff] %v5254
      %5448 = vst [vmem:[%s175 + $0x220] sm:$0xff] %v5255
      %5449 = vst [vmem:[%s175 + $0x228] sm:$0xff] %v5256
      %5450 = vst [vmem:[%s175 + $0x230] sm:$0xff] %v5257
      %5451 = vst.msk [vmem:[%s175 + $0x238] sm:$0xff] %vm5384, %v5258
      %5452 = vst [vmem:[%s175 + $0x240] sm:$0xff] %v5259
      %5453 = vst [vmem:[%s175 + $0x248] sm:$0xff] %v5260
      %5454 = vst [vmem:[%s175 + $0x250] sm:$0xff] %v5261
      %5455 = vst [vmem:[%s175 + $0x258] sm:$0xff] %v5262
      %5456 = vst [vmem:[%s175 + $0x260] sm:$0xff] %v5263
      %5457 = vst.msk [vmem:[%s175 + $0x268] sm:$0xff] %vm5384, %v5264
      %5458 = vst [vmem:[%s175 + $0x270] sm:$0xff] %v5265
      %5459 = vst [vmem:[%s175 + $0x278] sm:$0xff] %v5266
      %5460 = vst [vmem:[%s175 + $0x280] sm:$0xff] %v5267
      %5461 = vst [vmem:[%s175 + $0x288] sm:$0xff] %v5268
      %5462 = vst [vmem:[%s175 + $0x290] sm:$0xff] %v5269
      %5463 = vst.msk [vmem:[%s175 + $0x298] sm:$0xff] %vm5384, %v5270
      %5464 = vst [vmem:[%s175 + $0x2a0] sm:$0xff] %v5271
      %5465 = vst [vmem:[%s175 + $0x2a8] sm:$0xff] %v5272
      %5466 = vst [vmem:[%s175 + $0x2b0] sm:$0xff] %v5273
      %5467 = vst [vmem:[%s175 + $0x2b8] sm:$0xff] %v5274
      %5468 = vst [vmem:[%s175 + $0x2c0] sm:$0xff] %v5275
      %5469 = vst.msk [vmem:[%s175 + $0x2c8] sm:$0xff] %vm5384, %v5276
      %5470 = vst [vmem:[%s175 + $0x2d0] sm:$0xff] %v5277
      %5471 = vst [vmem:[%s175 + $0x2d8] sm:$0xff] %v5278
      %5472 = vst [vmem:[%s175 + $0x2e0] sm:$0xff] %v5279
      %5473 = vst [vmem:[%s175 + $0x2e8] sm:$0xff] %v5280
      %5474 = vst [vmem:[%s175 + $0x2f0] sm:$0xff] %v5281
      %5475 = vst.msk [vmem:[%s175 + $0x2f8] sm:$0xff] %vm5384, %v5282
      %5476 = vst [vmem:[%s175 + $0x300] sm:$0xff] %v5283
      %5477 = vst [vmem:[%s175 + $0x308] sm:$0xff] %v5284
      %5478 = vst [vmem:[%s175 + $0x310] sm:$0xff] %v5285
      %5479 = vst [vmem:[%s175 + $0x318] sm:$0xff] %v5286
      %5480 = vst [vmem:[%s175 + $0x320] sm:$0xff] %v5287
      %5481 = vst.msk [vmem:[%s175 + $0x328] sm:$0xff] %vm5384, %v5288
      %5482 = vst [vmem:[%s175 + $0x330] sm:$0xff] %v5289
      %5483 = vst [vmem:[%s175 + $0x338] sm:$0xff] %v5290
      %5484 = vst [vmem:[%s175 + $0x340] sm:$0xff] %v5291
      %5485 = vst [vmem:[%s175 + $0x348] sm:$0xff] %v5292
      %5486 = vst [vmem:[%s175 + $0x350] sm:$0xff] %v5293
      %5487 = vst.msk [vmem:[%s175 + $0x358] sm:$0xff] %vm5384, %v5294
      %5488 = vst [vmem:[%s175 + $0x360] sm:$0xff] %v5295
      %5489 = vst [vmem:[%s175 + $0x368] sm:$0xff] %v5296
      %5490 = vst [vmem:[%s175 + $0x370] sm:$0xff] %v5297
      %5491 = vst [vmem:[%s175 + $0x378] sm:$0xff] %v5298
      %5492 = vst [vmem:[%s175 + $0x380] sm:$0xff] %v5299
      %5493 = vst.msk [vmem:[%s175 + $0x388] sm:$0xff] %vm5384, %v5300
      %5494 = vst [vmem:[%s175 + $0x390] sm:$0xff] %v5301
      %5495 = vst [vmem:[%s175 + $0x398] sm:$0xff] %v5302
      %5496 = vst [vmem:[%s175 + $0x3a0] sm:$0xff] %v5303
      %5497 = vst [vmem:[%s175 + $0x3a8] sm:$0xff] %v5304
      %5498 = vst [vmem:[%s175 + $0x3b0] sm:$0xff] %v5305
      %5499 = vst.msk [vmem:[%s175 + $0x3b8] sm:$0xff] %vm5384, %v5306
      %5500 = vst [vmem:[%s175 + $0x3c0] sm:$0xff] %v5307
      %5501 = vst [vmem:[%s175 + $0x3c8] sm:$0xff] %v5308
      %5502 = vst [vmem:[%s175 + $0x3d0] sm:$0xff] %v5309
      %5503 = vst [vmem:[%s175 + $0x3d8] sm:$0xff] %v5310
      %5504 = vst [vmem:[%s175 + $0x3e0] sm:$0xff] %v5311
      %5505 = vst.msk [vmem:[%s175 + $0x3e8] sm:$0xff] %vm5384, %v5312
      %5506 = vst [vmem:[%s175 + $0x3f0] sm:$0xff] %v5313
      %5507 = vst [vmem:[%s175 + $0x3f8] sm:$0xff] %v5314
      %5508 = vst [vmem:[%s175 + $0x400] sm:$0xff] %v5315
      %5509 = vst [vmem:[%s175 + $0x408] sm:$0xff] %v5316
      %5510 = vst [vmem:[%s175 + $0x410] sm:$0xff] %v5317
      %5511 = vst.msk [vmem:[%s175 + $0x418] sm:$0xff] %vm5384, %v5318
      %5512 = vst [vmem:[%s175 + $0x420] sm:$0xff] %v5319
      %5513 = vst [vmem:[%s175 + $0x428] sm:$0xff] %v5320
      %5514 = vst [vmem:[%s175 + $0x430] sm:$0xff] %v5321
      %5515 = vst [vmem:[%s175 + $0x438] sm:$0xff] %v5322
      %5516 = vst [vmem:[%s175 + $0x440] sm:$0xff] %v5323
      %5517 = vst.msk [vmem:[%s175 + $0x448] sm:$0xff] %vm5384, %v5324
      %5518 = vst [vmem:[%s175 + $0x450] sm:$0xff] %v5325
      %5519 = vst [vmem:[%s175 + $0x458] sm:$0xff] %v5326
      %5520 = vst [vmem:[%s175 + $0x460] sm:$0xff] %v5327
      %5521 = vst [vmem:[%s175 + $0x468] sm:$0xff] %v5328
      %5522 = vst [vmem:[%s175 + $0x470] sm:$0xff] %v5329
      %5523 = vst.msk [vmem:[%s175 + $0x478] sm:$0xff] %vm5384, %v5330
      %5524 = vst [vmem:[%s175 + $0x480] sm:$0xff] %v5331
      %5525 = vst [vmem:[%s175 + $0x488] sm:$0xff] %v5332
      %5526 = vst [vmem:[%s175 + $0x490] sm:$0xff] %v5333
      %5527 = vst [vmem:[%s175 + $0x498] sm:$0xff] %v5334
      %5528 = vst [vmem:[%s175 + $0x4a0] sm:$0xff] %v5335
      %5529 = vst.msk [vmem:[%s175 + $0x4a8] sm:$0xff] %vm5384, %v5336
      %5530 = vst [vmem:[%s175 + $0x4b0] sm:$0xff] %v5337
      %5531 = vst [vmem:[%s175 + $0x4b8] sm:$0xff] %v5338
      %5532 = vst [vmem:[%s175 + $0x4c0] sm:$0xff] %v5339
      %5533 = vst [vmem:[%s175 + $0x4c8] sm:$0xff] %v5340
      %5534 = vst [vmem:[%s175 + $0x4d0] sm:$0xff] %v5341
      %5535 = vst.msk [vmem:[%s175 + $0x4d8] sm:$0xff] %vm5384, %v5342
      %5536 = vst [vmem:[%s175 + $0x4e0] sm:$0xff] %v5343
      %5537 = vst [vmem:[%s175 + $0x4e8] sm:$0xff] %v5344
      %5538 = vst [vmem:[%s175 + $0x4f0] sm:$0xff] %v5345
      %5539 = vst [vmem:[%s175 + $0x4f8] sm:$0xff] %v5346
      %5540 = vst [vmem:[%s175 + $0x500] sm:$0xff] %v5347
      %5541 = vst.msk [vmem:[%s175 + $0x508] sm:$0xff] %vm5384, %v5348
      %5542 = vst [vmem:[%s175 + $0x510] sm:$0xff] %v5349
      %5543 = vst [vmem:[%s175 + $0x518] sm:$0xff] %v5350
      %5544 = vst [vmem:[%s175 + $0x520] sm:$0xff] %v5351
      %5545 = vst [vmem:[%s175 + $0x528] sm:$0xff] %v5352
      %5546 = vst [vmem:[%s175 + $0x530] sm:$0xff] %v5353
      %5547 = vst.msk [vmem:[%s175 + $0x538] sm:$0xff] %vm5384, %v5354
      %5548 = vst [vmem:[%s175 + $0x540] sm:$0xff] %v5355
      %5549 = vst [vmem:[%s175 + $0x548] sm:$0xff] %v5356
      %5550 = vst [vmem:[%s175 + $0x550] sm:$0xff] %v5357
      %5551 = vst [vmem:[%s175 + $0x558] sm:$0xff] %v5358
      %5552 = vst [vmem:[%s175 + $0x560] sm:$0xff] %v5359
      %5553 = vst.msk [vmem:[%s175 + $0x568] sm:$0xff] %vm5384, %v5360
      %5554 = vst [vmem:[%s175 + $0x570] sm:$0xff] %v5361
      %5555 = vst [vmem:[%s175 + $0x578] sm:$0xff] %v5362
      %5556 = vst [vmem:[%s175 + $0x580] sm:$0xff] %v5363
      %5557 = vst [vmem:[%s175 + $0x588] sm:$0xff] %v5364
      %5558 = vst [vmem:[%s175 + $0x590] sm:$0xff] %v5365
      %5559 = vst.msk [vmem:[%s175 + $0x598] sm:$0xff] %vm5384, %v5366
      %5560 = vst [vmem:[%s175 + $0x5a0] sm:$0xff] %v5367
      %5561 = vst [vmem:[%s175 + $0x5a8] sm:$0xff] %v5368
      %5562 = vst [vmem:[%s175 + $0x5b0] sm:$0xff] %v5369
      %5563 = vst [vmem:[%s175 + $0x5b8] sm:$0xff] %v5370
      %5564 = vst [vmem:[%s175 + $0x5c0] sm:$0xff] %v5371
      %5565 = vst.msk [vmem:[%s175 + $0x5c8] sm:$0xff] %vm5384, %v5372
      %5566 = vst [vmem:[%s175 + $0x5d0] sm:$0xff] %v5373
      %5567 = vst [vmem:[%s175 + $0x5d8] sm:$0xff] %v5374
      %5568 = vst [vmem:[%s175 + $0x5e0] sm:$0xff] %v5375
      %5569 = vst [vmem:[%s175 + $0x5e8] sm:$0xff] %v5376
      %5570 = vst [vmem:[%s175 + $0x5f0] sm:$0xff] %v5377
      %5571 = vst.msk [vmem:[%s175 + $0x5f8] sm:$0xff] %vm5384, %v5378
      %s5572 = smul.u32 32, %s13
      %p5573 = scmp.lt.s32.totalorder %s5572, 127
      %s5574 = scalar_select %p5573, %s5572, 127
      %s5575 = smul.addr %s5574, 6
      %s5576 = smul.addr %s5575, 8
      %s5577 = scalar_lea.vmem %s2, %s5576
      // Predicated region
      $region29: #{_forward_impl.1} parent=27 // pred_check
        %p5578 = pneg %p83
      $region30: #{_forward_impl.1} parent=27 // pred_check_branch
        %5580 = sbr.rel (%p5578) target = $region32
      $region31: #{_forward_impl.1} parent=27 // pred_region
        %s5581 = smul.u32 32, %s13
      $region32: #{_forward_impl.1} parent=27 // pred_fallthru
        _
    $region28: #{_forward_impl.1} parent=5 // pred_fallthru
      _
    %p5582 = scmp.le.s32.totalorder 2, %s8
    // Predicated region
    $region33: #{_forward_impl.1} parent=5 // pred_check
      %p5583 = pneg %p5582
    $region34: #{_forward_impl.1} parent=5 // pred_check_branch
      %5585 = sbr.rel (%p5583) target = $region36
    $region35: #{_forward_impl.1} parent=5 // pred_region
      %s5586 = ssub.s32 %s8, 2
      // Predicated region
      $region37: #{_forward_impl.1} parent=35 // pred_check
        %p5587 = pneg %p89
      $region38: #{_forward_impl.1} parent=35 // pred_check_branch
        %5589 = sbr.rel (%p5587) target = $region40
      $region39: #{_forward_impl.1} parent=35 // pred_region
        %s5590 = smul.u32 32, %s14
        %p5591 = scmp.lt.s32.totalorder %s5590, 127
        %s5592 = scalar_select %p5591, %s5590, 127
        %s5593 = smul.addr %s5592, 6
        %s5594 = smul.addr %s5593, 8
        %s5595 = scalar_lea.vmem %s2, %s5594
      $region40: #{_forward_impl.1} parent=35 // pred_fallthru
        _
    $region36: #{_forward_impl.1} parent=5 // pred_fallthru
      _
  $region6: #{_forward_impl.1} parent=0 // loop_footer
    %s12 = sadd.s32 1, %s8
  $region7: #{_forward_impl.1} parent=0 // loop_footer_branch
    %7 = sbr.rel target = $region3
  $region8: #{_forward_impl.1} parent=0 // loop_exit
    _

</llo_original>
